<compile_context>
chip_gen: v5e
topology: v5e:2x2
jax: 0.10.0
libtpu: 0.0.40
codegen_flags: <defaults>
</compile_context>

<pallas_src>
import functools

import jax
import jax.numpy as jnp
from jax.experimental import pallas as pl
from jax.experimental.pallas import tpu as pltpu


LANE = 128  # label axis is padded to one full lane width


# ----------------------------- Pallas kernel -----------------------------

def _xnli_kernel(emb1_ref, mask1_ref, emb2_ref, mask2_ref,
                 w_ref, b_ref, onehot_ref,
                 logits_ref, loss_ref,
                 sum1_acc, cnt1_acc, sum2_acc, cnt2_acc,
                 *, num_labels):
    """Masked mean-pool + L2 normalize + linear head + cross-entropy.

    Grid axes: (batch tile, seq tile).  The seq axis accumulates masked sums
    and token counts into VMEM scratch; the last seq step finalizes."""
    s = pl.program_id(1)

    @pl.when(s == 0)
    def _init():
        sum1_acc[...] = jnp.zeros_like(sum1_acc)
        cnt1_acc[...] = jnp.zeros_like(cnt1_acc)
        sum2_acc[...] = jnp.zeros_like(sum2_acc)
        cnt2_acc[...] = jnp.zeros_like(cnt2_acc)

    # ---- streaming accumulation over this sequence tile ----
    m1 = mask1_ref[...]                                      # (TB, TS) f32
    m2 = mask2_ref[...]
    e1 = emb1_ref[...].astype(jnp.float32)                   # (TB, TS, D)
    e2 = emb2_ref[...].astype(jnp.float32)
    sum1_acc[...] += jnp.sum(e1 * m1[:, :, None], axis=1)    # (TB, D)
    sum2_acc[...] += jnp.sum(e2 * m2[:, :, None], axis=1)
    cnt1_acc[...] += jnp.sum(m1, axis=1, keepdims=True)      # (TB, 1)
    cnt2_acc[...] += jnp.sum(m2, axis=1, keepdims=True)

    # ---- finalize on the last sequence tile ----
    @pl.when(s == pl.num_programs(1) - 1)
    def _finalize():
        D = sum1_acc.shape[-1]

        def pool_normalize(summed, count):
            # mean over valid tokens (clamp(min=1e-9)), then F.normalize
            # (p=2, dim=1, eps=1e-12).  Exact reciprocal / rsqrt (EUP slot).
            pooled = summed * pl.reciprocal(jnp.maximum(count, 1e-9))
            sumsq = jnp.sum(pooled * pooled, axis=1, keepdims=True)
            return pooled * jax.lax.rsqrt(jnp.maximum(sumsq, 1e-24))

        u = pool_normalize(sum1_acc[...], cnt1_acc[...])     # (TB, D)
        v = pool_normalize(sum2_acc[...], cnt2_acc[...])
        d = jnp.abs(u - v)

        # logits = [u, v, |u-v|] @ W + b, slicing the weight ref directly
        # (three MXU dots, no lane-axis concat; mathematically identical).
        logits = (
            jnp.dot(u, w_ref[0:D, :], preferred_element_type=jnp.float32)
            + jnp.dot(v, w_ref[D:2 * D, :], preferred_element_type=jnp.float32)
            + jnp.dot(d, w_ref[2 * D:3 * D, :], preferred_element_type=jnp.float32)
            + b_ref[...]                                     # (1, LANE) broadcast
        )
        logits_ref[...] = logits                             # lane-dense store

        # Cross-entropy restricted to the first `num_labels` lanes.
        col = jax.lax.broadcasted_iota(jnp.int32, logits.shape, 1)
        valid = col < num_labels
        zl = jnp.where(valid, logits, -1e30)                 # finite, avoids 0*inf
        mx = jnp.max(zl, axis=1, keepdims=True)
        z = zl - mx
        lse = jnp.log(jnp.sum(jnp.where(valid, jnp.exp(z), 0.0),
                              axis=1, keepdims=True))
        logp = z - lse
        loss_ref[...] = -jnp.sum(onehot_ref[...] * logp, axis=1, keepdims=True)


# ----------------------------- wrapper -----------------------------------

def xnli_forward(emb1, mask1, emb2, mask2, head_w, head_b, labels, num_labels,
                 *, block_b=8, block_s=256):
    """emb1/emb2: (B, S, D) token embeddings (body output; any float dtype,
    streamed as-is and accumulated in f32).  mask1/mask2: (B, S).
    head_w: (L, 3D) nn.Linear weight.  head_b: (L,).  labels: (B,) int."""
    B, S, D = emb1.shape
    L = num_labels
    LP = LANE

    TB = min(block_b, B)
    TS = min(block_s, S)
    assert B % TB == 0 and S % TS == 0
    # Mosaic (8, 128) tiling constraints on the (TB, TS) mask blocks.
    assert TB == B or TB % 8 == 0
    assert TS == S or TS % 128 == 0

    # Lane-dense head parameters / labels: pad the label axis to 128.
    w_pad = jnp.zeros((3 * D, LP), jnp.float32).at[:, :L].set(
        head_w.astype(jnp.float32).T)
    b_pad = jnp.zeros((1, LP), jnp.float32).at[:, :L].set(
        head_b.astype(jnp.float32)[None, :])
    onehot = jax.nn.one_hot(labels, LP, dtype=jnp.float32)        # (B, 128)

    mask1 = mask1.astype(jnp.float32)
    mask2 = mask2.astype(jnp.float32)

    grid = (B // TB, S // TS)
    emb_spec = pl.BlockSpec((TB, TS, D), lambda b, s: (b, s, 0))
    mask_spec = pl.BlockSpec((TB, TS), lambda b, s: (b, s))

    kernel = functools.partial(_xnli_kernel, num_labels=L)

    emb_bytes = 2 * B * S * D * emb1.dtype.itemsize
    cost = pl.CostEstimate(
        flops=4 * B * S * D + 2 * B * 3 * D * LP,
        transcendentals=B * LP + 5 * B,
        bytes_accessed=emb_bytes + 2 * B * S * 4 + 3 * D * LP * 4 + 3 * B * LP * 4,
    )

    logits_pad, loss_per_ex = pl.pallas_call(
        kernel,
        out_shape=(
            jax.ShapeDtypeStruct((B, LP), jnp.float32),   # padded logits
            jax.ShapeDtypeStruct((B, 1), jnp.float32),    # per-example CE
        ),
        grid_spec=pltpu.PrefetchScalarGridSpec(
            num_scalar_prefetch=0,
            grid=grid,
            in_specs=[
                emb_spec, mask_spec, emb_spec, mask_spec,
                pl.BlockSpec((3 * D, LP), lambda b, s: (0, 0)),   # W (resident)
                pl.BlockSpec((1, LP), lambda b, s: (0, 0)),       # bias
                pl.BlockSpec((TB, LP), lambda b, s: (b, 0)),      # one-hot labels
            ],
            out_specs=(
                pl.BlockSpec((TB, LP), lambda b, s: (b, 0)),
                pl.BlockSpec((TB, 1), lambda b, s: (b, 0)),
            ),
            scratch_shapes=[
                pltpu.VMEM((TB, D), jnp.float32),   # sum1
                pltpu.VMEM((TB, 1), jnp.float32),   # count1
                pltpu.VMEM((TB, D), jnp.float32),   # sum2
                pltpu.VMEM((TB, 1), jnp.float32),   # count2
            ],
        ),
        compiler_params=pltpu.CompilerParams(
            dimension_semantics=("parallel", "arbitrary"),
            vmem_limit_bytes=32 * 1024 * 1024,
        ),
        cost_estimate=cost,
    )(emb1, mask1, emb2, mask2, w_pad, b_pad, onehot)

    loss = jnp.mean(loss_per_ex)          # CrossEntropyLoss mean reduction
    return loss, logits_pad[:, :L]


# ----------------------------- glue / demo --------------------------------

def synthetic_body(embedding_table, input_ids):
    # TODO(synk): the full transformer `body` encoder is out of scope; the
    # Pallas kernel covers everything downstream of body() (pool/head/loss).
    return embedding_table[input_ids]


if __name__ == "__main__":
    B, S, D, L, VOCAB = 16, 256, 64, 3, 50
    TB, TS = 8, 128   # small tiles for the demo; grid = (2, 2)

    key = jax.random.PRNGKey(0)
    k_emb, k_w, k_b, k_ids1, k_ids2, k_lab, k_m1, k_m2 = jax.random.split(key, 8)

    # Parameters: body output streamed in bf16, head kept in f32.
    embedding_table = (jax.random.normal(k_emb, (VOCAB, D), jnp.float32)
                       * 0.02).astype(jnp.bfloat16)
    head_w = jax.random.normal(k_w, (L, 3 * D), jnp.float32) * 0.02
    head_b = jax.random.normal(k_b, (L,), jnp.float32) * 0.02

    # Deterministic inputs with ragged attention masks.
    input_ids1 = jax.random.randint(k_ids1, (B, S), 0, VOCAB, dtype=jnp.int32)
    input_ids2 = jax.random.randint(k_ids2, (B, S), 0, VOCAB, dtype=jnp.int32)
    len1 = jax.random.randint(k_m1, (B,), S // 4, S + 1, dtype=jnp.int32)
    len2 = jax.random.randint(k_m2, (B,), S // 4, S + 1, dtype=jnp.int32)
    pos = jnp.arange(S)[None, :]
    attention_mask1 = (pos < len1[:, None]).astype(jnp.float32)
    attention_mask2 = (pos < len2[:, None]).astype(jnp.float32)
    labels = jax.random.randint(k_lab, (B,), 0, L, dtype=jnp.int32)

    h1 = synthetic_body(embedding_table, input_ids1)    # (B, S, D) bf16
    h2 = synthetic_body(embedding_table, input_ids2)

    loss, logits = xnli_forward(h1, attention_mask1, h2, attention_mask2,
                                head_w, head_b, labels, L,
                                block_b=TB, block_s=TS)
    jax.block_until_ready((loss, logits))

    # Pure-JAX reference (same bf16 body outputs, f32 math downstream).
    def ref_pool(emb, mask):
        e = emb.astype(jnp.float32)
        m = mask[:, :, None]
        ssum = jnp.sum(e * m, axis=1)
        cnt = jnp.maximum(jnp.sum(m, axis=1), 1e-9)
        x = ssum / cnt
        n = jnp.sqrt(jnp.sum(x * x, axis=1, keepdims=True))
        return x / jnp.maximum(n, 1e-12)

    u_r = ref_pool(h1, attention_mask1)
    v_r = ref_pool(h2, attention_mask2)
    feats = jnp.concatenate([u_r, v_r, jnp.abs(u_r - v_r)], axis=1)
    logits_r = feats @ head_w.astype(jnp.float32).T + head_b
    logp_r = jax.nn.log_softmax(logits_r, axis=1)
    loss_r = -jnp.mean(jnp.take_along_axis(logp_r, labels[:, None], axis=1))

    assert logits.shape == (B, L)
    assert jnp.allclose(logits, logits_r, atol=1e-5, rtol=1e-5), "logits mismatch"
    assert jnp.allclose(loss, loss_r, atol=1e-5, rtol=1e-5), "loss mismatch"
    print("KERNEL_OK")
</pallas_src>

<mosaic_0001>
module attributes {stable_mosaic.version = 11 : i64} {
  func.func @_xnli_kernel(%arg0: i32, %arg1: i32, %arg2: memref<8x128x64xbf16, #tpu.memory_space<vmem>>, %arg3: memref<8x128xf32, #tpu.memory_space<vmem>>, %arg4: memref<8x128x64xbf16, #tpu.memory_space<vmem>>, %arg5: memref<8x128xf32, #tpu.memory_space<vmem>>, %arg6: memref<192x128xf32, #tpu.memory_space<vmem>>, %arg7: memref<1x128xf32, #tpu.memory_space<vmem>>, %arg8: memref<8x128xf32, #tpu.memory_space<vmem>>, %arg9: memref<8x128xf32, #tpu.memory_space<vmem>>, %arg10: memref<8x1xf32, #tpu.memory_space<vmem>>, %arg11: memref<8x64xf32, #tpu.memory_space<vmem>>, %arg12: memref<8x1xf32, #tpu.memory_space<vmem>>, %arg13: memref<8x64xf32, #tpu.memory_space<vmem>>, %arg14: memref<8x1xf32, #tpu.memory_space<vmem>>) attributes {dimension_semantics = [#tpu.dimension_semantics<parallel>, #tpu.dimension_semantics<arbitrary>], iteration_bounds = array<i64: 2, 2>, scalar_prefetch = 0 : i64, scratch_operands = 4 : i64, tpu.core_type = #tpu.core_type<tc>, window_params = [{transform_indices = @transform_0, window_bounds = array<i64: 8, 128, 64>}, {transform_indices = @transform_1, window_bounds = array<i64: 8, 128>}, {transform_indices = @transform_2, window_bounds = array<i64: 8, 128, 64>}, {transform_indices = @transform_3, window_bounds = array<i64: 8, 128>}, {pipeline_mode = #tpu.pipeline_mode<synchronous>, transform_indices = @transform_4, window_bounds = array<i64: 192, 128>}, {pipeline_mode = #tpu.pipeline_mode<synchronous>, transform_indices = @transform_5, window_bounds = array<i64: 1, 128>}, {transform_indices = @transform_6, window_bounds = array<i64: 8, 128>}, {transform_indices = @transform_7, window_bounds = array<i64: 8, 128>}, {transform_indices = @transform_8, window_bounds = array<i64: 8, 1>}]} {
    %c0_i32 = arith.constant 0 : i32
    %0 = arith.cmpi eq, %arg1, %c0_i32 : i32
    %1 = arith.extui %0 : i1 to i32
    %c0_i32_0 = arith.constant 0 : i32
    %2 = arith.cmpi ne, %1, %c0_i32_0 : i32
    scf.if %2 {
      %cst_30 = arith.constant 0.000000e+00 : f32
      %36 = vector.broadcast %cst_30 : f32 to vector<8x64xf32>
      %c0_31 = arith.constant 0 : index
      %c0_32 = arith.constant 0 : index
      %37 = vector.load %arg11[%c0_31, %c0_32] : memref<8x64xf32, #tpu.memory_space<vmem>>, vector<8x64xf32>
      tpu.vector_store %arg11[%c0_31, %c0_32], %36 {strides = array<i32>} : memref<8x64xf32, #tpu.memory_space<vmem>>, vector<8x64xf32>,
      %cst_33 = arith.constant 0.000000e+00 : f32
      %38 = vector.broadcast %cst_33 : f32 to vector<8x1xf32>
      %c0_34 = arith.constant 0 : index
      %c0_35 = arith.constant 0 : index
      %39 = vector.load %arg12[%c0_34, %c0_35] : memref<8x1xf32, #tpu.memory_space<vmem>>, vector<8x1xf32>
      tpu.vector_store %arg12[%c0_34, %c0_35], %38 {strides = array<i32>} : memref<8x1xf32, #tpu.memory_space<vmem>>, vector<8x1xf32>,
      %cst_36 = arith.constant 0.000000e+00 : f32
      %40 = vector.broadcast %cst_36 : f32 to vector<8x64xf32>
      %c0_37 = arith.constant 0 : index
      %c0_38 = arith.constant 0 : index
      %41 = vector.load %arg13[%c0_37, %c0_38] : memref<8x64xf32, #tpu.memory_space<vmem>>, vector<8x64xf32>
      tpu.vector_store %arg13[%c0_37, %c0_38], %40 {strides = array<i32>} : memref<8x64xf32, #tpu.memory_space<vmem>>, vector<8x64xf32>,
      %cst_39 = arith.constant 0.000000e+00 : f32
      %42 = vector.broadcast %cst_39 : f32 to vector<8x1xf32>
      %c0_40 = arith.constant 0 : index
      %c0_41 = arith.constant 0 : index
      %43 = vector.load %arg14[%c0_40, %c0_41] : memref<8x1xf32, #tpu.memory_space<vmem>>, vector<8x1xf32>
      tpu.vector_store %arg14[%c0_40, %c0_41], %42 {strides = array<i32>} : memref<8x1xf32, #tpu.memory_space<vmem>>, vector<8x1xf32>,
    } else {
    }
    %c0 = arith.constant 0 : index
    %c0_1 = arith.constant 0 : index
    %3 = vector.load %arg3[%c0, %c0_1] : memref<8x128xf32, #tpu.memory_space<vmem>>, vector<8x128xf32>
    %c0_2 = arith.constant 0 : index
    %c0_3 = arith.constant 0 : index
    %4 = vector.load %arg5[%c0_2, %c0_3] : memref<8x128xf32, #tpu.memory_space<vmem>>, vector<8x128xf32>
    %c0_4 = arith.constant 0 : index
    %c0_5 = arith.constant 0 : index
    %c0_6 = arith.constant 0 : index
    %5 = vector.load %arg2[%c0_4, %c0_5, %c0_6] : memref<8x128x64xbf16, #tpu.memory_space<vmem>>, vector<8x128x64xbf16>
    %6 = arith.extf %5 : vector<8x128x64xbf16> to vector<8x128x64xf32>
    %c0_7 = arith.constant 0 : index
    %c0_8 = arith.constant 0 : index
    %c0_9 = arith.constant 0 : index
    %7 = vector.load %arg4[%c0_7, %c0_8, %c0_9] : memref<8x128x64xbf16, #tpu.memory_space<vmem>>, vector<8x128x64xbf16>
    %8 = arith.extf %7 : vector<8x128x64xbf16> to vector<8x128x64xf32>
    %c0_10 = arith.constant 0 : index
    %c0_11 = arith.constant 0 : index
    %9 = vector.load %arg11[%c0_10, %c0_11] : memref<8x64xf32, #tpu.memory_space<vmem>>, vector<8x64xf32>
    %10 = vector.shape_cast %3 : vector<8x128xf32> to vector<8x128x1xf32>
    %11 = vector.broadcast %10 : vector<8x128x1xf32> to vector<8x128x64xf32>
    %12 = arith.mulf %6, %11 : vector<8x128x64xf32>
    %cst = arith.constant dense<0.000000e+00> : vector<8x64xf32>
    %13 = vector.multi_reduction <add>, %12, %cst [1] : vector<8x128x64xf32> to vector<8x64xf32>
    %14 = arith.addf %9, %13 : vector<8x64xf32>
    %c0_12 = arith.constant 0 : index
    %c0_13 = arith.constant 0 : index
    %15 = vector.load %arg11[%c0_12, %c0_13] : memref<8x64xf32, #tpu.memory_space<vmem>>, vector<8x64xf32>
    tpu.vector_store %arg11[%c0_12, %c0_13], %14 {strides = array<i32>} : memref<8x64xf32, #tpu.memory_space<vmem>>, vector<8x64xf32>,
    %c0_14 = arith.constant 0 : index
    %c0_15 = arith.constant 0 : index
    %16 = vector.load %arg13[%c0_14, %c0_15] : memref<8x64xf32, #tpu.memory_space<vmem>>, vector<8x64xf32>
    %17 = vector.shape_cast %4 : vector<8x128xf32> to vector<8x128x1xf32>
    %18 = vector.broadcast %17 : vector<8x128x1xf32> to vector<8x128x64xf32>
    %19 = arith.mulf %8, %18 : vector<8x128x64xf32>
    %cst_16 = arith.constant dense<0.000000e+00> : vector<8x64xf32>
    %20 = vector.multi_reduction <add>, %19, %cst_16 [1] : vector<8x128x64xf32> to vector<8x64xf32>
    %21 = arith.addf %16, %20 : vector<8x64xf32>
    %c0_17 = arith.constant 0 : index
    %c0_18 = arith.constant 0 : index
    %22 = vector.load %arg13[%c0_17, %c0_18] : memref<8x64xf32, #tpu.memory_space<vmem>>, vector<8x64xf32>
    tpu.vector_store %arg13[%c0_17, %c0_18], %21 {strides = array<i32>} : memref<8x64xf32, #tpu.memory_space<vmem>>, vector<8x64xf32>,
    %c0_19 = arith.constant 0 : index
    %c0_20 = arith.constant 0 : index
    %23 = vector.load %arg12[%c0_19, %c0_20] : memref<8x1xf32, #tpu.memory_space<vmem>>, vector<8x1xf32>
    %cst_21 = arith.constant dense<0.000000e+00> : vector<8xf32>
    %24 = vector.multi_reduction <add>, %3, %cst_21 [1] : vector<8x128xf32> to vector<8xf32>
    %25 = vector.shape_cast %24 : vector<8xf32> to vector<8x1xf32>
    %26 = arith.addf %23, %25 : vector<8x1xf32>
    %c0_22 = arith.constant 0 : index
    %c0_23 = arith.constant 0 : index
    %27 = vector.load %arg12[%c0_22, %c0_23] : memref<8x1xf32, #tpu.memory_space<vmem>>, vector<8x1xf32>
    tpu.vector_store %arg12[%c0_22, %c0_23], %26 {strides = array<i32>} : memref<8x1xf32, #tpu.memory_space<vmem>>, vector<8x1xf32>,
    %c0_24 = arith.constant 0 : index
    %c0_25 = arith.constant 0 : index
    %28 = vector.load %arg14[%c0_24, %c0_25] : memref<8x1xf32, #tpu.memory_space<vmem>>, vector<8x1xf32>
    %cst_26 = arith.constant dense<0.000000e+00> : vector<8xf32>
    %29 = vector.multi_reduction <add>, %4, %cst_26 [1] : vector<8x128xf32> to vector<8xf32>
    %30 = vector.shape_cast %29 : vector<8xf32> to vector<8x1xf32>
    %31 = arith.addf %28, %30 : vector<8x1xf32>
    %c0_27 = arith.constant 0 : index
    %c0_28 = arith.constant 0 : index
    %32 = vector.load %arg14[%c0_27, %c0_28] : memref<8x1xf32, #tpu.memory_space<vmem>>, vector<8x1xf32>
    tpu.vector_store %arg14[%c0_27, %c0_28], %31 {strides = array<i32>} : memref<8x1xf32, #tpu.memory_space<vmem>>, vector<8x1xf32>,
    %c1_i32 = arith.constant 1 : i32
    %33 = arith.cmpi eq, %arg1, %c1_i32 : i32
    %34 = arith.extui %33 : i1 to i32
    %c0_i32_29 = arith.constant 0 : i32
    %35 = arith.cmpi ne, %34, %c0_i32_29 : i32
    scf.if %35 {
      %c0_30 = arith.constant 0 : index
      %c0_31 = arith.constant 0 : index
      %36 = vector.load %arg11[%c0_30, %c0_31] : memref<8x64xf32, #tpu.memory_space<vmem>>, vector<8x64xf32>
      %c0_32 = arith.constant 0 : index
      %c0_33 = arith.constant 0 : index
      %37 = vector.load %arg12[%c0_32, %c0_33] : memref<8x1xf32, #tpu.memory_space<vmem>>, vector<8x1xf32>
      %cst_34 = arith.constant 9.99999971E-10 : f32
      %38 = vector.broadcast %cst_34 : f32 to vector<8x1xf32>
      %39 = arith.maximumf %37, %38 : vector<8x1xf32>
      %40 = tpu.reciprocal %39 : vector<8x1xf32> -> vector<8x1xf32>
      %41 = vector.broadcast %40 : vector<8x1xf32> to vector<8x64xf32>
      %42 = arith.mulf %36, %41 : vector<8x64xf32>
      %43 = arith.mulf %42, %42 : vector<8x64xf32>
      %cst_35 = arith.constant dense<0.000000e+00> : vector<8xf32>
      %44 = vector.multi_reduction <add>, %43, %cst_35 [1] : vector<8x64xf32> to vector<8xf32>
      %45 = vector.shape_cast %44 : vector<8xf32> to vector<8x1xf32>
      %cst_36 = arith.constant 1.000000e-24 : f32
      %46 = vector.broadcast %cst_36 : f32 to vector<8x1xf32>
      %47 = arith.maximumf %45, %46 : vector<8x1xf32>
      %48 = math.rsqrt %47 : vector<8x1xf32>
      %49 = vector.broadcast %48 : vector<8x1xf32> to vector<8x64xf32>
      %50 = arith.mulf %42, %49 : vector<8x64xf32>
      %c0_37 = arith.constant 0 : index
      %c0_38 = arith.constant 0 : index
      %51 = vector.load %arg13[%c0_37, %c0_38] : memref<8x64xf32, #tpu.memory_space<vmem>>, vector<8x64xf32>
      %c0_39 = arith.constant 0 : index
      %c0_40 = arith.constant 0 : index
      %52 = vector.load %arg14[%c0_39, %c0_40] : memref<8x1xf32, #tpu.memory_space<vmem>>, vector<8x1xf32>
      %cst_41 = arith.constant 9.99999971E-10 : f32
      %53 = vector.broadcast %cst_41 : f32 to vector<8x1xf32>
      %54 = arith.maximumf %52, %53 : vector<8x1xf32>
      %55 = tpu.reciprocal %54 : vector<8x1xf32> -> vector<8x1xf32>
      %56 = vector.broadcast %55 : vector<8x1xf32> to vector<8x64xf32>
      %57 = arith.mulf %51, %56 : vector<8x64xf32>
      %58 = arith.mulf %57, %57 : vector<8x64xf32>
      %cst_42 = arith.constant dense<0.000000e+00> : vector<8xf32>
      %59 = vector.multi_reduction <add>, %58, %cst_42 [1] : vector<8x64xf32> to vector<8xf32>
      %60 = vector.shape_cast %59 : vector<8xf32> to vector<8x1xf32>
      %cst_43 = arith.constant 1.000000e-24 : f32
      %61 = vector.broadcast %cst_43 : f32 to vector<8x1xf32>
      %62 = arith.maximumf %60, %61 : vector<8x1xf32>
      %63 = math.rsqrt %62 : vector<8x1xf32>
      %64 = vector.broadcast %63 : vector<8x1xf32> to vector<8x64xf32>
      %65 = arith.mulf %57, %64 : vector<8x64xf32>
      %66 = arith.subf %50, %65 : vector<8x64xf32>
      %67 = math.absf %66 : vector<8x64xf32>
      %c0_44 = arith.constant 0 : index
      %c0_45 = arith.constant 0 : index
      %68 = vector.load %arg6[%c0_44, %c0_45] : memref<192x128xf32, #tpu.memory_space<vmem>>, vector<64x128xf32>
      %cst_46 = arith.constant dense<0.000000e+00> : vector<8x128xf32>
      %69 = tpu.matmul %50, %68, %cst_46 {dimension_numbers = #tpu.dot_dimension_numbers<[1], [0], [0], [1], [0, 0, 1, 1], [], []>} : vector<8x64xf32>, vector<64x128xf32>, vector<8x128xf32> -> vector<8x128xf32>
      %c64 = arith.constant 64 : index
      %c0_47 = arith.constant 0 : index
      %70 = vector.load %arg6[%c64, %c0_47] : memref<192x128xf32, #tpu.memory_space<vmem>>, vector<64x128xf32>
      %cst_48 = arith.constant dense<0.000000e+00> : vector<8x128xf32>
      %71 = tpu.matmul %65, %70, %cst_48 {dimension_numbers = #tpu.dot_dimension_numbers<[1], [0], [0], [1], [0, 0, 1, 1], [], []>} : vector<8x64xf32>, vector<64x128xf32>, vector<8x128xf32> -> vector<8x128xf32>
      %72 = arith.addf %69, %71 : vector<8x128xf32>
      %c128 = arith.constant 128 : index
      %c0_49 = arith.constant 0 : index
      %73 = vector.load %arg6[%c128, %c0_49] : memref<192x128xf32, #tpu.memory_space<vmem>>, vector<64x128xf32>
      %cst_50 = arith.constant dense<0.000000e+00> : vector<8x128xf32>
      %74 = tpu.matmul %67, %73, %cst_50 {dimension_numbers = #tpu.dot_dimension_numbers<[1], [0], [0], [1], [0, 0, 1, 1], [], []>} : vector<8x64xf32>, vector<64x128xf32>, vector<8x128xf32> -> vector<8x128xf32>
      %75 = arith.addf %72, %74 : vector<8x128xf32>
      %c0_51 = arith.constant 0 : index
      %c0_52 = arith.constant 0 : index
      %76 = vector.load %arg7[%c0_51, %c0_52] : memref<1x128xf32, #tpu.memory_space<vmem>>, vector<1x128xf32>
      %77 = vector.broadcast %76 : vector<1x128xf32> to vector<8x128xf32>
      %78 = arith.addf %75, %77 : vector<8x128xf32>
      %c0_53 = arith.constant 0 : index
      %c0_54 = arith.constant 0 : index
      %79 = vector.load %arg9[%c0_53, %c0_54] : memref<8x128xf32, #tpu.memory_space<vmem>>, vector<8x128xf32>
      tpu.vector_store %arg9[%c0_53, %c0_54], %78 {strides = array<i32>} : memref<8x128xf32, #tpu.memory_space<vmem>>, vector<8x128xf32>,
      %80 = tpu.iota {dimensions = array<i32: 1>} : vector<8x128xi32>
      %c3_i32 = arith.constant 3 : i32
      %81 = vector.broadcast %c3_i32 : i32 to vector<8x128xi32>
      %82 = arith.cmpi slt, %80, %81 : vector<8x128xi32>
      %cst_55 = arith.constant -1.000000e+30 : f32
      %83 = vector.broadcast %cst_55 : f32 to vector<8x128xf32>
      %84 = arith.select %82, %78, %83 : vector<8x128xi1>, vector<8x128xf32>
      %cst_56 = arith.constant dense<0xFF800000> : vector<8xf32>
      %85 = vector.multi_reduction <maximumf>, %84, %cst_56 [1] : vector<8x128xf32> to vector<8xf32>
      %86 = vector.shape_cast %85 : vector<8xf32> to vector<8x1xf32>
      %87 = vector.broadcast %86 : vector<8x1xf32> to vector<8x128xf32>
      %88 = arith.subf %84, %87 : vector<8x128xf32>
      %89 = math.exp %88 : vector<8x128xf32>
      %cst_57 = arith.constant 0.000000e+00 : f32
      %90 = vector.broadcast %cst_57 : f32 to vector<8x128xf32>
      %91 = arith.select %82, %89, %90 : vector<8x128xi1>, vector<8x128xf32>
      %cst_58 = arith.constant dense<0.000000e+00> : vector<8xf32>
      %92 = vector.multi_reduction <add>, %91, %cst_58 [1] : vector<8x128xf32> to vector<8xf32>
      %93 = vector.shape_cast %92 : vector<8xf32> to vector<8x1xf32>
      %94 = math.log %93 : vector<8x1xf32>
      %95 = vector.broadcast %94 : vector<8x1xf32> to vector<8x128xf32>
      %96 = arith.subf %88, %95 : vector<8x128xf32>
      %c0_59 = arith.constant 0 : index
      %c0_60 = arith.constant 0 : index
      %97 = vector.load %arg8[%c0_59, %c0_60] : memref<8x128xf32, #tpu.memory_space<vmem>>, vector<8x128xf32>
      %98 = arith.mulf %97, %96 : vector<8x128xf32>
      %cst_61 = arith.constant dense<0.000000e+00> : vector<8xf32>
      %99 = vector.multi_reduction <add>, %98, %cst_61 [1] : vector<8x128xf32> to vector<8xf32>
      %100 = vector.shape_cast %99 : vector<8xf32> to vector<8x1xf32>
      %cst_62 = arith.constant 0.000000e+00 : f32
      %101 = vector.broadcast %cst_62 : f32 to vector<8x1xf32>
      %102 = arith.subf %101, %100 : vector<8x1xf32>
      %c0_63 = arith.constant 0 : index
      %c0_64 = arith.constant 0 : index
      %103 = vector.load %arg10[%c0_63, %c0_64] : memref<8x1xf32, #tpu.memory_space<vmem>>, vector<8x1xf32>
      tpu.vector_store %arg10[%c0_63, %c0_64], %102 {strides = array<i32>} : memref<8x1xf32, #tpu.memory_space<vmem>>, vector<8x1xf32>,
    } else {
    }
    return
  }
  func.func @transform_0(%arg0: i32, %arg1: i32) -> (i32, i32, i32) {
    %c0_i32 = arith.constant 0 : i32
    %c0_i32_0 = arith.constant 0 : i32
    return %arg0, %arg1, %c0_i32 : i32, i32, i32
  }
  func.func @transform_1(%arg0: i32, %arg1: i32) -> (i32, i32) {
    %c0_i32 = arith.constant 0 : i32
    return %arg0, %arg1 : i32, i32
  }
  func.func @transform_2(%arg0: i32, %arg1: i32) -> (i32, i32, i32) {
    %c0_i32 = arith.constant 0 : i32
    %c0_i32_0 = arith.constant 0 : i32
    return %arg0, %arg1, %c0_i32 : i32, i32, i32
  }
  func.func @transform_3(%arg0: i32, %arg1: i32) -> (i32, i32) {
    %c0_i32 = arith.constant 0 : i32
    return %arg0, %arg1 : i32, i32
  }
  func.func @transform_4(%arg0: i32, %arg1: i32) -> (i32, i32) {
    %c0_i32 = arith.constant 0 : i32
    %c0_i32_0 = arith.constant 0 : i32
    %c0_i32_1 = arith.constant 0 : i32
    return %c0_i32, %c0_i32_0 : i32, i32
  }
  func.func @transform_5(%arg0: i32, %arg1: i32) -> (i32, i32) {
    %c0_i32 = arith.constant 0 : i32
    %c0_i32_0 = arith.constant 0 : i32
    %c0_i32_1 = arith.constant 0 : i32
    return %c0_i32, %c0_i32_0 : i32, i32
  }
  func.func @transform_6(%arg0: i32, %arg1: i32) -> (i32, i32) {
    %c0_i32 = arith.constant 0 : i32
    %c0_i32_0 = arith.constant 0 : i32
    return %arg0, %c0_i32 : i32, i32
  }
  func.func @transform_7(%arg0: i32, %arg1: i32) -> (i32, i32) {
    %c0_i32 = arith.constant 0 : i32
    %c0_i32_0 = arith.constant 0 : i32
    return %arg0, %c0_i32 : i32, i32
  }
  func.func @transform_8(%arg0: i32, %arg1: i32) -> (i32, i32) {
    %c0_i32 = arith.constant 0 : i32
    %c0_i32_0 = arith.constant 0 : i32
    return %arg0, %c0_i32 : i32, i32
  }
}

</mosaic_0001>

<llo_original>
// kernel: tpu_custom_call.1
$region0: #{tpu_custom_call.1}
  #allocation0 [shape = 'u32[]', space=smem, size = 0x4, offset = 0x4, fixed_abs, tag = 'smem constant byte address 0x4 - core index']
  #allocation1 [shape = 'u32[72,128]{1,0:T(1,128)}', space=vmem, size = 0x9000, scoped, tag = 'internal scratch']
  #allocation2 [shape = 'f32[8,64]{1,0:T(8,128)}', space=vmem, size = 0x1000, scoped, tag = 'scratch operand']
  #allocation3 [shape = 'f32[8,1]{1,0:T(8,128)}', space=vmem, size = 0x1000, scoped, tag = 'scratch operand']
  #allocation4 [shape = 'f32[8,64]{1,0:T(8,128)}', space=vmem, size = 0x1000, scoped, tag = 'scratch operand']
  #allocation5 [shape = 'f32[8,1]{1,0:T(8,128)}', space=vmem, size = 0x1000, scoped, tag = 'scratch operand']
  %s0 = inlined_call_operand.vmem [shape: bf16[16,256,64], index: 0, kind: input, shape index: {}]
  %s1 = inlined_call_operand.vmem [shape: f32[16,256], index: 1, kind: input, shape index: {}]
  %s2 = inlined_call_operand.vmem [shape: bf16[16,256,64], index: 2, kind: input, shape index: {}]
  %s3 = inlined_call_operand.vmem [shape: f32[16,256], index: 3, kind: input, shape index: {}]
  %s4 = inlined_call_operand.vmem [shape: f32[192,128], index: 4, kind: input, shape index: {}]
  %s5 = inlined_call_operand.vmem [shape: f32[1,128], index: 5, kind: input, shape index: {}]
  %s6 = inlined_call_operand.vmem [shape: f32[16,128], index: 6, kind: input, shape index: {}]
  %s7 = inlined_call_operand.hbm [shape: f32[16,128], index: 7, kind: output, shape index: {0}]
  %s8 = inlined_call_operand.vmem [shape: f32[16,1], index: 8, kind: output, shape index: {1}]
  %9 = xla_tuple %s7, %s8
  %s10 = sld [smem:[#allocation0]]
  $region159: #{tpu_custom_call.1} parent=0
    _
  %s12 = ssub.s32 1, %s10
  %s13 = scalar_select 0, %s12, %s10
  $region1: #{tpu_custom_call.1} parent=0
    #allocation6 [shape = 'u8[524288]{0}', space=vmem, size = 0x80000, scoped, tag = 'input window, operand 0']
    #allocation7 [shape = 'u8[524288]{0}', space=vmem, size = 0x80000, scoped, tag = 'input window, operand 2']
    #allocation8 [shape = 'u8[8192]{0}', space=vmem, size = 0x2000, scoped, tag = 'output window, operand 0']
    #allocation9 [shape = 's32[2]{0}', space=sflag, size = 0x8, scoped, tag = 'scoped memory for tpu_custom_call.1']
    %14 = vsyncpa [#allocation9], 0
    %s15 = scalar_lea.sflag [#allocation9], 1
    %16 = vsyncpa %s15, 0
    loop: start=0, step=1, limit=6
    $region2: #{tpu_custom_call.1} parent=1 // loop_pre_header
      _
    $region3: #{tpu_custom_call.1} parent=1 // loop_header
      %s18 = sphi 0, %s22
      %p19 = scmp.ge.s32.totalorder %s18, 6
      %s25 = sphi 0, %s37
      %s26 = sphi 0, %s33
      %s27 = sphi 0, %s25
      %s28 = sphi 0, %s26
      %s29 = sphi 0, %s27
      %s30 = sphi 0, %s28
      %s42 = sphi 0, %s44
      %s45 = sphi 0, %s42
      %s46 = sphi 0, %s45
      %s62 = sphi 0, %s46
      %s70 = sphi 0, %s72
      %s73 = sphi 0, %s70
      %s74 = sphi 0, %s73
      %s90 = sphi 0, %s74
      %s98 = sphi 0, %s100
      %s101 = sphi 0, %s98
      %s102 = sphi 0, %s101
      %s118 = sphi 0, %s102
      %s126 = sphi 0, %s128
      %s129 = sphi 0, %s126
      %s130 = sphi 0, %s129
      %s146 = sphi 0, %s130
      %s150 = sphi 0, %s150
      %s152 = sphi 0, %s150
      %s153 = sphi 0, %s152
      %s167 = sphi 0, %s153
      %s171 = sphi 0, %s171
      %s173 = sphi 0, %s171
      %s174 = sphi 0, %s173
      %s188 = sphi 0, %s174
      %s194 = sphi 0, %s196
      %s197 = sphi 0, %s194
      %s198 = sphi 0, %s197
      %s214 = sphi 0, %s198
      %s220 = sphi 0, %s222
      %s223 = sphi 0, %s220
      %s224 = sphi 0, %s223
      %s240 = sphi 0, %s224
      %s246 = sphi 0, %s248
      %s249 = sphi 0, %s246
      %s250 = sphi 0, %s249
      %s266 = sphi 0, %s250
    $region4: #{tpu_custom_call.1} parent=1 // loop_header_branch
      %21 = sbr.rel (%p19) target = $region8
    $region5: #{tpu_custom_call.1} parent=1 // loop_body
      %s23 = ssub.s32 %s18, 1
      %s24 = ssub.s32 %s18, 2
      %s31 = sadd.s32 1, %s26
      %p32 = scmp.ge.s32.totalorder %s31, 2
      %s33 = scalar_select %p32, 0, %s31
      %s34 = sadd.s32 1, %s25
      %s35 = scalar_select %p32, %s34, %s25
      %p36 = scmp.ge.s32.totalorder %s35, 2
      %s37 = scalar_select %p36, 0, %s35
      %s38 = ssub.s32 %s25, %s37
      %s39 = ssub.s32 %s26, %s33
      %s40 = sor.u32 %s38, %s39
      %p41 = scmp.eq.s32.totalorder %s40, 0
      %s43 = sadd.s32 %s42, 1
      %s44 = scalar_select %p41, %s42, %s43
      %p47 = pneg %p41
      %p48 = scmp.eq.s32.totalorder %s18, 3
      %p49 = por %p47, %p48
      %p50 = scmp.ne.s32.totalorder %s42, %s45
      %p51 = scmp.eq.s32.totalorder %s18, 0
      %p52 = por %p50, %p51
      %p53 = scmp.ne.s32.totalorder %s42, %s45
      %p54 = scmp.eq.s32.totalorder %s23, 3
      %p55 = por %p53, %p54
      %p56 = scmp.ne.s32.totalorder %s45, %s46
      %p57 = scmp.eq.s32.totalorder %s23, 0
      %p58 = por %p56, %p57
      %p59 = scmp.ne.s32.totalorder %s45, %s46
      %p60 = scmp.eq.s32.totalorder %s24, 3
      %p61 = por %p59, %p60
      %p63 = scmp.ne.s32.totalorder %s46, %s62
      %p64 = scmp.eq.s32.totalorder %s24, 0
      %p65 = por %p63, %p64
      %s66 = ssub.s32 %s25, %s37
      %s67 = ssub.s32 %s26, %s33
      %s68 = sor.u32 %s66, %s67
      %p69 = scmp.eq.s32.totalorder %s68, 0
      %s71 = sadd.s32 %s70, 1
      %s72 = scalar_select %p69, %s70, %s71
      %p75 = pneg %p69
      %p76 = scmp.eq.s32.totalorder %s18, 3
      %p77 = por %p75, %p76
      %p78 = scmp.ne.s32.totalorder %s70, %s73
      %p79 = scmp.eq.s32.totalorder %s18, 0
      %p80 = por %p78, %p79
      %p81 = scmp.ne.s32.totalorder %s70, %s73
      %p82 = scmp.eq.s32.totalorder %s23, 3
      %p83 = por %p81, %p82
      %p84 = scmp.ne.s32.totalorder %s73, %s74
      %p85 = scmp.eq.s32.totalorder %s23, 0
      %p86 = por %p84, %p85
      %p87 = scmp.ne.s32.totalorder %s73, %s74
      %p88 = scmp.eq.s32.totalorder %s24, 3
      %p89 = por %p87, %p88
      %p91 = scmp.ne.s32.totalorder %s74, %s90
      %p92 = scmp.eq.s32.totalorder %s24, 0
      %p93 = por %p91, %p92
      %s94 = ssub.s32 %s25, %s37
      %s95 = ssub.s32 %s26, %s33
      %s96 = sor.u32 %s94, %s95
      %p97 = scmp.eq.s32.totalorder %s96, 0
      %s99 = sadd.s32 %s98, 1
      %s100 = scalar_select %p97, %s98, %s99
      %p103 = pneg %p97
      %p104 = scmp.eq.s32.totalorder %s18, 3
      %p105 = por %p103, %p104
      %p106 = scmp.ne.s32.totalorder %s98, %s101
      %p107 = scmp.eq.s32.totalorder %s18, 0
      %p108 = por %p106, %p107
      %p109 = scmp.ne.s32.totalorder %s98, %s101
      %p110 = scmp.eq.s32.totalorder %s23, 3
      %p111 = por %p109, %p110
      %p112 = scmp.ne.s32.totalorder %s101, %s102
      %p113 = scmp.eq.s32.totalorder %s23, 0
      %p114 = por %p112, %p113
      %p115 = scmp.ne.s32.totalorder %s101, %s102
      %p116 = scmp.eq.s32.totalorder %s24, 3
      %p117 = por %p115, %p116
      %p119 = scmp.ne.s32.totalorder %s102, %s118
      %p120 = scmp.eq.s32.totalorder %s24, 0
      %p121 = por %p119, %p120
      %s122 = ssub.s32 %s25, %s37
      %s123 = ssub.s32 %s26, %s33
      %s124 = sor.u32 %s122, %s123
      %p125 = scmp.eq.s32.totalorder %s124, 0
      %s127 = sadd.s32 %s126, 1
      %s128 = scalar_select %p125, %s126, %s127
      %p131 = pneg %p125
      %p132 = scmp.eq.s32.totalorder %s18, 3
      %p133 = por %p131, %p132
      %p134 = scmp.ne.s32.totalorder %s126, %s129
      %p135 = scmp.eq.s32.totalorder %s18, 0
      %p136 = por %p134, %p135
      %p137 = scmp.ne.s32.totalorder %s126, %s129
      %p138 = scmp.eq.s32.totalorder %s23, 3
      %p139 = por %p137, %p138
      %p140 = scmp.ne.s32.totalorder %s129, %s130
      %p141 = scmp.eq.s32.totalorder %s23, 0
      %p142 = por %p140, %p141
      %p143 = scmp.ne.s32.totalorder %s129, %s130
      %p144 = scmp.eq.s32.totalorder %s24, 3
      %p145 = por %p143, %p144
      %p147 = scmp.ne.s32.totalorder %s130, %s146
      %p148 = scmp.eq.s32.totalorder %s24, 0
      %p149 = por %p147, %p148
      %s151 = sadd.s32 %s150, 1
      %p154 = scmp.eq.s32.totalorder %s18, 3
      %p155 = scmp.ne.s32.totalorder %s150, %s152
      %p156 = scmp.eq.s32.totalorder %s18, 0
      %p157 = por %p155, %p156
      %p158 = scmp.ne.s32.totalorder %s150, %s152
      %p159 = scmp.eq.s32.totalorder %s23, 3
      %p160 = por %p158, %p159
      %p161 = scmp.ne.s32.totalorder %s152, %s153
      %p162 = scmp.eq.s32.totalorder %s23, 0
      %p163 = por %p161, %p162
      %p164 = scmp.ne.s32.totalorder %s152, %s153
      %p165 = scmp.eq.s32.totalorder %s24, 3
      %p166 = por %p164, %p165
      %p168 = scmp.ne.s32.totalorder %s153, %s167
      %p169 = scmp.eq.s32.totalorder %s24, 0
      %p170 = por %p168, %p169
      %s172 = sadd.s32 %s171, 1
      %p175 = scmp.eq.s32.totalorder %s18, 3
      %p176 = scmp.ne.s32.totalorder %s171, %s173
      %p177 = scmp.eq.s32.totalorder %s18, 0
      %p178 = por %p176, %p177
      %p179 = scmp.ne.s32.totalorder %s171, %s173
      %p180 = scmp.eq.s32.totalorder %s23, 3
      %p181 = por %p179, %p180
      %p182 = scmp.ne.s32.totalorder %s173, %s174
      %p183 = scmp.eq.s32.totalorder %s23, 0
      %p184 = por %p182, %p183
      %p185 = scmp.ne.s32.totalorder %s173, %s174
      %p186 = scmp.eq.s32.totalorder %s24, 3
      %p187 = por %p185, %p186
      %p189 = scmp.ne.s32.totalorder %s174, %s188
      %p190 = scmp.eq.s32.totalorder %s24, 0
      %p191 = por %p189, %p190
      %s192 = ssub.s32 %s25, %s37
      %p193 = scmp.eq.s32.totalorder %s192, 0
      %s195 = sadd.s32 %s194, 1
      %s196 = scalar_select %p193, %s194, %s195
      %p199 = pneg %p193
      %p200 = scmp.eq.s32.totalorder %s18, 3
      %p201 = por %p199, %p200
      %p202 = scmp.ne.s32.totalorder %s194, %s197
      %p203 = scmp.eq.s32.totalorder %s18, 0
      %p204 = por %p202, %p203
      %p205 = scmp.ne.s32.totalorder %s194, %s197
      %p206 = scmp.eq.s32.totalorder %s23, 3
      %p207 = por %p205, %p206
      %p208 = scmp.ne.s32.totalorder %s197, %s198
      %p209 = scmp.eq.s32.totalorder %s23, 0
      %p210 = por %p208, %p209
      %p211 = scmp.ne.s32.totalorder %s197, %s198
      %p212 = scmp.eq.s32.totalorder %s24, 3
      %p213 = por %p211, %p212
      %p215 = scmp.ne.s32.totalorder %s198, %s214
      %p216 = scmp.eq.s32.totalorder %s24, 0
      %p217 = por %p215, %p216
      %s218 = ssub.s32 %s25, %s37
      %p219 = scmp.eq.s32.totalorder %s218, 0
      %s221 = sadd.s32 %s220, 1
      %s222 = scalar_select %p219, %s220, %s221
      %p225 = pneg %p219
      %p226 = scmp.eq.s32.totalorder %s18, 3
      %p227 = por %p225, %p226
      %p228 = scmp.ne.s32.totalorder %s220, %s223
      %p229 = scmp.eq.s32.totalorder %s18, 0
      %p230 = por %p228, %p229
      %p231 = scmp.ne.s32.totalorder %s220, %s223
      %p232 = scmp.eq.s32.totalorder %s23, 3
      %p233 = por %p231, %p232
      %p234 = scmp.ne.s32.totalorder %s223, %s224
      %p235 = scmp.eq.s32.totalorder %s23, 0
      %p236 = por %p234, %p235
      %p237 = scmp.ne.s32.totalorder %s223, %s224
      %p238 = scmp.eq.s32.totalorder %s24, 3
      %p239 = por %p237, %p238
      %p241 = scmp.ne.s32.totalorder %s224, %s240
      %p242 = scmp.eq.s32.totalorder %s24, 0
      %p243 = por %p241, %p242
      %s244 = ssub.s32 %s25, %s37
      %p245 = scmp.eq.s32.totalorder %s244, 0
      %s247 = sadd.s32 %s246, 1
      %s248 = scalar_select %p245, %s246, %s247
      %p251 = pneg %p245
      %p252 = scmp.eq.s32.totalorder %s18, 3
      %p253 = por %p251, %p252
      %p254 = scmp.ne.s32.totalorder %s246, %s249
      %p255 = scmp.eq.s32.totalorder %s18, 0
      %p256 = por %p254, %p255
      %p257 = scmp.ne.s32.totalorder %s246, %s249
      %p258 = scmp.eq.s32.totalorder %s23, 3
      %p259 = por %p257, %p258
      %p260 = scmp.ne.s32.totalorder %s249, %s250
      %p261 = scmp.eq.s32.totalorder %s23, 0
      %p262 = por %p260, %p261
      %p263 = scmp.ne.s32.totalorder %s249, %s250
      %p264 = scmp.eq.s32.totalorder %s24, 3
      %p265 = por %p263, %p264
      %p267 = scmp.ne.s32.totalorder %s250, %s266
      %p268 = scmp.eq.s32.totalorder %s24, 0
      %p269 = por %p267, %p268
      %p270 = scmp.le.s32.totalorder 1, %s18
      %p271 = scmp.lt.s32.totalorder %s18, 5
      %p272 = pnand %p270, %p271
      %p273 = pneg %p272
      // Predicated region
      $region9: #{tpu_custom_call.1} parent=5 // pred_check
        _
      $region10: #{tpu_custom_call.1} parent=5 // pred_check_branch
        %275 = sbr.rel (%p272) target = $region12
      $region11: #{tpu_custom_call.1} parent=5 // pred_region
        %s276 = ssub.s32 %s18, 1
        // Predicated region
        $region13: #{tpu_custom_call.1} parent=11 // pred_check
          %p277 = pneg %p163
        $region14: #{tpu_custom_call.1} parent=11 // pred_check_branch
          %279 = sbr.rel (%p277) target = $region16
        $region15: #{tpu_custom_call.1} parent=11 // pred_region
          _
        $region16: #{tpu_custom_call.1} parent=11 // pred_fallthru
          _
        // Predicated region
        $region17: #{tpu_custom_call.1} parent=11 // pred_check
          %p280 = pneg %p184
        $region18: #{tpu_custom_call.1} parent=11 // pred_check_branch
          %282 = sbr.rel (%p280) target = $region20
        $region19: #{tpu_custom_call.1} parent=11 // pred_region
          _
        $region20: #{tpu_custom_call.1} parent=11 // pred_fallthru
          _
      $region12: #{tpu_custom_call.1} parent=5 // pred_fallthru
        _
      %p283 = scmp.lt.s32.totalorder %s18, 4
      // Predicated region
      $region21: #{tpu_custom_call.1} parent=5 // pred_check
        %p284 = pneg %p283
      $region22: #{tpu_custom_call.1} parent=5 // pred_check_branch
        %286 = sbr.rel (%p284) target = $region24
      $region23: #{tpu_custom_call.1} parent=5 // pred_region
        // Predicated region
        $region25: #{tpu_custom_call.1} parent=23 // pred_check
          %p287 = pneg %p52
        $region26: #{tpu_custom_call.1} parent=23 // pred_check_branch
          %289 = sbr.rel (%p287) target = $region28
        $region27: #{tpu_custom_call.1} parent=23 // pred_region
          %s290 = sand.u32 %s42, 1
          %s291 = sand.u32 %s42, 1
          %s292 = smul.addr %s291, 512
          %s293 = scalar_lea.vmem [#allocation6], %s292
          %s294 = smul.u32 8, %s25
          %s295 = smul.u32 16, %s26
          %s296 = smul.addr %s294, 32
          %s297 = sadd.s32 %s295, %s296
          %s298 = smul.addr %s297, 4
          %s299 = scalar_lea.vmem %s0, %s298
          // Predicated region
          $region29: #{tpu_custom_call.1} parent=27 // pred_check
            _
          $region30: #{tpu_custom_call.1} parent=27 // pred_check_branch
            %301 = sbr.rel (0) target = $region32
          $region31: #{tpu_custom_call.1} parent=27 // pred_region
            // Predicated region
            $region33: #{tpu_custom_call.1} parent=31 // pred_check
              _
            $region34: #{tpu_custom_call.1} parent=31 // pred_check_branch
              %303 = sbr.rel target = $region36
            $region35: #{tpu_custom_call.1} parent=31 // pred_region
              // Predicated region
              $region48: #{tpu_custom_call.1} parent=35 // pred_check
                _
              $region49: #{tpu_custom_call.1} parent=35 // pred_check_branch
                %573 = sbr.rel (0) target = $region51
              $region50: #{tpu_custom_call.1} parent=35 // pred_region
                loop: start=0, step=1, limit=1
                $region52: #{tpu_custom_call.1} parent=50 // loop_pre_header
                  _
                $region53: #{tpu_custom_call.1} parent=50 // loop_header
                  %s575 = sphi 0, %s579
                  %p576 = scmp.ge.s32.totalorder %s575, 1
                  %s580 = sphi %s299, %s299
                  %s581 = sphi %s293, %s293
                $region54: #{tpu_custom_call.1} parent=50 // loop_header_branch
                  %578 = sbr.rel (%p576) target = $region58
                $region55: #{tpu_custom_call.1} parent=50 // loop_body
                  _
                $region56: #{tpu_custom_call.1} parent=50 // loop_footer
                  %s579 = sadd.s32 1, %s575
                $region57: #{tpu_custom_call.1} parent=50 // loop_footer_branch
                  %574 = sbr.rel target = $region53
                $region58: #{tpu_custom_call.1} parent=50 // loop_exit
                  _
                %s583 = ssub.s32 16, 1
                loop: start=0, step=1, limit=1
                $region59: #{tpu_custom_call.1} parent=50 // loop_pre_header
                  _
                $region60: #{tpu_custom_call.1} parent=50 // loop_header
                  %s585 = sphi 0, %s589
                  %p586 = scmp.ge.s32.totalorder %s585, 1
                  %s590 = sphi %s299, %s299
                  %s591 = sphi %s293, %s293
                $region61: #{tpu_custom_call.1} parent=50 // loop_header_branch
                  %588 = sbr.rel (%p586) target = $region65
                $region62: #{tpu_custom_call.1} parent=50 // loop_body
                  %v592 = vld [vmem:[%s590] sm:%s583]
                  %593 = vst [vmem:[%s591] sm:%s583] %v592
                  %v594 = vld [vmem:[%s590 + $0x4] sm:%s583]
                  %595 = vst [vmem:[%s591 + $0x4] sm:%s583] %v594
                  %v596 = vld [vmem:[%s590 + $0x8] sm:%s583]
                  %597 = vst [vmem:[%s591 + $0x8] sm:%s583] %v596
                  %v598 = vld [vmem:[%s590 + $0xc] sm:%s583]
                  %599 = vst [vmem:[%s591 + $0xc] sm:%s583] %v598
                  %v600 = vld [vmem:[%s590 + $0x10] sm:%s583]
                  %601 = vst [vmem:[%s591 + $0x10] sm:%s583] %v600
                  %v602 = vld [vmem:[%s590 + $0x14] sm:%s583]
                  %603 = vst [vmem:[%s591 + $0x14] sm:%s583] %v602
                  %v604 = vld [vmem:[%s590 + $0x18] sm:%s583]
                  %605 = vst [vmem:[%s591 + $0x18] sm:%s583] %v604
                  %v606 = vld [vmem:[%s590 + $0x1c] sm:%s583]
                  %607 = vst [vmem:[%s591 + $0x1c] sm:%s583] %v606
                  %v608 = vld [vmem:[%s590 + $0x20] sm:%s583]
                  %609 = vst [vmem:[%s591 + $0x20] sm:%s583] %v608
                  %v610 = vld [vmem:[%s590 + $0x24] sm:%s583]
                  %611 = vst [vmem:[%s591 + $0x24] sm:%s583] %v610
                  %v612 = vld [vmem:[%s590 + $0x28] sm:%s583]
                  %613 = vst [vmem:[%s591 + $0x28] sm:%s583] %v612
                  %v614 = vld [vmem:[%s590 + $0x2c] sm:%s583]
                  %615 = vst [vmem:[%s591 + $0x2c] sm:%s583] %v614
                  %v616 = vld [vmem:[%s590 + $0x30] sm:%s583]
                  %617 = vst [vmem:[%s591 + $0x30] sm:%s583] %v616
                  %v618 = vld [vmem:[%s590 + $0x34] sm:%s583]
                  %619 = vst [vmem:[%s591 + $0x34] sm:%s583] %v618
                  %v620 = vld [vmem:[%s590 + $0x38] sm:%s583]
                  %621 = vst [vmem:[%s591 + $0x38] sm:%s583] %v620
                  %v622 = vld [vmem:[%s590 + $0x3c] sm:%s583]
                  %623 = vst [vmem:[%s591 + $0x3c] sm:%s583] %v622
                  %v624 = vld [vmem:[%s590 + $0x80] sm:%s583]
                  %625 = vst [vmem:[%s591 + $0x40] sm:%s583] %v624
                  %v626 = vld [vmem:[%s590 + $0x84] sm:%s583]
                  %627 = vst [vmem:[%s591 + $0x44] sm:%s583] %v626
                  %v628 = vld [vmem:[%s590 + $0x88] sm:%s583]
                  %629 = vst [vmem:[%s591 + $0x48] sm:%s583] %v628
                  %v630 = vld [vmem:[%s590 + $0x8c] sm:%s583]
                  %631 = vst [vmem:[%s591 + $0x4c] sm:%s583] %v630
                  %v632 = vld [vmem:[%s590 + $0x90] sm:%s583]
                  %633 = vst [vmem:[%s591 + $0x50] sm:%s583] %v632
                  %v634 = vld [vmem:[%s590 + $0x94] sm:%s583]
                  %635 = vst [vmem:[%s591 + $0x54] sm:%s583] %v634
                  %v636 = vld [vmem:[%s590 + $0x98] sm:%s583]
                  %637 = vst [vmem:[%s591 + $0x58] sm:%s583] %v636
                  %v638 = vld [vmem:[%s590 + $0x9c] sm:%s583]
                  %639 = vst [vmem:[%s591 + $0x5c] sm:%s583] %v638
                  %v640 = vld [vmem:[%s590 + $0xa0] sm:%s583]
                  %641 = vst [vmem:[%s591 + $0x60] sm:%s583] %v640
                  %v642 = vld [vmem:[%s590 + $0xa4] sm:%s583]
                  %643 = vst [vmem:[%s591 + $0x64] sm:%s583] %v642
                  %v644 = vld [vmem:[%s590 + $0xa8] sm:%s583]
                  %645 = vst [vmem:[%s591 + $0x68] sm:%s583] %v644
                  %v646 = vld [vmem:[%s590 + $0xac] sm:%s583]
                  %647 = vst [vmem:[%s591 + $0x6c] sm:%s583] %v646
                  %v648 = vld [vmem:[%s590 + $0xb0] sm:%s583]
                  %649 = vst [vmem:[%s591 + $0x70] sm:%s583] %v648
                  %v650 = vld [vmem:[%s590 + $0xb4] sm:%s583]
                  %651 = vst [vmem:[%s591 + $0x74] sm:%s583] %v650
                  %v652 = vld [vmem:[%s590 + $0xb8] sm:%s583]
                  %653 = vst [vmem:[%s591 + $0x78] sm:%s583] %v652
                  %v654 = vld [vmem:[%s590 + $0xbc] sm:%s583]
                  %655 = vst [vmem:[%s591 + $0x7c] sm:%s583] %v654
                  %v656 = vld [vmem:[%s590 + $0x100] sm:%s583]
                  %657 = vst [vmem:[%s591 + $0x80] sm:%s583] %v656
                  %v658 = vld [vmem:[%s590 + $0x104] sm:%s583]
                  %659 = vst [vmem:[%s591 + $0x84] sm:%s583] %v658
                  %v660 = vld [vmem:[%s590 + $0x108] sm:%s583]
                  %661 = vst [vmem:[%s591 + $0x88] sm:%s583] %v660
                  %v662 = vld [vmem:[%s590 + $0x10c] sm:%s583]
                  %663 = vst [vmem:[%s591 + $0x8c] sm:%s583] %v662
                  %v664 = vld [vmem:[%s590 + $0x110] sm:%s583]
                  %665 = vst [vmem:[%s591 + $0x90] sm:%s583] %v664
                  %v666 = vld [vmem:[%s590 + $0x114] sm:%s583]
                  %667 = vst [vmem:[%s591 + $0x94] sm:%s583] %v666
                  %v668 = vld [vmem:[%s590 + $0x118] sm:%s583]
                  %669 = vst [vmem:[%s591 + $0x98] sm:%s583] %v668
                  %v670 = vld [vmem:[%s590 + $0x11c] sm:%s583]
                  %671 = vst [vmem:[%s591 + $0x9c] sm:%s583] %v670
                  %v672 = vld [vmem:[%s590 + $0x120] sm:%s583]
                  %673 = vst [vmem:[%s591 + $0xa0] sm:%s583] %v672
                  %v674 = vld [vmem:[%s590 + $0x124] sm:%s583]
                  %675 = vst [vmem:[%s591 + $0xa4] sm:%s583] %v674
                  %v676 = vld [vmem:[%s590 + $0x128] sm:%s583]
                  %677 = vst [vmem:[%s591 + $0xa8] sm:%s583] %v676
                  %v678 = vld [vmem:[%s590 + $0x12c] sm:%s583]
                  %679 = vst [vmem:[%s591 + $0xac] sm:%s583] %v678
                  %v680 = vld [vmem:[%s590 + $0x130] sm:%s583]
                  %681 = vst [vmem:[%s591 + $0xb0] sm:%s583] %v680
                  %v682 = vld [vmem:[%s590 + $0x134] sm:%s583]
                  %683 = vst [vmem:[%s591 + $0xb4] sm:%s583] %v682
                  %v684 = vld [vmem:[%s590 + $0x138] sm:%s583]
                  %685 = vst [vmem:[%s591 + $0xb8] sm:%s583] %v684
                  %v686 = vld [vmem:[%s590 + $0x13c] sm:%s583]
                  %687 = vst [vmem:[%s591 + $0xbc] sm:%s583] %v686
                  %v688 = vld [vmem:[%s590 + $0x180] sm:%s583]
                  %689 = vst [vmem:[%s591 + $0xc0] sm:%s583] %v688
                  %v690 = vld [vmem:[%s590 + $0x184] sm:%s583]
                  %691 = vst [vmem:[%s591 + $0xc4] sm:%s583] %v690
                  %v692 = vld [vmem:[%s590 + $0x188] sm:%s583]
                  %693 = vst [vmem:[%s591 + $0xc8] sm:%s583] %v692
                  %v694 = vld [vmem:[%s590 + $0x18c] sm:%s583]
                  %695 = vst [vmem:[%s591 + $0xcc] sm:%s583] %v694
                  %v696 = vld [vmem:[%s590 + $0x190] sm:%s583]
                  %697 = vst [vmem:[%s591 + $0xd0] sm:%s583] %v696
                  %v698 = vld [vmem:[%s590 + $0x194] sm:%s583]
                  %699 = vst [vmem:[%s591 + $0xd4] sm:%s583] %v698
                  %v700 = vld [vmem:[%s590 + $0x198] sm:%s583]
                  %701 = vst [vmem:[%s591 + $0xd8] sm:%s583] %v700
                  %v702 = vld [vmem:[%s590 + $0x19c] sm:%s583]
                  %703 = vst [vmem:[%s591 + $0xdc] sm:%s583] %v702
                  %v704 = vld [vmem:[%s590 + $0x1a0] sm:%s583]
                  %705 = vst [vmem:[%s591 + $0xe0] sm:%s583] %v704
                  %v706 = vld [vmem:[%s590 + $0x1a4] sm:%s583]
                  %707 = vst [vmem:[%s591 + $0xe4] sm:%s583] %v706
                  %v708 = vld [vmem:[%s590 + $0x1a8] sm:%s583]
                  %709 = vst [vmem:[%s591 + $0xe8] sm:%s583] %v708
                  %v710 = vld [vmem:[%s590 + $0x1ac] sm:%s583]
                  %711 = vst [vmem:[%s591 + $0xec] sm:%s583] %v710
                  %v712 = vld [vmem:[%s590 + $0x1b0] sm:%s583]
                  %713 = vst [vmem:[%s591 + $0xf0] sm:%s583] %v712
                  %v714 = vld [vmem:[%s590 + $0x1b4] sm:%s583]
                  %715 = vst [vmem:[%s591 + $0xf4] sm:%s583] %v714
                  %v716 = vld [vmem:[%s590 + $0x1b8] sm:%s583]
                  %717 = vst [vmem:[%s591 + $0xf8] sm:%s583] %v716
                  %v718 = vld [vmem:[%s590 + $0x1bc] sm:%s583]
                  %719 = vst [vmem:[%s591 + $0xfc] sm:%s583] %v718
                  %v720 = vld [vmem:[%s590 + $0x200] sm:%s583]
                  %721 = vst [vmem:[%s591 + $0x100] sm:%s583] %v720
                  %v722 = vld [vmem:[%s590 + $0x204] sm:%s583]
                  %723 = vst [vmem:[%s591 + $0x104] sm:%s583] %v722
                  %v724 = vld [vmem:[%s590 + $0x208] sm:%s583]
                  %725 = vst [vmem:[%s591 + $0x108] sm:%s583] %v724
                  %v726 = vld [vmem:[%s590 + $0x20c] sm:%s583]
                  %727 = vst [vmem:[%s591 + $0x10c] sm:%s583] %v726
                  %v728 = vld [vmem:[%s590 + $0x210] sm:%s583]
                  %729 = vst [vmem:[%s591 + $0x110] sm:%s583] %v728
                  %v730 = vld [vmem:[%s590 + $0x214] sm:%s583]
                  %731 = vst [vmem:[%s591 + $0x114] sm:%s583] %v730
                  %v732 = vld [vmem:[%s590 + $0x218] sm:%s583]
                  %733 = vst [vmem:[%s591 + $0x118] sm:%s583] %v732
                  %v734 = vld [vmem:[%s590 + $0x21c] sm:%s583]
                  %735 = vst [vmem:[%s591 + $0x11c] sm:%s583] %v734
                  %v736 = vld [vmem:[%s590 + $0x220] sm:%s583]
                  %737 = vst [vmem:[%s591 + $0x120] sm:%s583] %v736
                  %v738 = vld [vmem:[%s590 + $0x224] sm:%s583]
                  %739 = vst [vmem:[%s591 + $0x124] sm:%s583] %v738
                  %v740 = vld [vmem:[%s590 + $0x228] sm:%s583]
                  %741 = vst [vmem:[%s591 + $0x128] sm:%s583] %v740
                  %v742 = vld [vmem:[%s590 + $0x22c] sm:%s583]
                  %743 = vst [vmem:[%s591 + $0x12c] sm:%s583] %v742
                  %v744 = vld [vmem:[%s590 + $0x230] sm:%s583]
                  %745 = vst [vmem:[%s591 + $0x130] sm:%s583] %v744
                  %v746 = vld [vmem:[%s590 + $0x234] sm:%s583]
                  %747 = vst [vmem:[%s591 + $0x134] sm:%s583] %v746
                  %v748 = vld [vmem:[%s590 + $0x238] sm:%s583]
                  %749 = vst [vmem:[%s591 + $0x138] sm:%s583] %v748
                  %v750 = vld [vmem:[%s590 + $0x23c] sm:%s583]
                  %751 = vst [vmem:[%s591 + $0x13c] sm:%s583] %v750
                  %v752 = vld [vmem:[%s590 + $0x280] sm:%s583]
                  %753 = vst [vmem:[%s591 + $0x140] sm:%s583] %v752
                  %v754 = vld [vmem:[%s590 + $0x284] sm:%s583]
                  %755 = vst [vmem:[%s591 + $0x144] sm:%s583] %v754
                  %v756 = vld [vmem:[%s590 + $0x288] sm:%s583]
                  %757 = vst [vmem:[%s591 + $0x148] sm:%s583] %v756
                  %v758 = vld [vmem:[%s590 + $0x28c] sm:%s583]
                  %759 = vst [vmem:[%s591 + $0x14c] sm:%s583] %v758
                  %v760 = vld [vmem:[%s590 + $0x290] sm:%s583]
                  %761 = vst [vmem:[%s591 + $0x150] sm:%s583] %v760
                  %v762 = vld [vmem:[%s590 + $0x294] sm:%s583]
                  %763 = vst [vmem:[%s591 + $0x154] sm:%s583] %v762
                  %v764 = vld [vmem:[%s590 + $0x298] sm:%s583]
                  %765 = vst [vmem:[%s591 + $0x158] sm:%s583] %v764
                  %v766 = vld [vmem:[%s590 + $0x29c] sm:%s583]
                  %767 = vst [vmem:[%s591 + $0x15c] sm:%s583] %v766
                  %v768 = vld [vmem:[%s590 + $0x2a0] sm:%s583]
                  %769 = vst [vmem:[%s591 + $0x160] sm:%s583] %v768
                  %v770 = vld [vmem:[%s590 + $0x2a4] sm:%s583]
                  %771 = vst [vmem:[%s591 + $0x164] sm:%s583] %v770
                  %v772 = vld [vmem:[%s590 + $0x2a8] sm:%s583]
                  %773 = vst [vmem:[%s591 + $0x168] sm:%s583] %v772
                  %v774 = vld [vmem:[%s590 + $0x2ac] sm:%s583]
                  %775 = vst [vmem:[%s591 + $0x16c] sm:%s583] %v774
                  %v776 = vld [vmem:[%s590 + $0x2b0] sm:%s583]
                  %777 = vst [vmem:[%s591 + $0x170] sm:%s583] %v776
                  %v778 = vld [vmem:[%s590 + $0x2b4] sm:%s583]
                  %779 = vst [vmem:[%s591 + $0x174] sm:%s583] %v778
                  %v780 = vld [vmem:[%s590 + $0x2b8] sm:%s583]
                  %781 = vst [vmem:[%s591 + $0x178] sm:%s583] %v780
                  %v782 = vld [vmem:[%s590 + $0x2bc] sm:%s583]
                  %783 = vst [vmem:[%s591 + $0x17c] sm:%s583] %v782
                  %v784 = vld [vmem:[%s590 + $0x300] sm:%s583]
                  %785 = vst [vmem:[%s591 + $0x180] sm:%s583] %v784
                  %v786 = vld [vmem:[%s590 + $0x304] sm:%s583]
                  %787 = vst [vmem:[%s591 + $0x184] sm:%s583] %v786
                  %v788 = vld [vmem:[%s590 + $0x308] sm:%s583]
                  %789 = vst [vmem:[%s591 + $0x188] sm:%s583] %v788
                  %v790 = vld [vmem:[%s590 + $0x30c] sm:%s583]
                  %791 = vst [vmem:[%s591 + $0x18c] sm:%s583] %v790
                  %v792 = vld [vmem:[%s590 + $0x310] sm:%s583]
                  %793 = vst [vmem:[%s591 + $0x190] sm:%s583] %v792
                  %v794 = vld [vmem:[%s590 + $0x314] sm:%s583]
                  %795 = vst [vmem:[%s591 + $0x194] sm:%s583] %v794
                  %v796 = vld [vmem:[%s590 + $0x318] sm:%s583]
                  %797 = vst [vmem:[%s591 + $0x198] sm:%s583] %v796
                  %v798 = vld [vmem:[%s590 + $0x31c] sm:%s583]
                  %799 = vst [vmem:[%s591 + $0x19c] sm:%s583] %v798
                  %v800 = vld [vmem:[%s590 + $0x320] sm:%s583]
                  %801 = vst [vmem:[%s591 + $0x1a0] sm:%s583] %v800
                  %v802 = vld [vmem:[%s590 + $0x324] sm:%s583]
                  %803 = vst [vmem:[%s591 + $0x1a4] sm:%s583] %v802
                  %v804 = vld [vmem:[%s590 + $0x328] sm:%s583]
                  %805 = vst [vmem:[%s591 + $0x1a8] sm:%s583] %v804
                  %v806 = vld [vmem:[%s590 + $0x32c] sm:%s583]
                  %807 = vst [vmem:[%s591 + $0x1ac] sm:%s583] %v806
                  %v808 = vld [vmem:[%s590 + $0x330] sm:%s583]
                  %809 = vst [vmem:[%s591 + $0x1b0] sm:%s583] %v808
                  %v810 = vld [vmem:[%s590 + $0x334] sm:%s583]
                  %811 = vst [vmem:[%s591 + $0x1b4] sm:%s583] %v810
                  %v812 = vld [vmem:[%s590 + $0x338] sm:%s583]
                  %813 = vst [vmem:[%s591 + $0x1b8] sm:%s583] %v812
                  %v814 = vld [vmem:[%s590 + $0x33c] sm:%s583]
                  %815 = vst [vmem:[%s591 + $0x1bc] sm:%s583] %v814
                  %v816 = vld [vmem:[%s590 + $0x380] sm:%s583]
                  %817 = vst [vmem:[%s591 + $0x1c0] sm:%s583] %v816
                  %v818 = vld [vmem:[%s590 + $0x384] sm:%s583]
                  %819 = vst [vmem:[%s591 + $0x1c4] sm:%s583] %v818
                  %v820 = vld [vmem:[%s590 + $0x388] sm:%s583]
                  %821 = vst [vmem:[%s591 + $0x1c8] sm:%s583] %v820
                  %v822 = vld [vmem:[%s590 + $0x38c] sm:%s583]
                  %823 = vst [vmem:[%s591 + $0x1cc] sm:%s583] %v822
                  %v824 = vld [vmem:[%s590 + $0x390] sm:%s583]
                  %825 = vst [vmem:[%s591 + $0x1d0] sm:%s583] %v824
                  %v826 = vld [vmem:[%s590 + $0x394] sm:%s583]
                  %827 = vst [vmem:[%s591 + $0x1d4] sm:%s583] %v826
                  %v828 = vld [vmem:[%s590 + $0x398] sm:%s583]
                  %829 = vst [vmem:[%s591 + $0x1d8] sm:%s583] %v828
                  %v830 = vld [vmem:[%s590 + $0x39c] sm:%s583]
                  %831 = vst [vmem:[%s591 + $0x1dc] sm:%s583] %v830
                  %v832 = vld [vmem:[%s590 + $0x3a0] sm:%s583]
                  %833 = vst [vmem:[%s591 + $0x1e0] sm:%s583] %v832
                  %v834 = vld [vmem:[%s590 + $0x3a4] sm:%s583]
                  %835 = vst [vmem:[%s591 + $0x1e4] sm:%s583] %v834
                  %v836 = vld [vmem:[%s590 + $0x3a8] sm:%s583]
                  %837 = vst [vmem:[%s591 + $0x1e8] sm:%s583] %v836
                  %v838 = vld [vmem:[%s590 + $0x3ac] sm:%s583]
                  %839 = vst [vmem:[%s591 + $0x1ec] sm:%s583] %v838
                  %v840 = vld [vmem:[%s590 + $0x3b0] sm:%s583]
                  %841 = vst [vmem:[%s591 + $0x1f0] sm:%s583] %v840
                  %v842 = vld [vmem:[%s590 + $0x3b4] sm:%s583]
                  %843 = vst [vmem:[%s591 + $0x1f4] sm:%s583] %v842
                  %v844 = vld [vmem:[%s590 + $0x3b8] sm:%s583]
                  %845 = vst [vmem:[%s591 + $0x1f8] sm:%s583] %v844
                  %v846 = vld [vmem:[%s590 + $0x3bc] sm:%s583]
                  %847 = vst [vmem:[%s591 + $0x1fc] sm:%s583] %v846
                $region63: #{tpu_custom_call.1} parent=50 // loop_footer
                  %s589 = sadd.s32 1, %s585
                $region64: #{tpu_custom_call.1} parent=50 // loop_footer_branch
                  %584 = sbr.rel target = $region60
                $region65: #{tpu_custom_call.1} parent=50 // loop_exit
                  _
              $region51: #{tpu_custom_call.1} parent=35 // pred_fallthru
                _
            $region36: #{tpu_custom_call.1} parent=31 // pred_fallthru
              _
            // Predicated region
            $region37: #{tpu_custom_call.1} parent=31 // pred_check
              _
            $region38: #{tpu_custom_call.1} parent=31 // pred_check_branch
              %305 = sbr.rel (0) target = $region40
            $region39: #{tpu_custom_call.1} parent=31 // pred_region
              %s307 = ssub.s32 16, 1
              loop: start=0, step=1, limit=1
              $region41: #{tpu_custom_call.1} parent=39 // loop_pre_header
                _
              $region42: #{tpu_custom_call.1} parent=39 // loop_header
                %s309 = sphi 0, %s313
                %p310 = scmp.ge.s32.totalorder %s309, 1
                %s314 = sphi %s299, %s299
                %s315 = sphi %s293, %s293
              $region43: #{tpu_custom_call.1} parent=39 // loop_header_branch
                %312 = sbr.rel (%p310) target = $region47
              $region44: #{tpu_custom_call.1} parent=39 // loop_body
                %v316 = vld [vmem:[%s314] sm:%s307]
                %317 = vst [vmem:[%s315] sm:%s307] %v316
                %v318 = vld [vmem:[%s314 + $0x4] sm:%s307]
                %319 = vst [vmem:[%s315 + $0x4] sm:%s307] %v318
                %v320 = vld [vmem:[%s314 + $0x8] sm:%s307]
                %321 = vst [vmem:[%s315 + $0x8] sm:%s307] %v320
                %v322 = vld [vmem:[%s314 + $0xc] sm:%s307]
                %323 = vst [vmem:[%s315 + $0xc] sm:%s307] %v322
                %v324 = vld [vmem:[%s314 + $0x10] sm:%s307]
                %325 = vst [vmem:[%s315 + $0x10] sm:%s307] %v324
                %v326 = vld [vmem:[%s314 + $0x14] sm:%s307]
                %327 = vst [vmem:[%s315 + $0x14] sm:%s307] %v326
                %v328 = vld [vmem:[%s314 + $0x18] sm:%s307]
                %329 = vst [vmem:[%s315 + $0x18] sm:%s307] %v328
                %v330 = vld [vmem:[%s314 + $0x1c] sm:%s307]
                %331 = vst [vmem:[%s315 + $0x1c] sm:%s307] %v330
                %v332 = vld [vmem:[%s314 + $0x20] sm:%s307]
                %333 = vst [vmem:[%s315 + $0x20] sm:%s307] %v332
                %v334 = vld [vmem:[%s314 + $0x24] sm:%s307]
                %335 = vst [vmem:[%s315 + $0x24] sm:%s307] %v334
                %v336 = vld [vmem:[%s314 + $0x28] sm:%s307]
                %337 = vst [vmem:[%s315 + $0x28] sm:%s307] %v336
                %v338 = vld [vmem:[%s314 + $0x2c] sm:%s307]
                %339 = vst [vmem:[%s315 + $0x2c] sm:%s307] %v338
                %v340 = vld [vmem:[%s314 + $0x30] sm:%s307]
                %341 = vst [vmem:[%s315 + $0x30] sm:%s307] %v340
                %v342 = vld [vmem:[%s314 + $0x34] sm:%s307]
                %343 = vst [vmem:[%s315 + $0x34] sm:%s307] %v342
                %v344 = vld [vmem:[%s314 + $0x38] sm:%s307]
                %345 = vst [vmem:[%s315 + $0x38] sm:%s307] %v344
                %v346 = vld [vmem:[%s314 + $0x3c] sm:%s307]
                %347 = vst [vmem:[%s315 + $0x3c] sm:%s307] %v346
                %v348 = vld [vmem:[%s314 + $0x80] sm:%s307]
                %349 = vst [vmem:[%s315 + $0x40] sm:%s307] %v348
                %v350 = vld [vmem:[%s314 + $0x84] sm:%s307]
                %351 = vst [vmem:[%s315 + $0x44] sm:%s307] %v350
                %v352 = vld [vmem:[%s314 + $0x88] sm:%s307]
                %353 = vst [vmem:[%s315 + $0x48] sm:%s307] %v352
                %v354 = vld [vmem:[%s314 + $0x8c] sm:%s307]
                %355 = vst [vmem:[%s315 + $0x4c] sm:%s307] %v354
                %v356 = vld [vmem:[%s314 + $0x90] sm:%s307]
                %357 = vst [vmem:[%s315 + $0x50] sm:%s307] %v356
                %v358 = vld [vmem:[%s314 + $0x94] sm:%s307]
                %359 = vst [vmem:[%s315 + $0x54] sm:%s307] %v358
                %v360 = vld [vmem:[%s314 + $0x98] sm:%s307]
                %361 = vst [vmem:[%s315 + $0x58] sm:%s307] %v360
                %v362 = vld [vmem:[%s314 + $0x9c] sm:%s307]
                %363 = vst [vmem:[%s315 + $0x5c] sm:%s307] %v362
                %v364 = vld [vmem:[%s314 + $0xa0] sm:%s307]
                %365 = vst [vmem:[%s315 + $0x60] sm:%s307] %v364
                %v366 = vld [vmem:[%s314 + $0xa4] sm:%s307]
                %367 = vst [vmem:[%s315 + $0x64] sm:%s307] %v366
                %v368 = vld [vmem:[%s314 + $0xa8] sm:%s307]
                %369 = vst [vmem:[%s315 + $0x68] sm:%s307] %v368
                %v370 = vld [vmem:[%s314 + $0xac] sm:%s307]
                %371 = vst [vmem:[%s315 + $0x6c] sm:%s307] %v370
                %v372 = vld [vmem:[%s314 + $0xb0] sm:%s307]
                %373 = vst [vmem:[%s315 + $0x70] sm:%s307] %v372
                %v374 = vld [vmem:[%s314 + $0xb4] sm:%s307]
                %375 = vst [vmem:[%s315 + $0x74] sm:%s307] %v374
                %v376 = vld [vmem:[%s314 + $0xb8] sm:%s307]
                %377 = vst [vmem:[%s315 + $0x78] sm:%s307] %v376
                %v378 = vld [vmem:[%s314 + $0xbc] sm:%s307]
                %379 = vst [vmem:[%s315 + $0x7c] sm:%s307] %v378
                %v380 = vld [vmem:[%s314 + $0x100] sm:%s307]
                %381 = vst [vmem:[%s315 + $0x80] sm:%s307] %v380
                %v382 = vld [vmem:[%s314 + $0x104] sm:%s307]
                %383 = vst [vmem:[%s315 + $0x84] sm:%s307] %v382
                %v384 = vld [vmem:[%s314 + $0x108] sm:%s307]
                %385 = vst [vmem:[%s315 + $0x88] sm:%s307] %v384
                %v386 = vld [vmem:[%s314 + $0x10c] sm:%s307]
                %387 = vst [vmem:[%s315 + $0x8c] sm:%s307] %v386
                %v388 = vld [vmem:[%s314 + $0x110] sm:%s307]
                %389 = vst [vmem:[%s315 + $0x90] sm:%s307] %v388
                %v390 = vld [vmem:[%s314 + $0x114] sm:%s307]
                %391 = vst [vmem:[%s315 + $0x94] sm:%s307] %v390
                %v392 = vld [vmem:[%s314 + $0x118] sm:%s307]
                %393 = vst [vmem:[%s315 + $0x98] sm:%s307] %v392
                %v394 = vld [vmem:[%s314 + $0x11c] sm:%s307]
                %395 = vst [vmem:[%s315 + $0x9c] sm:%s307] %v394
                %v396 = vld [vmem:[%s314 + $0x120] sm:%s307]
                %397 = vst [vmem:[%s315 + $0xa0] sm:%s307] %v396
                %v398 = vld [vmem:[%s314 + $0x124] sm:%s307]
                %399 = vst [vmem:[%s315 + $0xa4] sm:%s307] %v398
                %v400 = vld [vmem:[%s314 + $0x128] sm:%s307]
                %401 = vst [vmem:[%s315 + $0xa8] sm:%s307] %v400
                %v402 = vld [vmem:[%s314 + $0x12c] sm:%s307]
                %403 = vst [vmem:[%s315 + $0xac] sm:%s307] %v402
                %v404 = vld [vmem:[%s314 + $0x130] sm:%s307]
                %405 = vst [vmem:[%s315 + $0xb0] sm:%s307] %v404
                %v406 = vld [vmem:[%s314 + $0x134] sm:%s307]
                %407 = vst [vmem:[%s315 + $0xb4] sm:%s307] %v406
                %v408 = vld [vmem:[%s314 + $0x138] sm:%s307]
                %409 = vst [vmem:[%s315 + $0xb8] sm:%s307] %v408
                %v410 = vld [vmem:[%s314 + $0x13c] sm:%s307]
                %411 = vst [vmem:[%s315 + $0xbc] sm:%s307] %v410
                %v412 = vld [vmem:[%s314 + $0x180] sm:%s307]
                %413 = vst [vmem:[%s315 + $0xc0] sm:%s307] %v412
                %v414 = vld [vmem:[%s314 + $0x184] sm:%s307]
                %415 = vst [vmem:[%s315 + $0xc4] sm:%s307] %v414
                %v416 = vld [vmem:[%s314 + $0x188] sm:%s307]
                %417 = vst [vmem:[%s315 + $0xc8] sm:%s307] %v416
                %v418 = vld [vmem:[%s314 + $0x18c] sm:%s307]
                %419 = vst [vmem:[%s315 + $0xcc] sm:%s307] %v418
                %v420 = vld [vmem:[%s314 + $0x190] sm:%s307]
                %421 = vst [vmem:[%s315 + $0xd0] sm:%s307] %v420
                %v422 = vld [vmem:[%s314 + $0x194] sm:%s307]
                %423 = vst [vmem:[%s315 + $0xd4] sm:%s307] %v422
                %v424 = vld [vmem:[%s314 + $0x198] sm:%s307]
                %425 = vst [vmem:[%s315 + $0xd8] sm:%s307] %v424
                %v426 = vld [vmem:[%s314 + $0x19c] sm:%s307]
                %427 = vst [vmem:[%s315 + $0xdc] sm:%s307] %v426
                %v428 = vld [vmem:[%s314 + $0x1a0] sm:%s307]
                %429 = vst [vmem:[%s315 + $0xe0] sm:%s307] %v428
                %v430 = vld [vmem:[%s314 + $0x1a4] sm:%s307]
                %431 = vst [vmem:[%s315 + $0xe4] sm:%s307] %v430
                %v432 = vld [vmem:[%s314 + $0x1a8] sm:%s307]
                %433 = vst [vmem:[%s315 + $0xe8] sm:%s307] %v432
                %v434 = vld [vmem:[%s314 + $0x1ac] sm:%s307]
                %435 = vst [vmem:[%s315 + $0xec] sm:%s307] %v434
                %v436 = vld [vmem:[%s314 + $0x1b0] sm:%s307]
                %437 = vst [vmem:[%s315 + $0xf0] sm:%s307] %v436
                %v438 = vld [vmem:[%s314 + $0x1b4] sm:%s307]
                %439 = vst [vmem:[%s315 + $0xf4] sm:%s307] %v438
                %v440 = vld [vmem:[%s314 + $0x1b8] sm:%s307]
                %441 = vst [vmem:[%s315 + $0xf8] sm:%s307] %v440
                %v442 = vld [vmem:[%s314 + $0x1bc] sm:%s307]
                %443 = vst [vmem:[%s315 + $0xfc] sm:%s307] %v442
                %v444 = vld [vmem:[%s314 + $0x200] sm:%s307]
                %445 = vst [vmem:[%s315 + $0x100] sm:%s307] %v444
                %v446 = vld [vmem:[%s314 + $0x204] sm:%s307]
                %447 = vst [vmem:[%s315 + $0x104] sm:%s307] %v446
                %v448 = vld [vmem:[%s314 + $0x208] sm:%s307]
                %449 = vst [vmem:[%s315 + $0x108] sm:%s307] %v448
                %v450 = vld [vmem:[%s314 + $0x20c] sm:%s307]
                %451 = vst [vmem:[%s315 + $0x10c] sm:%s307] %v450
                %v452 = vld [vmem:[%s314 + $0x210] sm:%s307]
                %453 = vst [vmem:[%s315 + $0x110] sm:%s307] %v452
                %v454 = vld [vmem:[%s314 + $0x214] sm:%s307]
                %455 = vst [vmem:[%s315 + $0x114] sm:%s307] %v454
                %v456 = vld [vmem:[%s314 + $0x218] sm:%s307]
                %457 = vst [vmem:[%s315 + $0x118] sm:%s307] %v456
                %v458 = vld [vmem:[%s314 + $0x21c] sm:%s307]
                %459 = vst [vmem:[%s315 + $0x11c] sm:%s307] %v458
                %v460 = vld [vmem:[%s314 + $0x220] sm:%s307]
                %461 = vst [vmem:[%s315 + $0x120] sm:%s307] %v460
                %v462 = vld [vmem:[%s314 + $0x224] sm:%s307]
                %463 = vst [vmem:[%s315 + $0x124] sm:%s307] %v462
                %v464 = vld [vmem:[%s314 + $0x228] sm:%s307]
                %465 = vst [vmem:[%s315 + $0x128] sm:%s307] %v464
                %v466 = vld [vmem:[%s314 + $0x22c] sm:%s307]
                %467 = vst [vmem:[%s315 + $0x12c] sm:%s307] %v466
                %v468 = vld [vmem:[%s314 + $0x230] sm:%s307]
                %469 = vst [vmem:[%s315 + $0x130] sm:%s307] %v468
                %v470 = vld [vmem:[%s314 + $0x234] sm:%s307]
                %471 = vst [vmem:[%s315 + $0x134] sm:%s307] %v470
                %v472 = vld [vmem:[%s314 + $0x238] sm:%s307]
                %473 = vst [vmem:[%s315 + $0x138] sm:%s307] %v472
                %v474 = vld [vmem:[%s314 + $0x23c] sm:%s307]
                %475 = vst [vmem:[%s315 + $0x13c] sm:%s307] %v474
                %v476 = vld [vmem:[%s314 + $0x280] sm:%s307]
                %477 = vst [vmem:[%s315 + $0x140] sm:%s307] %v476
                %v478 = vld [vmem:[%s314 + $0x284] sm:%s307]
                %479 = vst [vmem:[%s315 + $0x144] sm:%s307] %v478
                %v480 = vld [vmem:[%s314 + $0x288] sm:%s307]
                %481 = vst [vmem:[%s315 + $0x148] sm:%s307] %v480
                %v482 = vld [vmem:[%s314 + $0x28c] sm:%s307]
                %483 = vst [vmem:[%s315 + $0x14c] sm:%s307] %v482
                %v484 = vld [vmem:[%s314 + $0x290] sm:%s307]
                %485 = vst [vmem:[%s315 + $0x150] sm:%s307] %v484
                %v486 = vld [vmem:[%s314 + $0x294] sm:%s307]
                %487 = vst [vmem:[%s315 + $0x154] sm:%s307] %v486
                %v488 = vld [vmem:[%s314 + $0x298] sm:%s307]
                %489 = vst [vmem:[%s315 + $0x158] sm:%s307] %v488
                %v490 = vld [vmem:[%s314 + $0x29c] sm:%s307]
                %491 = vst [vmem:[%s315 + $0x15c] sm:%s307] %v490
                %v492 = vld [vmem:[%s314 + $0x2a0] sm:%s307]
                %493 = vst [vmem:[%s315 + $0x160] sm:%s307] %v492
                %v494 = vld [vmem:[%s314 + $0x2a4] sm:%s307]
                %495 = vst [vmem:[%s315 + $0x164] sm:%s307] %v494
                %v496 = vld [vmem:[%s314 + $0x2a8] sm:%s307]
                %497 = vst [vmem:[%s315 + $0x168] sm:%s307] %v496
                %v498 = vld [vmem:[%s314 + $0x2ac] sm:%s307]
                %499 = vst [vmem:[%s315 + $0x16c] sm:%s307] %v498
                %v500 = vld [vmem:[%s314 + $0x2b0] sm:%s307]
                %501 = vst [vmem:[%s315 + $0x170] sm:%s307] %v500
                %v502 = vld [vmem:[%s314 + $0x2b4] sm:%s307]
                %503 = vst [vmem:[%s315 + $0x174] sm:%s307] %v502
                %v504 = vld [vmem:[%s314 + $0x2b8] sm:%s307]
                %505 = vst [vmem:[%s315 + $0x178] sm:%s307] %v504
                %v506 = vld [vmem:[%s314 + $0x2bc] sm:%s307]
                %507 = vst [vmem:[%s315 + $0x17c] sm:%s307] %v506
                %v508 = vld [vmem:[%s314 + $0x300] sm:%s307]
                %509 = vst [vmem:[%s315 + $0x180] sm:%s307] %v508
                %v510 = vld [vmem:[%s314 + $0x304] sm:%s307]
                %511 = vst [vmem:[%s315 + $0x184] sm:%s307] %v510
                %v512 = vld [vmem:[%s314 + $0x308] sm:%s307]
                %513 = vst [vmem:[%s315 + $0x188] sm:%s307] %v512
                %v514 = vld [vmem:[%s314 + $0x30c] sm:%s307]
                %515 = vst [vmem:[%s315 + $0x18c] sm:%s307] %v514
                %v516 = vld [vmem:[%s314 + $0x310] sm:%s307]
                %517 = vst [vmem:[%s315 + $0x190] sm:%s307] %v516
                %v518 = vld [vmem:[%s314 + $0x314] sm:%s307]
                %519 = vst [vmem:[%s315 + $0x194] sm:%s307] %v518
                %v520 = vld [vmem:[%s314 + $0x318] sm:%s307]
                %521 = vst [vmem:[%s315 + $0x198] sm:%s307] %v520
                %v522 = vld [vmem:[%s314 + $0x31c] sm:%s307]
                %523 = vst [vmem:[%s315 + $0x19c] sm:%s307] %v522
                %v524 = vld [vmem:[%s314 + $0x320] sm:%s307]
                %525 = vst [vmem:[%s315 + $0x1a0] sm:%s307] %v524
                %v526 = vld [vmem:[%s314 + $0x324] sm:%s307]
                %527 = vst [vmem:[%s315 + $0x1a4] sm:%s307] %v526
                %v528 = vld [vmem:[%s314 + $0x328] sm:%s307]
                %529 = vst [vmem:[%s315 + $0x1a8] sm:%s307] %v528
                %v530 = vld [vmem:[%s314 + $0x32c] sm:%s307]
                %531 = vst [vmem:[%s315 + $0x1ac] sm:%s307] %v530
                %v532 = vld [vmem:[%s314 + $0x330] sm:%s307]
                %533 = vst [vmem:[%s315 + $0x1b0] sm:%s307] %v532
                %v534 = vld [vmem:[%s314 + $0x334] sm:%s307]
                %535 = vst [vmem:[%s315 + $0x1b4] sm:%s307] %v534
                %v536 = vld [vmem:[%s314 + $0x338] sm:%s307]
                %537 = vst [vmem:[%s315 + $0x1b8] sm:%s307] %v536
                %v538 = vld [vmem:[%s314 + $0x33c] sm:%s307]
                %539 = vst [vmem:[%s315 + $0x1bc] sm:%s307] %v538
                %v540 = vld [vmem:[%s314 + $0x380] sm:%s307]
                %541 = vst [vmem:[%s315 + $0x1c0] sm:%s307] %v540
                %v542 = vld [vmem:[%s314 + $0x384] sm:%s307]
                %543 = vst [vmem:[%s315 + $0x1c4] sm:%s307] %v542
                %v544 = vld [vmem:[%s314 + $0x388] sm:%s307]
                %545 = vst [vmem:[%s315 + $0x1c8] sm:%s307] %v544
                %v546 = vld [vmem:[%s314 + $0x38c] sm:%s307]
                %547 = vst [vmem:[%s315 + $0x1cc] sm:%s307] %v546
                %v548 = vld [vmem:[%s314 + $0x390] sm:%s307]
                %549 = vst [vmem:[%s315 + $0x1d0] sm:%s307] %v548
                %v550 = vld [vmem:[%s314 + $0x394] sm:%s307]
                %551 = vst [vmem:[%s315 + $0x1d4] sm:%s307] %v550
                %v552 = vld [vmem:[%s314 + $0x398] sm:%s307]
                %553 = vst [vmem:[%s315 + $0x1d8] sm:%s307] %v552
                %v554 = vld [vmem:[%s314 + $0x39c] sm:%s307]
                %555 = vst [vmem:[%s315 + $0x1dc] sm:%s307] %v554
                %v556 = vld [vmem:[%s314 + $0x3a0] sm:%s307]
                %557 = vst [vmem:[%s315 + $0x1e0] sm:%s307] %v556
                %v558 = vld [vmem:[%s314 + $0x3a4] sm:%s307]
                %559 = vst [vmem:[%s315 + $0x1e4] sm:%s307] %v558
                %v560 = vld [vmem:[%s314 + $0x3a8] sm:%s307]
                %561 = vst [vmem:[%s315 + $0x1e8] sm:%s307] %v560
                %v562 = vld [vmem:[%s314 + $0x3ac] sm:%s307]
                %563 = vst [vmem:[%s315 + $0x1ec] sm:%s307] %v562
                %v564 = vld [vmem:[%s314 + $0x3b0] sm:%s307]
                %565 = vst [vmem:[%s315 + $0x1f0] sm:%s307] %v564
                %v566 = vld [vmem:[%s314 + $0x3b4] sm:%s307]
                %567 = vst [vmem:[%s315 + $0x1f4] sm:%s307] %v566
                %v568 = vld [vmem:[%s314 + $0x3b8] sm:%s307]
                %569 = vst [vmem:[%s315 + $0x1f8] sm:%s307] %v568
                %v570 = vld [vmem:[%s314 + $0x3bc] sm:%s307]
                %571 = vst [vmem:[%s315 + $0x1fc] sm:%s307] %v570
              $region45: #{tpu_custom_call.1} parent=39 // loop_footer
                %s313 = sadd.s32 1, %s309
              $region46: #{tpu_custom_call.1} parent=39 // loop_footer_branch
                %308 = sbr.rel target = $region42
              $region47: #{tpu_custom_call.1} parent=39 // loop_exit
                _
            $region40: #{tpu_custom_call.1} parent=31 // pred_fallthru
              _
          $region32: #{tpu_custom_call.1} parent=27 // pred_fallthru
            _
          %848 = vnop
        $region28: #{tpu_custom_call.1} parent=23 // pred_fallthru
          _
        // Predicated region
        $region66: #{tpu_custom_call.1} parent=23 // pred_check
          %p849 = pneg %p80
        $region67: #{tpu_custom_call.1} parent=23 // pred_check_branch
          %851 = sbr.rel (%p849) target = $region69
        $region68: #{tpu_custom_call.1} parent=23 // pred_region
          %p852 = scmp.lt.s32.totalorder %s25, 1
          %s853 = scalar_select %p852, %s25, 1
          %p854 = scmp.lt.s32.totalorder %s26, 1
          %s855 = scalar_select %p854, %s26, 1
          %s856 = smul.addr %s853, 2
          %s857 = sadd.s32 %s855, %s856
          %s858 = smul.addr %s857, 8
          %s859 = scalar_lea.vmem %s1, %s858
        $region69: #{tpu_custom_call.1} parent=23 // pred_fallthru
          _
        // Predicated region
        $region70: #{tpu_custom_call.1} parent=23 // pred_check
          %p860 = pneg %p108
        $region71: #{tpu_custom_call.1} parent=23 // pred_check_branch
          %862 = sbr.rel (%p860) target = $region73
        $region72: #{tpu_custom_call.1} parent=23 // pred_region
          %s863 = sand.u32 %s98, 1
          %s864 = sand.u32 %s98, 1
          %s865 = smul.addr %s864, 512
          %s866 = scalar_lea.vmem [#allocation7], %s865
          %s867 = smul.u32 8, %s25
          %s868 = smul.u32 16, %s26
          %s869 = smul.addr %s867, 32
          %s870 = sadd.s32 %s868, %s869
          %s871 = smul.addr %s870, 4
          %s872 = scalar_lea.vmem %s2, %s871
          // Predicated region
          $region74: #{tpu_custom_call.1} parent=72 // pred_check
            _
          $region75: #{tpu_custom_call.1} parent=72 // pred_check_branch
            %874 = sbr.rel (0) target = $region77
          $region76: #{tpu_custom_call.1} parent=72 // pred_region
            // Predicated region
            $region78: #{tpu_custom_call.1} parent=76 // pred_check
              _
            $region79: #{tpu_custom_call.1} parent=76 // pred_check_branch
              %876 = sbr.rel target = $region81
            $region80: #{tpu_custom_call.1} parent=76 // pred_region
              // Predicated region
              $region93: #{tpu_custom_call.1} parent=80 // pred_check
                _
              $region94: #{tpu_custom_call.1} parent=80 // pred_check_branch
                %1146 = sbr.rel (0) target = $region96
              $region95: #{tpu_custom_call.1} parent=80 // pred_region
                loop: start=0, step=1, limit=1
                $region97: #{tpu_custom_call.1} parent=95 // loop_pre_header
                  _
                $region98: #{tpu_custom_call.1} parent=95 // loop_header
                  %s1148 = sphi 0, %s1152
                  %p1149 = scmp.ge.s32.totalorder %s1148, 1
                  %s1153 = sphi %s872, %s872
                  %s1154 = sphi %s866, %s866
                $region99: #{tpu_custom_call.1} parent=95 // loop_header_branch
                  %1151 = sbr.rel (%p1149) target = $region103
                $region100: #{tpu_custom_call.1} parent=95 // loop_body
                  _
                $region101: #{tpu_custom_call.1} parent=95 // loop_footer
                  %s1152 = sadd.s32 1, %s1148
                $region102: #{tpu_custom_call.1} parent=95 // loop_footer_branch
                  %1147 = sbr.rel target = $region98
                $region103: #{tpu_custom_call.1} parent=95 // loop_exit
                  _
                %s1156 = ssub.s32 16, 1
                loop: start=0, step=1, limit=1
                $region104: #{tpu_custom_call.1} parent=95 // loop_pre_header
                  _
                $region105: #{tpu_custom_call.1} parent=95 // loop_header
                  %s1158 = sphi 0, %s1162
                  %p1159 = scmp.ge.s32.totalorder %s1158, 1
                  %s1163 = sphi %s872, %s872
                  %s1164 = sphi %s866, %s866
                $region106: #{tpu_custom_call.1} parent=95 // loop_header_branch
                  %1161 = sbr.rel (%p1159) target = $region110
                $region107: #{tpu_custom_call.1} parent=95 // loop_body
                  %v1165 = vld [vmem:[%s1163] sm:%s1156]
                  %1166 = vst [vmem:[%s1164] sm:%s1156] %v1165
                  %v1167 = vld [vmem:[%s1163 + $0x4] sm:%s1156]
                  %1168 = vst [vmem:[%s1164 + $0x4] sm:%s1156] %v1167
                  %v1169 = vld [vmem:[%s1163 + $0x8] sm:%s1156]
                  %1170 = vst [vmem:[%s1164 + $0x8] sm:%s1156] %v1169
                  %v1171 = vld [vmem:[%s1163 + $0xc] sm:%s1156]
                  %1172 = vst [vmem:[%s1164 + $0xc] sm:%s1156] %v1171
                  %v1173 = vld [vmem:[%s1163 + $0x10] sm:%s1156]
                  %1174 = vst [vmem:[%s1164 + $0x10] sm:%s1156] %v1173
                  %v1175 = vld [vmem:[%s1163 + $0x14] sm:%s1156]
                  %1176 = vst [vmem:[%s1164 + $0x14] sm:%s1156] %v1175
                  %v1177 = vld [vmem:[%s1163 + $0x18] sm:%s1156]
                  %1178 = vst [vmem:[%s1164 + $0x18] sm:%s1156] %v1177
                  %v1179 = vld [vmem:[%s1163 + $0x1c] sm:%s1156]
                  %1180 = vst [vmem:[%s1164 + $0x1c] sm:%s1156] %v1179
                  %v1181 = vld [vmem:[%s1163 + $0x20] sm:%s1156]
                  %1182 = vst [vmem:[%s1164 + $0x20] sm:%s1156] %v1181
                  %v1183 = vld [vmem:[%s1163 + $0x24] sm:%s1156]
                  %1184 = vst [vmem:[%s1164 + $0x24] sm:%s1156] %v1183
                  %v1185 = vld [vmem:[%s1163 + $0x28] sm:%s1156]
                  %1186 = vst [vmem:[%s1164 + $0x28] sm:%s1156] %v1185
                  %v1187 = vld [vmem:[%s1163 + $0x2c] sm:%s1156]
                  %1188 = vst [vmem:[%s1164 + $0x2c] sm:%s1156] %v1187
                  %v1189 = vld [vmem:[%s1163 + $0x30] sm:%s1156]
                  %1190 = vst [vmem:[%s1164 + $0x30] sm:%s1156] %v1189
                  %v1191 = vld [vmem:[%s1163 + $0x34] sm:%s1156]
                  %1192 = vst [vmem:[%s1164 + $0x34] sm:%s1156] %v1191
                  %v1193 = vld [vmem:[%s1163 + $0x38] sm:%s1156]
                  %1194 = vst [vmem:[%s1164 + $0x38] sm:%s1156] %v1193
                  %v1195 = vld [vmem:[%s1163 + $0x3c] sm:%s1156]
                  %1196 = vst [vmem:[%s1164 + $0x3c] sm:%s1156] %v1195
                  %v1197 = vld [vmem:[%s1163 + $0x80] sm:%s1156]
                  %1198 = vst [vmem:[%s1164 + $0x40] sm:%s1156] %v1197
                  %v1199 = vld [vmem:[%s1163 + $0x84] sm:%s1156]
                  %1200 = vst [vmem:[%s1164 + $0x44] sm:%s1156] %v1199
                  %v1201 = vld [vmem:[%s1163 + $0x88] sm:%s1156]
                  %1202 = vst [vmem:[%s1164 + $0x48] sm:%s1156] %v1201
                  %v1203 = vld [vmem:[%s1163 + $0x8c] sm:%s1156]
                  %1204 = vst [vmem:[%s1164 + $0x4c] sm:%s1156] %v1203
                  %v1205 = vld [vmem:[%s1163 + $0x90] sm:%s1156]
                  %1206 = vst [vmem:[%s1164 + $0x50] sm:%s1156] %v1205
                  %v1207 = vld [vmem:[%s1163 + $0x94] sm:%s1156]
                  %1208 = vst [vmem:[%s1164 + $0x54] sm:%s1156] %v1207
                  %v1209 = vld [vmem:[%s1163 + $0x98] sm:%s1156]
                  %1210 = vst [vmem:[%s1164 + $0x58] sm:%s1156] %v1209
                  %v1211 = vld [vmem:[%s1163 + $0x9c] sm:%s1156]
                  %1212 = vst [vmem:[%s1164 + $0x5c] sm:%s1156] %v1211
                  %v1213 = vld [vmem:[%s1163 + $0xa0] sm:%s1156]
                  %1214 = vst [vmem:[%s1164 + $0x60] sm:%s1156] %v1213
                  %v1215 = vld [vmem:[%s1163 + $0xa4] sm:%s1156]
                  %1216 = vst [vmem:[%s1164 + $0x64] sm:%s1156] %v1215
                  %v1217 = vld [vmem:[%s1163 + $0xa8] sm:%s1156]
                  %1218 = vst [vmem:[%s1164 + $0x68] sm:%s1156] %v1217
                  %v1219 = vld [vmem:[%s1163 + $0xac] sm:%s1156]
                  %1220 = vst [vmem:[%s1164 + $0x6c] sm:%s1156] %v1219
                  %v1221 = vld [vmem:[%s1163 + $0xb0] sm:%s1156]
                  %1222 = vst [vmem:[%s1164 + $0x70] sm:%s1156] %v1221
                  %v1223 = vld [vmem:[%s1163 + $0xb4] sm:%s1156]
                  %1224 = vst [vmem:[%s1164 + $0x74] sm:%s1156] %v1223
                  %v1225 = vld [vmem:[%s1163 + $0xb8] sm:%s1156]
                  %1226 = vst [vmem:[%s1164 + $0x78] sm:%s1156] %v1225
                  %v1227 = vld [vmem:[%s1163 + $0xbc] sm:%s1156]
                  %1228 = vst [vmem:[%s1164 + $0x7c] sm:%s1156] %v1227
                  %v1229 = vld [vmem:[%s1163 + $0x100] sm:%s1156]
                  %1230 = vst [vmem:[%s1164 + $0x80] sm:%s1156] %v1229
                  %v1231 = vld [vmem:[%s1163 + $0x104] sm:%s1156]
                  %1232 = vst [vmem:[%s1164 + $0x84] sm:%s1156] %v1231
                  %v1233 = vld [vmem:[%s1163 + $0x108] sm:%s1156]
                  %1234 = vst [vmem:[%s1164 + $0x88] sm:%s1156] %v1233
                  %v1235 = vld [vmem:[%s1163 + $0x10c] sm:%s1156]
                  %1236 = vst [vmem:[%s1164 + $0x8c] sm:%s1156] %v1235
                  %v1237 = vld [vmem:[%s1163 + $0x110] sm:%s1156]
                  %1238 = vst [vmem:[%s1164 + $0x90] sm:%s1156] %v1237
                  %v1239 = vld [vmem:[%s1163 + $0x114] sm:%s1156]
                  %1240 = vst [vmem:[%s1164 + $0x94] sm:%s1156] %v1239
                  %v1241 = vld [vmem:[%s1163 + $0x118] sm:%s1156]
                  %1242 = vst [vmem:[%s1164 + $0x98] sm:%s1156] %v1241
                  %v1243 = vld [vmem:[%s1163 + $0x11c] sm:%s1156]
                  %1244 = vst [vmem:[%s1164 + $0x9c] sm:%s1156] %v1243
                  %v1245 = vld [vmem:[%s1163 + $0x120] sm:%s1156]
                  %1246 = vst [vmem:[%s1164 + $0xa0] sm:%s1156] %v1245
                  %v1247 = vld [vmem:[%s1163 + $0x124] sm:%s1156]
                  %1248 = vst [vmem:[%s1164 + $0xa4] sm:%s1156] %v1247
                  %v1249 = vld [vmem:[%s1163 + $0x128] sm:%s1156]
                  %1250 = vst [vmem:[%s1164 + $0xa8] sm:%s1156] %v1249
                  %v1251 = vld [vmem:[%s1163 + $0x12c] sm:%s1156]
                  %1252 = vst [vmem:[%s1164 + $0xac] sm:%s1156] %v1251
                  %v1253 = vld [vmem:[%s1163 + $0x130] sm:%s1156]
                  %1254 = vst [vmem:[%s1164 + $0xb0] sm:%s1156] %v1253
                  %v1255 = vld [vmem:[%s1163 + $0x134] sm:%s1156]
                  %1256 = vst [vmem:[%s1164 + $0xb4] sm:%s1156] %v1255
                  %v1257 = vld [vmem:[%s1163 + $0x138] sm:%s1156]
                  %1258 = vst [vmem:[%s1164 + $0xb8] sm:%s1156] %v1257
                  %v1259 = vld [vmem:[%s1163 + $0x13c] sm:%s1156]
                  %1260 = vst [vmem:[%s1164 + $0xbc] sm:%s1156] %v1259
                  %v1261 = vld [vmem:[%s1163 + $0x180] sm:%s1156]
                  %1262 = vst [vmem:[%s1164 + $0xc0] sm:%s1156] %v1261
                  %v1263 = vld [vmem:[%s1163 + $0x184] sm:%s1156]
                  %1264 = vst [vmem:[%s1164 + $0xc4] sm:%s1156] %v1263
                  %v1265 = vld [vmem:[%s1163 + $0x188] sm:%s1156]
                  %1266 = vst [vmem:[%s1164 + $0xc8] sm:%s1156] %v1265
                  %v1267 = vld [vmem:[%s1163 + $0x18c] sm:%s1156]
                  %1268 = vst [vmem:[%s1164 + $0xcc] sm:%s1156] %v1267
                  %v1269 = vld [vmem:[%s1163 + $0x190] sm:%s1156]
                  %1270 = vst [vmem:[%s1164 + $0xd0] sm:%s1156] %v1269
                  %v1271 = vld [vmem:[%s1163 + $0x194] sm:%s1156]
                  %1272 = vst [vmem:[%s1164 + $0xd4] sm:%s1156] %v1271
                  %v1273 = vld [vmem:[%s1163 + $0x198] sm:%s1156]
                  %1274 = vst [vmem:[%s1164 + $0xd8] sm:%s1156] %v1273
                  %v1275 = vld [vmem:[%s1163 + $0x19c] sm:%s1156]
                  %1276 = vst [vmem:[%s1164 + $0xdc] sm:%s1156] %v1275
                  %v1277 = vld [vmem:[%s1163 + $0x1a0] sm:%s1156]
                  %1278 = vst [vmem:[%s1164 + $0xe0] sm:%s1156] %v1277
                  %v1279 = vld [vmem:[%s1163 + $0x1a4] sm:%s1156]
                  %1280 = vst [vmem:[%s1164 + $0xe4] sm:%s1156] %v1279
                  %v1281 = vld [vmem:[%s1163 + $0x1a8] sm:%s1156]
                  %1282 = vst [vmem:[%s1164 + $0xe8] sm:%s1156] %v1281
                  %v1283 = vld [vmem:[%s1163 + $0x1ac] sm:%s1156]
                  %1284 = vst [vmem:[%s1164 + $0xec] sm:%s1156] %v1283
                  %v1285 = vld [vmem:[%s1163 + $0x1b0] sm:%s1156]
                  %1286 = vst [vmem:[%s1164 + $0xf0] sm:%s1156] %v1285
                  %v1287 = vld [vmem:[%s1163 + $0x1b4] sm:%s1156]
                  %1288 = vst [vmem:[%s1164 + $0xf4] sm:%s1156] %v1287
                  %v1289 = vld [vmem:[%s1163 + $0x1b8] sm:%s1156]
                  %1290 = vst [vmem:[%s1164 + $0xf8] sm:%s1156] %v1289
                  %v1291 = vld [vmem:[%s1163 + $0x1bc] sm:%s1156]
                  %1292 = vst [vmem:[%s1164 + $0xfc] sm:%s1156] %v1291
                  %v1293 = vld [vmem:[%s1163 + $0x200] sm:%s1156]
                  %1294 = vst [vmem:[%s1164 + $0x100] sm:%s1156] %v1293
                  %v1295 = vld [vmem:[%s1163 + $0x204] sm:%s1156]
                  %1296 = vst [vmem:[%s1164 + $0x104] sm:%s1156] %v1295
                  %v1297 = vld [vmem:[%s1163 + $0x208] sm:%s1156]
                  %1298 = vst [vmem:[%s1164 + $0x108] sm:%s1156] %v1297
                  %v1299 = vld [vmem:[%s1163 + $0x20c] sm:%s1156]
                  %1300 = vst [vmem:[%s1164 + $0x10c] sm:%s1156] %v1299
                  %v1301 = vld [vmem:[%s1163 + $0x210] sm:%s1156]
                  %1302 = vst [vmem:[%s1164 + $0x110] sm:%s1156] %v1301
                  %v1303 = vld [vmem:[%s1163 + $0x214] sm:%s1156]
                  %1304 = vst [vmem:[%s1164 + $0x114] sm:%s1156] %v1303
                  %v1305 = vld [vmem:[%s1163 + $0x218] sm:%s1156]
                  %1306 = vst [vmem:[%s1164 + $0x118] sm:%s1156] %v1305
                  %v1307 = vld [vmem:[%s1163 + $0x21c] sm:%s1156]
                  %1308 = vst [vmem:[%s1164 + $0x11c] sm:%s1156] %v1307
                  %v1309 = vld [vmem:[%s1163 + $0x220] sm:%s1156]
                  %1310 = vst [vmem:[%s1164 + $0x120] sm:%s1156] %v1309
                  %v1311 = vld [vmem:[%s1163 + $0x224] sm:%s1156]
                  %1312 = vst [vmem:[%s1164 + $0x124] sm:%s1156] %v1311
                  %v1313 = vld [vmem:[%s1163 + $0x228] sm:%s1156]
                  %1314 = vst [vmem:[%s1164 + $0x128] sm:%s1156] %v1313
                  %v1315 = vld [vmem:[%s1163 + $0x22c] sm:%s1156]
                  %1316 = vst [vmem:[%s1164 + $0x12c] sm:%s1156] %v1315
                  %v1317 = vld [vmem:[%s1163 + $0x230] sm:%s1156]
                  %1318 = vst [vmem:[%s1164 + $0x130] sm:%s1156] %v1317
                  %v1319 = vld [vmem:[%s1163 + $0x234] sm:%s1156]
                  %1320 = vst [vmem:[%s1164 + $0x134] sm:%s1156] %v1319
                  %v1321 = vld [vmem:[%s1163 + $0x238] sm:%s1156]
                  %1322 = vst [vmem:[%s1164 + $0x138] sm:%s1156] %v1321
                  %v1323 = vld [vmem:[%s1163 + $0x23c] sm:%s1156]
                  %1324 = vst [vmem:[%s1164 + $0x13c] sm:%s1156] %v1323
                  %v1325 = vld [vmem:[%s1163 + $0x280] sm:%s1156]
                  %1326 = vst [vmem:[%s1164 + $0x140] sm:%s1156] %v1325
                  %v1327 = vld [vmem:[%s1163 + $0x284] sm:%s1156]
                  %1328 = vst [vmem:[%s1164 + $0x144] sm:%s1156] %v1327
                  %v1329 = vld [vmem:[%s1163 + $0x288] sm:%s1156]
                  %1330 = vst [vmem:[%s1164 + $0x148] sm:%s1156] %v1329
                  %v1331 = vld [vmem:[%s1163 + $0x28c] sm:%s1156]
                  %1332 = vst [vmem:[%s1164 + $0x14c] sm:%s1156] %v1331
                  %v1333 = vld [vmem:[%s1163 + $0x290] sm:%s1156]
                  %1334 = vst [vmem:[%s1164 + $0x150] sm:%s1156] %v1333
                  %v1335 = vld [vmem:[%s1163 + $0x294] sm:%s1156]
                  %1336 = vst [vmem:[%s1164 + $0x154] sm:%s1156] %v1335
                  %v1337 = vld [vmem:[%s1163 + $0x298] sm:%s1156]
                  %1338 = vst [vmem:[%s1164 + $0x158] sm:%s1156] %v1337
                  %v1339 = vld [vmem:[%s1163 + $0x29c] sm:%s1156]
                  %1340 = vst [vmem:[%s1164 + $0x15c] sm:%s1156] %v1339
                  %v1341 = vld [vmem:[%s1163 + $0x2a0] sm:%s1156]
                  %1342 = vst [vmem:[%s1164 + $0x160] sm:%s1156] %v1341
                  %v1343 = vld [vmem:[%s1163 + $0x2a4] sm:%s1156]
                  %1344 = vst [vmem:[%s1164 + $0x164] sm:%s1156] %v1343
                  %v1345 = vld [vmem:[%s1163 + $0x2a8] sm:%s1156]
                  %1346 = vst [vmem:[%s1164 + $0x168] sm:%s1156] %v1345
                  %v1347 = vld [vmem:[%s1163 + $0x2ac] sm:%s1156]
                  %1348 = vst [vmem:[%s1164 + $0x16c] sm:%s1156] %v1347
                  %v1349 = vld [vmem:[%s1163 + $0x2b0] sm:%s1156]
                  %1350 = vst [vmem:[%s1164 + $0x170] sm:%s1156] %v1349
                  %v1351 = vld [vmem:[%s1163 + $0x2b4] sm:%s1156]
                  %1352 = vst [vmem:[%s1164 + $0x174] sm:%s1156] %v1351
                  %v1353 = vld [vmem:[%s1163 + $0x2b8] sm:%s1156]
                  %1354 = vst [vmem:[%s1164 + $0x178] sm:%s1156] %v1353
                  %v1355 = vld [vmem:[%s1163 + $0x2bc] sm:%s1156]
                  %1356 = vst [vmem:[%s1164 + $0x17c] sm:%s1156] %v1355
                  %v1357 = vld [vmem:[%s1163 + $0x300] sm:%s1156]
                  %1358 = vst [vmem:[%s1164 + $0x180] sm:%s1156] %v1357
                  %v1359 = vld [vmem:[%s1163 + $0x304] sm:%s1156]
                  %1360 = vst [vmem:[%s1164 + $0x184] sm:%s1156] %v1359
                  %v1361 = vld [vmem:[%s1163 + $0x308] sm:%s1156]
                  %1362 = vst [vmem:[%s1164 + $0x188] sm:%s1156] %v1361
                  %v1363 = vld [vmem:[%s1163 + $0x30c] sm:%s1156]
                  %1364 = vst [vmem:[%s1164 + $0x18c] sm:%s1156] %v1363
                  %v1365 = vld [vmem:[%s1163 + $0x310] sm:%s1156]
                  %1366 = vst [vmem:[%s1164 + $0x190] sm:%s1156] %v1365
                  %v1367 = vld [vmem:[%s1163 + $0x314] sm:%s1156]
                  %1368 = vst [vmem:[%s1164 + $0x194] sm:%s1156] %v1367
                  %v1369 = vld [vmem:[%s1163 + $0x318] sm:%s1156]
                  %1370 = vst [vmem:[%s1164 + $0x198] sm:%s1156] %v1369
                  %v1371 = vld [vmem:[%s1163 + $0x31c] sm:%s1156]
                  %1372 = vst [vmem:[%s1164 + $0x19c] sm:%s1156] %v1371
                  %v1373 = vld [vmem:[%s1163 + $0x320] sm:%s1156]
                  %1374 = vst [vmem:[%s1164 + $0x1a0] sm:%s1156] %v1373
                  %v1375 = vld [vmem:[%s1163 + $0x324] sm:%s1156]
                  %1376 = vst [vmem:[%s1164 + $0x1a4] sm:%s1156] %v1375
                  %v1377 = vld [vmem:[%s1163 + $0x328] sm:%s1156]
                  %1378 = vst [vmem:[%s1164 + $0x1a8] sm:%s1156] %v1377
                  %v1379 = vld [vmem:[%s1163 + $0x32c] sm:%s1156]
                  %1380 = vst [vmem:[%s1164 + $0x1ac] sm:%s1156] %v1379
                  %v1381 = vld [vmem:[%s1163 + $0x330] sm:%s1156]
                  %1382 = vst [vmem:[%s1164 + $0x1b0] sm:%s1156] %v1381
                  %v1383 = vld [vmem:[%s1163 + $0x334] sm:%s1156]
                  %1384 = vst [vmem:[%s1164 + $0x1b4] sm:%s1156] %v1383
                  %v1385 = vld [vmem:[%s1163 + $0x338] sm:%s1156]
                  %1386 = vst [vmem:[%s1164 + $0x1b8] sm:%s1156] %v1385
                  %v1387 = vld [vmem:[%s1163 + $0x33c] sm:%s1156]
                  %1388 = vst [vmem:[%s1164 + $0x1bc] sm:%s1156] %v1387
                  %v1389 = vld [vmem:[%s1163 + $0x380] sm:%s1156]
                  %1390 = vst [vmem:[%s1164 + $0x1c0] sm:%s1156] %v1389
                  %v1391 = vld [vmem:[%s1163 + $0x384] sm:%s1156]
                  %1392 = vst [vmem:[%s1164 + $0x1c4] sm:%s1156] %v1391
                  %v1393 = vld [vmem:[%s1163 + $0x388] sm:%s1156]
                  %1394 = vst [vmem:[%s1164 + $0x1c8] sm:%s1156] %v1393
                  %v1395 = vld [vmem:[%s1163 + $0x38c] sm:%s1156]
                  %1396 = vst [vmem:[%s1164 + $0x1cc] sm:%s1156] %v1395
                  %v1397 = vld [vmem:[%s1163 + $0x390] sm:%s1156]
                  %1398 = vst [vmem:[%s1164 + $0x1d0] sm:%s1156] %v1397
                  %v1399 = vld [vmem:[%s1163 + $0x394] sm:%s1156]
                  %1400 = vst [vmem:[%s1164 + $0x1d4] sm:%s1156] %v1399
                  %v1401 = vld [vmem:[%s1163 + $0x398] sm:%s1156]
                  %1402 = vst [vmem:[%s1164 + $0x1d8] sm:%s1156] %v1401
                  %v1403 = vld [vmem:[%s1163 + $0x39c] sm:%s1156]
                  %1404 = vst [vmem:[%s1164 + $0x1dc] sm:%s1156] %v1403
                  %v1405 = vld [vmem:[%s1163 + $0x3a0] sm:%s1156]
                  %1406 = vst [vmem:[%s1164 + $0x1e0] sm:%s1156] %v1405
                  %v1407 = vld [vmem:[%s1163 + $0x3a4] sm:%s1156]
                  %1408 = vst [vmem:[%s1164 + $0x1e4] sm:%s1156] %v1407
                  %v1409 = vld [vmem:[%s1163 + $0x3a8] sm:%s1156]
                  %1410 = vst [vmem:[%s1164 + $0x1e8] sm:%s1156] %v1409
                  %v1411 = vld [vmem:[%s1163 + $0x3ac] sm:%s1156]
                  %1412 = vst [vmem:[%s1164 + $0x1ec] sm:%s1156] %v1411
                  %v1413 = vld [vmem:[%s1163 + $0x3b0] sm:%s1156]
                  %1414 = vst [vmem:[%s1164 + $0x1f0] sm:%s1156] %v1413
                  %v1415 = vld [vmem:[%s1163 + $0x3b4] sm:%s1156]
                  %1416 = vst [vmem:[%s1164 + $0x1f4] sm:%s1156] %v1415
                  %v1417 = vld [vmem:[%s1163 + $0x3b8] sm:%s1156]
                  %1418 = vst [vmem:[%s1164 + $0x1f8] sm:%s1156] %v1417
                  %v1419 = vld [vmem:[%s1163 + $0x3bc] sm:%s1156]
                  %1420 = vst [vmem:[%s1164 + $0x1fc] sm:%s1156] %v1419
                $region108: #{tpu_custom_call.1} parent=95 // loop_footer
                  %s1162 = sadd.s32 1, %s1158
                $region109: #{tpu_custom_call.1} parent=95 // loop_footer_branch
                  %1157 = sbr.rel target = $region105
                $region110: #{tpu_custom_call.1} parent=95 // loop_exit
                  _
              $region96: #{tpu_custom_call.1} parent=80 // pred_fallthru
                _
            $region81: #{tpu_custom_call.1} parent=76 // pred_fallthru
              _
            // Predicated region
            $region82: #{tpu_custom_call.1} parent=76 // pred_check
              _
            $region83: #{tpu_custom_call.1} parent=76 // pred_check_branch
              %878 = sbr.rel (0) target = $region85
            $region84: #{tpu_custom_call.1} parent=76 // pred_region
              %s880 = ssub.s32 16, 1
              loop: start=0, step=1, limit=1
              $region86: #{tpu_custom_call.1} parent=84 // loop_pre_header
                _
              $region87: #{tpu_custom_call.1} parent=84 // loop_header
                %s882 = sphi 0, %s886
                %p883 = scmp.ge.s32.totalorder %s882, 1
                %s887 = sphi %s872, %s872
                %s888 = sphi %s866, %s866
              $region88: #{tpu_custom_call.1} parent=84 // loop_header_branch
                %885 = sbr.rel (%p883) target = $region92
              $region89: #{tpu_custom_call.1} parent=84 // loop_body
                %v889 = vld [vmem:[%s887] sm:%s880]
                %890 = vst [vmem:[%s888] sm:%s880] %v889
                %v891 = vld [vmem:[%s887 + $0x4] sm:%s880]
                %892 = vst [vmem:[%s888 + $0x4] sm:%s880] %v891
                %v893 = vld [vmem:[%s887 + $0x8] sm:%s880]
                %894 = vst [vmem:[%s888 + $0x8] sm:%s880] %v893
                %v895 = vld [vmem:[%s887 + $0xc] sm:%s880]
                %896 = vst [vmem:[%s888 + $0xc] sm:%s880] %v895
                %v897 = vld [vmem:[%s887 + $0x10] sm:%s880]
                %898 = vst [vmem:[%s888 + $0x10] sm:%s880] %v897
                %v899 = vld [vmem:[%s887 + $0x14] sm:%s880]
                %900 = vst [vmem:[%s888 + $0x14] sm:%s880] %v899
                %v901 = vld [vmem:[%s887 + $0x18] sm:%s880]
                %902 = vst [vmem:[%s888 + $0x18] sm:%s880] %v901
                %v903 = vld [vmem:[%s887 + $0x1c] sm:%s880]
                %904 = vst [vmem:[%s888 + $0x1c] sm:%s880] %v903
                %v905 = vld [vmem:[%s887 + $0x20] sm:%s880]
                %906 = vst [vmem:[%s888 + $0x20] sm:%s880] %v905
                %v907 = vld [vmem:[%s887 + $0x24] sm:%s880]
                %908 = vst [vmem:[%s888 + $0x24] sm:%s880] %v907
                %v909 = vld [vmem:[%s887 + $0x28] sm:%s880]
                %910 = vst [vmem:[%s888 + $0x28] sm:%s880] %v909
                %v911 = vld [vmem:[%s887 + $0x2c] sm:%s880]
                %912 = vst [vmem:[%s888 + $0x2c] sm:%s880] %v911
                %v913 = vld [vmem:[%s887 + $0x30] sm:%s880]
                %914 = vst [vmem:[%s888 + $0x30] sm:%s880] %v913
                %v915 = vld [vmem:[%s887 + $0x34] sm:%s880]
                %916 = vst [vmem:[%s888 + $0x34] sm:%s880] %v915
                %v917 = vld [vmem:[%s887 + $0x38] sm:%s880]
                %918 = vst [vmem:[%s888 + $0x38] sm:%s880] %v917
                %v919 = vld [vmem:[%s887 + $0x3c] sm:%s880]
                %920 = vst [vmem:[%s888 + $0x3c] sm:%s880] %v919
                %v921 = vld [vmem:[%s887 + $0x80] sm:%s880]
                %922 = vst [vmem:[%s888 + $0x40] sm:%s880] %v921
                %v923 = vld [vmem:[%s887 + $0x84] sm:%s880]
                %924 = vst [vmem:[%s888 + $0x44] sm:%s880] %v923
                %v925 = vld [vmem:[%s887 + $0x88] sm:%s880]
                %926 = vst [vmem:[%s888 + $0x48] sm:%s880] %v925
                %v927 = vld [vmem:[%s887 + $0x8c] sm:%s880]
                %928 = vst [vmem:[%s888 + $0x4c] sm:%s880] %v927
                %v929 = vld [vmem:[%s887 + $0x90] sm:%s880]
                %930 = vst [vmem:[%s888 + $0x50] sm:%s880] %v929
                %v931 = vld [vmem:[%s887 + $0x94] sm:%s880]
                %932 = vst [vmem:[%s888 + $0x54] sm:%s880] %v931
                %v933 = vld [vmem:[%s887 + $0x98] sm:%s880]
                %934 = vst [vmem:[%s888 + $0x58] sm:%s880] %v933
                %v935 = vld [vmem:[%s887 + $0x9c] sm:%s880]
                %936 = vst [vmem:[%s888 + $0x5c] sm:%s880] %v935
                %v937 = vld [vmem:[%s887 + $0xa0] sm:%s880]
                %938 = vst [vmem:[%s888 + $0x60] sm:%s880] %v937
                %v939 = vld [vmem:[%s887 + $0xa4] sm:%s880]
                %940 = vst [vmem:[%s888 + $0x64] sm:%s880] %v939
                %v941 = vld [vmem:[%s887 + $0xa8] sm:%s880]
                %942 = vst [vmem:[%s888 + $0x68] sm:%s880] %v941
                %v943 = vld [vmem:[%s887 + $0xac] sm:%s880]
                %944 = vst [vmem:[%s888 + $0x6c] sm:%s880] %v943
                %v945 = vld [vmem:[%s887 + $0xb0] sm:%s880]
                %946 = vst [vmem:[%s888 + $0x70] sm:%s880] %v945
                %v947 = vld [vmem:[%s887 + $0xb4] sm:%s880]
                %948 = vst [vmem:[%s888 + $0x74] sm:%s880] %v947
                %v949 = vld [vmem:[%s887 + $0xb8] sm:%s880]
                %950 = vst [vmem:[%s888 + $0x78] sm:%s880] %v949
                %v951 = vld [vmem:[%s887 + $0xbc] sm:%s880]
                %952 = vst [vmem:[%s888 + $0x7c] sm:%s880] %v951
                %v953 = vld [vmem:[%s887 + $0x100] sm:%s880]
                %954 = vst [vmem:[%s888 + $0x80] sm:%s880] %v953
                %v955 = vld [vmem:[%s887 + $0x104] sm:%s880]
                %956 = vst [vmem:[%s888 + $0x84] sm:%s880] %v955
                %v957 = vld [vmem:[%s887 + $0x108] sm:%s880]
                %958 = vst [vmem:[%s888 + $0x88] sm:%s880] %v957
                %v959 = vld [vmem:[%s887 + $0x10c] sm:%s880]
                %960 = vst [vmem:[%s888 + $0x8c] sm:%s880] %v959
                %v961 = vld [vmem:[%s887 + $0x110] sm:%s880]
                %962 = vst [vmem:[%s888 + $0x90] sm:%s880] %v961
                %v963 = vld [vmem:[%s887 + $0x114] sm:%s880]
                %964 = vst [vmem:[%s888 + $0x94] sm:%s880] %v963
                %v965 = vld [vmem:[%s887 + $0x118] sm:%s880]
                %966 = vst [vmem:[%s888 + $0x98] sm:%s880] %v965
                %v967 = vld [vmem:[%s887 + $0x11c] sm:%s880]
                %968 = vst [vmem:[%s888 + $0x9c] sm:%s880] %v967
                %v969 = vld [vmem:[%s887 + $0x120] sm:%s880]
                %970 = vst [vmem:[%s888 + $0xa0] sm:%s880] %v969
                %v971 = vld [vmem:[%s887 + $0x124] sm:%s880]
                %972 = vst [vmem:[%s888 + $0xa4] sm:%s880] %v971
                %v973 = vld [vmem:[%s887 + $0x128] sm:%s880]
                %974 = vst [vmem:[%s888 + $0xa8] sm:%s880] %v973
                %v975 = vld [vmem:[%s887 + $0x12c] sm:%s880]
                %976 = vst [vmem:[%s888 + $0xac] sm:%s880] %v975
                %v977 = vld [vmem:[%s887 + $0x130] sm:%s880]
                %978 = vst [vmem:[%s888 + $0xb0] sm:%s880] %v977
                %v979 = vld [vmem:[%s887 + $0x134] sm:%s880]
                %980 = vst [vmem:[%s888 + $0xb4] sm:%s880] %v979
                %v981 = vld [vmem:[%s887 + $0x138] sm:%s880]
                %982 = vst [vmem:[%s888 + $0xb8] sm:%s880] %v981
                %v983 = vld [vmem:[%s887 + $0x13c] sm:%s880]
                %984 = vst [vmem:[%s888 + $0xbc] sm:%s880] %v983
                %v985 = vld [vmem:[%s887 + $0x180] sm:%s880]
                %986 = vst [vmem:[%s888 + $0xc0] sm:%s880] %v985
                %v987 = vld [vmem:[%s887 + $0x184] sm:%s880]
                %988 = vst [vmem:[%s888 + $0xc4] sm:%s880] %v987
                %v989 = vld [vmem:[%s887 + $0x188] sm:%s880]
                %990 = vst [vmem:[%s888 + $0xc8] sm:%s880] %v989
                %v991 = vld [vmem:[%s887 + $0x18c] sm:%s880]
                %992 = vst [vmem:[%s888 + $0xcc] sm:%s880] %v991
                %v993 = vld [vmem:[%s887 + $0x190] sm:%s880]
                %994 = vst [vmem:[%s888 + $0xd0] sm:%s880] %v993
                %v995 = vld [vmem:[%s887 + $0x194] sm:%s880]
                %996 = vst [vmem:[%s888 + $0xd4] sm:%s880] %v995
                %v997 = vld [vmem:[%s887 + $0x198] sm:%s880]
                %998 = vst [vmem:[%s888 + $0xd8] sm:%s880] %v997
                %v999 = vld [vmem:[%s887 + $0x19c] sm:%s880]
                %1000 = vst [vmem:[%s888 + $0xdc] sm:%s880] %v999
                %v1001 = vld [vmem:[%s887 + $0x1a0] sm:%s880]
                %1002 = vst [vmem:[%s888 + $0xe0] sm:%s880] %v1001
                %v1003 = vld [vmem:[%s887 + $0x1a4] sm:%s880]
                %1004 = vst [vmem:[%s888 + $0xe4] sm:%s880] %v1003
                %v1005 = vld [vmem:[%s887 + $0x1a8] sm:%s880]
                %1006 = vst [vmem:[%s888 + $0xe8] sm:%s880] %v1005
                %v1007 = vld [vmem:[%s887 + $0x1ac] sm:%s880]
                %1008 = vst [vmem:[%s888 + $0xec] sm:%s880] %v1007
                %v1009 = vld [vmem:[%s887 + $0x1b0] sm:%s880]
                %1010 = vst [vmem:[%s888 + $0xf0] sm:%s880] %v1009
                %v1011 = vld [vmem:[%s887 + $0x1b4] sm:%s880]
                %1012 = vst [vmem:[%s888 + $0xf4] sm:%s880] %v1011
                %v1013 = vld [vmem:[%s887 + $0x1b8] sm:%s880]
                %1014 = vst [vmem:[%s888 + $0xf8] sm:%s880] %v1013
                %v1015 = vld [vmem:[%s887 + $0x1bc] sm:%s880]
                %1016 = vst [vmem:[%s888 + $0xfc] sm:%s880] %v1015
                %v1017 = vld [vmem:[%s887 + $0x200] sm:%s880]
                %1018 = vst [vmem:[%s888 + $0x100] sm:%s880] %v1017
                %v1019 = vld [vmem:[%s887 + $0x204] sm:%s880]
                %1020 = vst [vmem:[%s888 + $0x104] sm:%s880] %v1019
                %v1021 = vld [vmem:[%s887 + $0x208] sm:%s880]
                %1022 = vst [vmem:[%s888 + $0x108] sm:%s880] %v1021
                %v1023 = vld [vmem:[%s887 + $0x20c] sm:%s880]
                %1024 = vst [vmem:[%s888 + $0x10c] sm:%s880] %v1023
                %v1025 = vld [vmem:[%s887 + $0x210] sm:%s880]
                %1026 = vst [vmem:[%s888 + $0x110] sm:%s880] %v1025
                %v1027 = vld [vmem:[%s887 + $0x214] sm:%s880]
                %1028 = vst [vmem:[%s888 + $0x114] sm:%s880] %v1027
                %v1029 = vld [vmem:[%s887 + $0x218] sm:%s880]
                %1030 = vst [vmem:[%s888 + $0x118] sm:%s880] %v1029
                %v1031 = vld [vmem:[%s887 + $0x21c] sm:%s880]
                %1032 = vst [vmem:[%s888 + $0x11c] sm:%s880] %v1031
                %v1033 = vld [vmem:[%s887 + $0x220] sm:%s880]
                %1034 = vst [vmem:[%s888 + $0x120] sm:%s880] %v1033
                %v1035 = vld [vmem:[%s887 + $0x224] sm:%s880]
                %1036 = vst [vmem:[%s888 + $0x124] sm:%s880] %v1035
                %v1037 = vld [vmem:[%s887 + $0x228] sm:%s880]
                %1038 = vst [vmem:[%s888 + $0x128] sm:%s880] %v1037
                %v1039 = vld [vmem:[%s887 + $0x22c] sm:%s880]
                %1040 = vst [vmem:[%s888 + $0x12c] sm:%s880] %v1039
                %v1041 = vld [vmem:[%s887 + $0x230] sm:%s880]
                %1042 = vst [vmem:[%s888 + $0x130] sm:%s880] %v1041
                %v1043 = vld [vmem:[%s887 + $0x234] sm:%s880]
                %1044 = vst [vmem:[%s888 + $0x134] sm:%s880] %v1043
                %v1045 = vld [vmem:[%s887 + $0x238] sm:%s880]
                %1046 = vst [vmem:[%s888 + $0x138] sm:%s880] %v1045
                %v1047 = vld [vmem:[%s887 + $0x23c] sm:%s880]
                %1048 = vst [vmem:[%s888 + $0x13c] sm:%s880] %v1047
                %v1049 = vld [vmem:[%s887 + $0x280] sm:%s880]
                %1050 = vst [vmem:[%s888 + $0x140] sm:%s880] %v1049
                %v1051 = vld [vmem:[%s887 + $0x284] sm:%s880]
                %1052 = vst [vmem:[%s888 + $0x144] sm:%s880] %v1051
                %v1053 = vld [vmem:[%s887 + $0x288] sm:%s880]
                %1054 = vst [vmem:[%s888 + $0x148] sm:%s880] %v1053
                %v1055 = vld [vmem:[%s887 + $0x28c] sm:%s880]
                %1056 = vst [vmem:[%s888 + $0x14c] sm:%s880] %v1055
                %v1057 = vld [vmem:[%s887 + $0x290] sm:%s880]
                %1058 = vst [vmem:[%s888 + $0x150] sm:%s880] %v1057
                %v1059 = vld [vmem:[%s887 + $0x294] sm:%s880]
                %1060 = vst [vmem:[%s888 + $0x154] sm:%s880] %v1059
                %v1061 = vld [vmem:[%s887 + $0x298] sm:%s880]
                %1062 = vst [vmem:[%s888 + $0x158] sm:%s880] %v1061
                %v1063 = vld [vmem:[%s887 + $0x29c] sm:%s880]
                %1064 = vst [vmem:[%s888 + $0x15c] sm:%s880] %v1063
                %v1065 = vld [vmem:[%s887 + $0x2a0] sm:%s880]
                %1066 = vst [vmem:[%s888 + $0x160] sm:%s880] %v1065
                %v1067 = vld [vmem:[%s887 + $0x2a4] sm:%s880]
                %1068 = vst [vmem:[%s888 + $0x164] sm:%s880] %v1067
                %v1069 = vld [vmem:[%s887 + $0x2a8] sm:%s880]
                %1070 = vst [vmem:[%s888 + $0x168] sm:%s880] %v1069
                %v1071 = vld [vmem:[%s887 + $0x2ac] sm:%s880]
                %1072 = vst [vmem:[%s888 + $0x16c] sm:%s880] %v1071
                %v1073 = vld [vmem:[%s887 + $0x2b0] sm:%s880]
                %1074 = vst [vmem:[%s888 + $0x170] sm:%s880] %v1073
                %v1075 = vld [vmem:[%s887 + $0x2b4] sm:%s880]
                %1076 = vst [vmem:[%s888 + $0x174] sm:%s880] %v1075
                %v1077 = vld [vmem:[%s887 + $0x2b8] sm:%s880]
                %1078 = vst [vmem:[%s888 + $0x178] sm:%s880] %v1077
                %v1079 = vld [vmem:[%s887 + $0x2bc] sm:%s880]
                %1080 = vst [vmem:[%s888 + $0x17c] sm:%s880] %v1079
                %v1081 = vld [vmem:[%s887 + $0x300] sm:%s880]
                %1082 = vst [vmem:[%s888 + $0x180] sm:%s880] %v1081
                %v1083 = vld [vmem:[%s887 + $0x304] sm:%s880]
                %1084 = vst [vmem:[%s888 + $0x184] sm:%s880] %v1083
                %v1085 = vld [vmem:[%s887 + $0x308] sm:%s880]
                %1086 = vst [vmem:[%s888 + $0x188] sm:%s880] %v1085
                %v1087 = vld [vmem:[%s887 + $0x30c] sm:%s880]
                %1088 = vst [vmem:[%s888 + $0x18c] sm:%s880] %v1087
                %v1089 = vld [vmem:[%s887 + $0x310] sm:%s880]
                %1090 = vst [vmem:[%s888 + $0x190] sm:%s880] %v1089
                %v1091 = vld [vmem:[%s887 + $0x314] sm:%s880]
                %1092 = vst [vmem:[%s888 + $0x194] sm:%s880] %v1091
                %v1093 = vld [vmem:[%s887 + $0x318] sm:%s880]
                %1094 = vst [vmem:[%s888 + $0x198] sm:%s880] %v1093
                %v1095 = vld [vmem:[%s887 + $0x31c] sm:%s880]
                %1096 = vst [vmem:[%s888 + $0x19c] sm:%s880] %v1095
                %v1097 = vld [vmem:[%s887 + $0x320] sm:%s880]
                %1098 = vst [vmem:[%s888 + $0x1a0] sm:%s880] %v1097
                %v1099 = vld [vmem:[%s887 + $0x324] sm:%s880]
                %1100 = vst [vmem:[%s888 + $0x1a4] sm:%s880] %v1099
                %v1101 = vld [vmem:[%s887 + $0x328] sm:%s880]
                %1102 = vst [vmem:[%s888 + $0x1a8] sm:%s880] %v1101
                %v1103 = vld [vmem:[%s887 + $0x32c] sm:%s880]
                %1104 = vst [vmem:[%s888 + $0x1ac] sm:%s880] %v1103
                %v1105 = vld [vmem:[%s887 + $0x330] sm:%s880]
                %1106 = vst [vmem:[%s888 + $0x1b0] sm:%s880] %v1105
                %v1107 = vld [vmem:[%s887 + $0x334] sm:%s880]
                %1108 = vst [vmem:[%s888 + $0x1b4] sm:%s880] %v1107
                %v1109 = vld [vmem:[%s887 + $0x338] sm:%s880]
                %1110 = vst [vmem:[%s888 + $0x1b8] sm:%s880] %v1109
                %v1111 = vld [vmem:[%s887 + $0x33c] sm:%s880]
                %1112 = vst [vmem:[%s888 + $0x1bc] sm:%s880] %v1111
                %v1113 = vld [vmem:[%s887 + $0x380] sm:%s880]
                %1114 = vst [vmem:[%s888 + $0x1c0] sm:%s880] %v1113
                %v1115 = vld [vmem:[%s887 + $0x384] sm:%s880]
                %1116 = vst [vmem:[%s888 + $0x1c4] sm:%s880] %v1115
                %v1117 = vld [vmem:[%s887 + $0x388] sm:%s880]
                %1118 = vst [vmem:[%s888 + $0x1c8] sm:%s880] %v1117
                %v1119 = vld [vmem:[%s887 + $0x38c] sm:%s880]
                %1120 = vst [vmem:[%s888 + $0x1cc] sm:%s880] %v1119
                %v1121 = vld [vmem:[%s887 + $0x390] sm:%s880]
                %1122 = vst [vmem:[%s888 + $0x1d0] sm:%s880] %v1121
                %v1123 = vld [vmem:[%s887 + $0x394] sm:%s880]
                %1124 = vst [vmem:[%s888 + $0x1d4] sm:%s880] %v1123
                %v1125 = vld [vmem:[%s887 + $0x398] sm:%s880]
                %1126 = vst [vmem:[%s888 + $0x1d8] sm:%s880] %v1125
                %v1127 = vld [vmem:[%s887 + $0x39c] sm:%s880]
                %1128 = vst [vmem:[%s888 + $0x1dc] sm:%s880] %v1127
                %v1129 = vld [vmem:[%s887 + $0x3a0] sm:%s880]
                %1130 = vst [vmem:[%s888 + $0x1e0] sm:%s880] %v1129
                %v1131 = vld [vmem:[%s887 + $0x3a4] sm:%s880]
                %1132 = vst [vmem:[%s888 + $0x1e4] sm:%s880] %v1131
                %v1133 = vld [vmem:[%s887 + $0x3a8] sm:%s880]
                %1134 = vst [vmem:[%s888 + $0x1e8] sm:%s880] %v1133
                %v1135 = vld [vmem:[%s887 + $0x3ac] sm:%s880]
                %1136 = vst [vmem:[%s888 + $0x1ec] sm:%s880] %v1135
                %v1137 = vld [vmem:[%s887 + $0x3b0] sm:%s880]
                %1138 = vst [vmem:[%s888 + $0x1f0] sm:%s880] %v1137
                %v1139 = vld [vmem:[%s887 + $0x3b4] sm:%s880]
                %1140 = vst [vmem:[%s888 + $0x1f4] sm:%s880] %v1139
                %v1141 = vld [vmem:[%s887 + $0x3b8] sm:%s880]
                %1142 = vst [vmem:[%s888 + $0x1f8] sm:%s880] %v1141
                %v1143 = vld [vmem:[%s887 + $0x3bc] sm:%s880]
                %1144 = vst [vmem:[%s888 + $0x1fc] sm:%s880] %v1143
              $region90: #{tpu_custom_call.1} parent=84 // loop_footer
                %s886 = sadd.s32 1, %s882
              $region91: #{tpu_custom_call.1} parent=84 // loop_footer_branch
                %881 = sbr.rel target = $region87
              $region92: #{tpu_custom_call.1} parent=84 // loop_exit
                _
            $region85: #{tpu_custom_call.1} parent=76 // pred_fallthru
              _
          $region77: #{tpu_custom_call.1} parent=72 // pred_fallthru
            _
          %1421 = vnop
        $region73: #{tpu_custom_call.1} parent=23 // pred_fallthru
          _
        // Predicated region
        $region111: #{tpu_custom_call.1} parent=23 // pred_check
          %p1422 = pneg %p136
        $region112: #{tpu_custom_call.1} parent=23 // pred_check_branch
          %1424 = sbr.rel (%p1422) target = $region114
        $region113: #{tpu_custom_call.1} parent=23 // pred_region
          %p1425 = scmp.lt.s32.totalorder %s25, 1
          %s1426 = scalar_select %p1425, %s25, 1
          %p1427 = scmp.lt.s32.totalorder %s26, 1
          %s1428 = scalar_select %p1427, %s26, 1
          %s1429 = smul.addr %s1426, 2
          %s1430 = sadd.s32 %s1428, %s1429
          %s1431 = smul.addr %s1430, 8
          %s1432 = scalar_lea.vmem %s3, %s1431
        $region114: #{tpu_custom_call.1} parent=23 // pred_fallthru
          _
        // Predicated region
        $region115: #{tpu_custom_call.1} parent=23 // pred_check
          %p1433 = pneg %p204
        $region116: #{tpu_custom_call.1} parent=23 // pred_check_branch
          %1435 = sbr.rel (%p1433) target = $region118
        $region117: #{tpu_custom_call.1} parent=23 // pred_region
          %p1436 = scmp.lt.s32.totalorder %s25, 1
          %s1437 = scalar_select %p1436, %s25, 1
          %s1438 = smul.addr %s1437, 8
          %s1439 = scalar_lea.vmem %s6, %s1438
        $region118: #{tpu_custom_call.1} parent=23 // pred_fallthru
          _
      $region24: #{tpu_custom_call.1} parent=5 // pred_fallthru
        _
      %p1440 = scmp.le.s32.totalorder 1, %s18
      %p1441 = scmp.lt.s32.totalorder %s18, 5
      %p1442 = pnand %p1440, %p1441
      %p1443 = pneg %p1442
      // Predicated region
      $region119: #{tpu_custom_call.1} parent=5 // pred_check
        _
      $region120: #{tpu_custom_call.1} parent=5 // pred_check_branch
        %1445 = sbr.rel (%p1442) target = $region122
      $region121: #{tpu_custom_call.1} parent=5 // pred_region
        %s1446 = ssub.s32 %s18, 1
        %s1447 = sand.u32 %s45, 1
        %s1448 = sand.u32 %s45, 1
        %s1449 = smul.addr %s1448, 512
        %s1450 = scalar_lea.vmem [#allocation6], %s1449
        // Predicated region
        $region123: #{tpu_custom_call.1} parent=121 // pred_check
          %p1451 = pneg %p58
        $region124: #{tpu_custom_call.1} parent=121 // pred_check_branch
          %1453 = sbr.rel (%p1451) target = $region126
        $region125: #{tpu_custom_call.1} parent=121 // pred_region
          _
        $region126: #{tpu_custom_call.1} parent=121 // pred_fallthru
          _
        %s1454 = sand.u32 %s101, 1
        %s1455 = sand.u32 %s101, 1
        %s1456 = smul.addr %s1455, 512
        %s1457 = scalar_lea.vmem [#allocation7], %s1456
        // Predicated region
        $region127: #{tpu_custom_call.1} parent=121 // pred_check
          %p1458 = pneg %p114
        $region128: #{tpu_custom_call.1} parent=121 // pred_check_branch
          %1460 = sbr.rel (%p1458) target = $region130
        $region129: #{tpu_custom_call.1} parent=121 // pred_region
          _
        $region130: #{tpu_custom_call.1} parent=121 // pred_fallthru
          _
        %s1461 = sand.u32 %s45, 1
        %s1462 = sand.u32 %s45, 1
        %s1463 = smul.addr %s1462, 512
        %s1464 = scalar_lea.vmem [#allocation6], %s1463
        %p1465 = pneg %p58
        %p1466 = pneg %p55
        %p1467 = scmp.lt.s32.totalorder %s27, 1
        %s1468 = scalar_select %p1467, %s27, 1
        %p1469 = scmp.lt.s32.totalorder %s28, 1
        %s1470 = scalar_select %p1469, %s28, 1
        %s1471 = smul.addr %s1468, 2
        %s1472 = sadd.s32 %s1470, %s1471
        %s1473 = smul.addr %s1472, 8
        %s1474 = scalar_lea.vmem %s1, %s1473
        %p1475 = pneg %p86
        %p1476 = pneg %p83
        %s1477 = sand.u32 %s101, 1
        %s1478 = sand.u32 %s101, 1
        %s1479 = smul.addr %s1478, 512
        %s1480 = scalar_lea.vmem [#allocation7], %s1479
        %p1481 = pneg %p114
        %p1482 = pneg %p111
        %p1483 = scmp.lt.s32.totalorder %s27, 1
        %s1484 = scalar_select %p1483, %s27, 1
        %p1485 = scmp.lt.s32.totalorder %s28, 1
        %s1486 = scalar_select %p1485, %s28, 1
        %s1487 = smul.addr %s1484, 2
        %s1488 = sadd.s32 %s1486, %s1487
        %s1489 = smul.addr %s1488, 8
        %s1490 = scalar_lea.vmem %s3, %s1489
        %p1491 = pneg %p142
        %p1492 = pneg %p139
        %p1493 = pneg %p163
        %p1494 = pneg %p160
        %p1495 = pneg %p184
        %p1496 = pneg %p181
        %p1497 = scmp.lt.s32.totalorder %s27, 1
        %s1498 = scalar_select %p1497, %s27, 1
        %s1499 = smul.addr %s1498, 8
        %s1500 = scalar_lea.vmem %s6, %s1499
        %p1501 = pneg %p210
        %p1502 = pneg %p207
        %p1503 = pneg %p236
        %p1504 = pneg %p233
        %s1505 = sand.u32 %s223, 1
        %s1506 = scalar_lea.sflag [#allocation9], %s1505
        %s1507 = sand.u32 %s223, 1
        %s1508 = smul.addr %s1507, 8
        %s1509 = scalar_lea.vmem [#allocation8], %s1508
        %p1510 = pneg %p262
        %p1511 = pneg %p259
        %p1512 = scmp.lt.s32.totalorder %s27, 1
        %s1513 = scalar_select %p1512, %s27, 1
        %s1514 = smul.addr %s1513, 8
        %s1515 = scalar_lea.vmem %s8, %s1514
        %s1516 = smul.u32 8, %s27
        %s1517 = smul.u32 16, %s28
        %p1518 = scmp.lt.s32.totalorder %s27, 1
        %s1519 = scalar_select %p1518, %s27, 1
        %p1520 = scmp.lt.s32.totalorder %s28, 1
        %s1521 = scalar_select %p1520, %s28, 1
        %s1522 = smul.addr %s1519, 2
        %s1523 = sadd.s32 %s1521, %s1522
        %s1524 = smul.addr %s1523, 8
        %s1525 = scalar_lea.vmem %s1, %s1524
        %s1526 = smul.u32 8, %s27
        %s1527 = smul.u32 16, %s28
        %p1528 = scmp.lt.s32.totalorder %s27, 1
        %s1529 = scalar_select %p1528, %s27, 1
        %p1530 = scmp.lt.s32.totalorder %s28, 1
        %s1531 = scalar_select %p1530, %s28, 1
        %s1532 = smul.addr %s1529, 2
        %s1533 = sadd.s32 %s1531, %s1532
        %s1534 = smul.addr %s1533, 8
        %s1535 = scalar_lea.vmem %s3, %s1534
        %p1536 = scmp.lt.s32.totalorder %s27, 1
        %s1537 = scalar_select %p1536, %s27, 1
        %s1538 = smul.addr %s1537, 8
        %s1539 = scalar_lea.vmem %s6, %s1538
        %p1540 = scmp.lt.s32.totalorder %s27, 1
        %s1541 = scalar_select %p1540, %s27, 1
        %s1542 = smul.addr %s1541, 8
        %s1543 = scalar_lea.vmem %s8, %s1542
        %p1544 = scmp.eq.s32.totalorder %s28, 0
        // Predicated region
        $region131: #{tpu_custom_call.1} parent=121 // pred_check
          %p1545 = pneg %p1544
        $region132: #{tpu_custom_call.1} parent=121 // pred_check_branch
          %1547 = sbr.rel (%p1545) target = $region134
        $region133: #{tpu_custom_call.1} parent=121 // pred_region
          %vm1548 = vcmask 523264
          %1549 = vst.msk [vmem:[#allocation2] sm:$0xff] %vm1548, 0.0
          %vm1550 = vcmask 7168
          %1551 = vst.msk [vmem:[#allocation3] sm:$0xff] %vm1550, 0.0
          %1552 = vst.msk [vmem:[#allocation4] sm:$0xff] %vm1548, 0.0
          %1553 = vst.msk [vmem:[#allocation5] sm:$0xff] %vm1550, 0.0
        $region134: #{tpu_custom_call.1} parent=121 // pred_fallthru
          _
        %v1554 = vld [vmem:[%s1525] sm:$0xff]
        %v1555 = vld [vmem:[%s1535] sm:$0xff]
        %v1556 = vld [vmem:[%s1450] sm:$0xf]
        %v1557 = vld [vmem:[%s1450 + $0x4] sm:$0xf]
        %v1558 = vld [vmem:[%s1450 + $0x8] sm:$0xf]
        %v1559 = vld [vmem:[%s1450 + $0xc] sm:$0xf]
        %v1560 = vld [vmem:[%s1450 + $0x10] sm:$0xf]
        %v1561 = vld [vmem:[%s1450 + $0x14] sm:$0xf]
        %v1562 = vld [vmem:[%s1450 + $0x18] sm:$0xf]
        %v1563 = vld [vmem:[%s1450 + $0x1c] sm:$0xf]
        %v1564 = vld [vmem:[%s1450 + $0x20] sm:$0xf]
        %v1565 = vld [vmem:[%s1450 + $0x24] sm:$0xf]
        %v1566 = vld [vmem:[%s1450 + $0x28] sm:$0xf]
        %v1567 = vld [vmem:[%s1450 + $0x2c] sm:$0xf]
        %v1568 = vld [vmem:[%s1450 + $0x30] sm:$0xf]
        %v1569 = vld [vmem:[%s1450 + $0x34] sm:$0xf]
        %v1570 = vld [vmem:[%s1450 + $0x38] sm:$0xf]
        %v1571 = vld [vmem:[%s1450 + $0x3c] sm:$0xf]
        %v1572 = vld [vmem:[%s1450 + $0x40] sm:$0xf]
        %v1573 = vld [vmem:[%s1450 + $0x44] sm:$0xf]
        %v1574 = vld [vmem:[%s1450 + $0x48] sm:$0xf]
        %v1575 = vld [vmem:[%s1450 + $0x4c] sm:$0xf]
        %v1576 = vld [vmem:[%s1450 + $0x50] sm:$0xf]
        %v1577 = vld [vmem:[%s1450 + $0x54] sm:$0xf]
        %v1578 = vld [vmem:[%s1450 + $0x58] sm:$0xf]
        %v1579 = vld [vmem:[%s1450 + $0x5c] sm:$0xf]
        %v1580 = vld [vmem:[%s1450 + $0x60] sm:$0xf]
        %v1581 = vld [vmem:[%s1450 + $0x64] sm:$0xf]
        %v1582 = vld [vmem:[%s1450 + $0x68] sm:$0xf]
        %v1583 = vld [vmem:[%s1450 + $0x6c] sm:$0xf]
        %v1584 = vld [vmem:[%s1450 + $0x70] sm:$0xf]
        %v1585 = vld [vmem:[%s1450 + $0x74] sm:$0xf]
        %v1586 = vld [vmem:[%s1450 + $0x78] sm:$0xf]
        %v1587 = vld [vmem:[%s1450 + $0x7c] sm:$0xf]
        %v1588 = vld [vmem:[%s1450 + $0x80] sm:$0xf]
        %v1589 = vld [vmem:[%s1450 + $0x84] sm:$0xf]
        %v1590 = vld [vmem:[%s1450 + $0x88] sm:$0xf]
        %v1591 = vld [vmem:[%s1450 + $0x8c] sm:$0xf]
        %v1592 = vld [vmem:[%s1450 + $0x90] sm:$0xf]
        %v1593 = vld [vmem:[%s1450 + $0x94] sm:$0xf]
        %v1594 = vld [vmem:[%s1450 + $0x98] sm:$0xf]
        %v1595 = vld [vmem:[%s1450 + $0x9c] sm:$0xf]
        %v1596 = vld [vmem:[%s1450 + $0xa0] sm:$0xf]
        %v1597 = vld [vmem:[%s1450 + $0xa4] sm:$0xf]
        %v1598 = vld [vmem:[%s1450 + $0xa8] sm:$0xf]
        %v1599 = vld [vmem:[%s1450 + $0xac] sm:$0xf]
        %v1600 = vld [vmem:[%s1450 + $0xb0] sm:$0xf]
        %v1601 = vld [vmem:[%s1450 + $0xb4] sm:$0xf]
        %v1602 = vld [vmem:[%s1450 + $0xb8] sm:$0xf]
        %v1603 = vld [vmem:[%s1450 + $0xbc] sm:$0xf]
        %v1604 = vld [vmem:[%s1450 + $0xc0] sm:$0xf]
        %v1605 = vld [vmem:[%s1450 + $0xc4] sm:$0xf]
        %v1606 = vld [vmem:[%s1450 + $0xc8] sm:$0xf]
        %v1607 = vld [vmem:[%s1450 + $0xcc] sm:$0xf]
        %v1608 = vld [vmem:[%s1450 + $0xd0] sm:$0xf]
        %v1609 = vld [vmem:[%s1450 + $0xd4] sm:$0xf]
        %v1610 = vld [vmem:[%s1450 + $0xd8] sm:$0xf]
        %v1611 = vld [vmem:[%s1450 + $0xdc] sm:$0xf]
        %v1612 = vld [vmem:[%s1450 + $0xe0] sm:$0xf]
        %v1613 = vld [vmem:[%s1450 + $0xe4] sm:$0xf]
        %v1614 = vld [vmem:[%s1450 + $0xe8] sm:$0xf]
        %v1615 = vld [vmem:[%s1450 + $0xec] sm:$0xf]
        %v1616 = vld [vmem:[%s1450 + $0xf0] sm:$0xf]
        %v1617 = vld [vmem:[%s1450 + $0xf4] sm:$0xf]
        %v1618 = vld [vmem:[%s1450 + $0xf8] sm:$0xf]
        %v1619 = vld [vmem:[%s1450 + $0xfc] sm:$0xf]
        %v1620 = vld [vmem:[%s1450 + $0x100] sm:$0xf]
        %v1621 = vld [vmem:[%s1450 + $0x104] sm:$0xf]
        %v1622 = vld [vmem:[%s1450 + $0x108] sm:$0xf]
        %v1623 = vld [vmem:[%s1450 + $0x10c] sm:$0xf]
        %v1624 = vld [vmem:[%s1450 + $0x110] sm:$0xf]
        %v1625 = vld [vmem:[%s1450 + $0x114] sm:$0xf]
        %v1626 = vld [vmem:[%s1450 + $0x118] sm:$0xf]
        %v1627 = vld [vmem:[%s1450 + $0x11c] sm:$0xf]
        %v1628 = vld [vmem:[%s1450 + $0x120] sm:$0xf]
        %v1629 = vld [vmem:[%s1450 + $0x124] sm:$0xf]
        %v1630 = vld [vmem:[%s1450 + $0x128] sm:$0xf]
        %v1631 = vld [vmem:[%s1450 + $0x12c] sm:$0xf]
        %v1632 = vld [vmem:[%s1450 + $0x130] sm:$0xf]
        %v1633 = vld [vmem:[%s1450 + $0x134] sm:$0xf]
        %v1634 = vld [vmem:[%s1450 + $0x138] sm:$0xf]
        %v1635 = vld [vmem:[%s1450 + $0x13c] sm:$0xf]
        %v1636 = vld [vmem:[%s1450 + $0x140] sm:$0xf]
        %v1637 = vld [vmem:[%s1450 + $0x144] sm:$0xf]
        %v1638 = vld [vmem:[%s1450 + $0x148] sm:$0xf]
        %v1639 = vld [vmem:[%s1450 + $0x14c] sm:$0xf]
        %v1640 = vld [vmem:[%s1450 + $0x150] sm:$0xf]
        %v1641 = vld [vmem:[%s1450 + $0x154] sm:$0xf]
        %v1642 = vld [vmem:[%s1450 + $0x158] sm:$0xf]
        %v1643 = vld [vmem:[%s1450 + $0x15c] sm:$0xf]
        %v1644 = vld [vmem:[%s1450 + $0x160] sm:$0xf]
        %v1645 = vld [vmem:[%s1450 + $0x164] sm:$0xf]
        %v1646 = vld [vmem:[%s1450 + $0x168] sm:$0xf]
        %v1647 = vld [vmem:[%s1450 + $0x16c] sm:$0xf]
        %v1648 = vld [vmem:[%s1450 + $0x170] sm:$0xf]
        %v1649 = vld [vmem:[%s1450 + $0x174] sm:$0xf]
        %v1650 = vld [vmem:[%s1450 + $0x178] sm:$0xf]
        %v1651 = vld [vmem:[%s1450 + $0x17c] sm:$0xf]
        %v1652 = vld [vmem:[%s1450 + $0x180] sm:$0xf]
        %v1653 = vld [vmem:[%s1450 + $0x184] sm:$0xf]
        %v1654 = vld [vmem:[%s1450 + $0x188] sm:$0xf]
        %v1655 = vld [vmem:[%s1450 + $0x18c] sm:$0xf]
        %v1656 = vld [vmem:[%s1450 + $0x190] sm:$0xf]
        %v1657 = vld [vmem:[%s1450 + $0x194] sm:$0xf]
        %v1658 = vld [vmem:[%s1450 + $0x198] sm:$0xf]
        %v1659 = vld [vmem:[%s1450 + $0x19c] sm:$0xf]
        %v1660 = vld [vmem:[%s1450 + $0x1a0] sm:$0xf]
        %v1661 = vld [vmem:[%s1450 + $0x1a4] sm:$0xf]
        %v1662 = vld [vmem:[%s1450 + $0x1a8] sm:$0xf]
        %v1663 = vld [vmem:[%s1450 + $0x1ac] sm:$0xf]
        %v1664 = vld [vmem:[%s1450 + $0x1b0] sm:$0xf]
        %v1665 = vld [vmem:[%s1450 + $0x1b4] sm:$0xf]
        %v1666 = vld [vmem:[%s1450 + $0x1b8] sm:$0xf]
        %v1667 = vld [vmem:[%s1450 + $0x1bc] sm:$0xf]
        %v1668 = vld [vmem:[%s1450 + $0x1c0] sm:$0xf]
        %v1669 = vld [vmem:[%s1450 + $0x1c4] sm:$0xf]
        %v1670 = vld [vmem:[%s1450 + $0x1c8] sm:$0xf]
        %v1671 = vld [vmem:[%s1450 + $0x1cc] sm:$0xf]
        %v1672 = vld [vmem:[%s1450 + $0x1d0] sm:$0xf]
        %v1673 = vld [vmem:[%s1450 + $0x1d4] sm:$0xf]
        %v1674 = vld [vmem:[%s1450 + $0x1d8] sm:$0xf]
        %v1675 = vld [vmem:[%s1450 + $0x1dc] sm:$0xf]
        %v1676 = vld [vmem:[%s1450 + $0x1e0] sm:$0xf]
        %v1677 = vld [vmem:[%s1450 + $0x1e4] sm:$0xf]
        %v1678 = vld [vmem:[%s1450 + $0x1e8] sm:$0xf]
        %v1679 = vld [vmem:[%s1450 + $0x1ec] sm:$0xf]
        %v1680 = vld [vmem:[%s1450 + $0x1f0] sm:$0xf]
        %v1681 = vld [vmem:[%s1450 + $0x1f4] sm:$0xf]
        %v1682 = vld [vmem:[%s1450 + $0x1f8] sm:$0xf]
        %v1683 = vld [vmem:[%s1450 + $0x1fc] sm:$0xf]
        %v1684 = vunpack.c.l.bf16 %v1556
        %v1685 = vunpack.c.l.bf16 %v1557
        %v1686 = vunpack.c.l.bf16 %v1558
        %v1687 = vunpack.c.l.bf16 %v1559
        %v1688 = vunpack.c.l.bf16 %v1560
        %v1689 = vunpack.c.l.bf16 %v1561
        %v1690 = vunpack.c.l.bf16 %v1562
        %v1691 = vunpack.c.l.bf16 %v1563
        %v1692 = vunpack.c.l.bf16 %v1564
        %v1693 = vunpack.c.l.bf16 %v1565
        %v1694 = vunpack.c.l.bf16 %v1566
        %v1695 = vunpack.c.l.bf16 %v1567
        %v1696 = vunpack.c.l.bf16 %v1568
        %v1697 = vunpack.c.l.bf16 %v1569
        %v1698 = vunpack.c.l.bf16 %v1570
        %v1699 = vunpack.c.l.bf16 %v1571
        %v1700 = vunpack.c.l.bf16 %v1572
        %v1701 = vunpack.c.l.bf16 %v1573
        %v1702 = vunpack.c.l.bf16 %v1574
        %v1703 = vunpack.c.l.bf16 %v1575
        %v1704 = vunpack.c.l.bf16 %v1576
        %v1705 = vunpack.c.l.bf16 %v1577
        %v1706 = vunpack.c.l.bf16 %v1578
        %v1707 = vunpack.c.l.bf16 %v1579
        %v1708 = vunpack.c.l.bf16 %v1580
        %v1709 = vunpack.c.l.bf16 %v1581
        %v1710 = vunpack.c.l.bf16 %v1582
        %v1711 = vunpack.c.l.bf16 %v1583
        %v1712 = vunpack.c.l.bf16 %v1584
        %v1713 = vunpack.c.l.bf16 %v1585
        %v1714 = vunpack.c.l.bf16 %v1586
        %v1715 = vunpack.c.l.bf16 %v1587
        %v1716 = vunpack.c.l.bf16 %v1588
        %v1717 = vunpack.c.l.bf16 %v1589
        %v1718 = vunpack.c.l.bf16 %v1590
        %v1719 = vunpack.c.l.bf16 %v1591
        %v1720 = vunpack.c.l.bf16 %v1592
        %v1721 = vunpack.c.l.bf16 %v1593
        %v1722 = vunpack.c.l.bf16 %v1594
        %v1723 = vunpack.c.l.bf16 %v1595
        %v1724 = vunpack.c.l.bf16 %v1596
        %v1725 = vunpack.c.l.bf16 %v1597
        %v1726 = vunpack.c.l.bf16 %v1598
        %v1727 = vunpack.c.l.bf16 %v1599
        %v1728 = vunpack.c.l.bf16 %v1600
        %v1729 = vunpack.c.l.bf16 %v1601
        %v1730 = vunpack.c.l.bf16 %v1602
        %v1731 = vunpack.c.l.bf16 %v1603
        %v1732 = vunpack.c.l.bf16 %v1604
        %v1733 = vunpack.c.l.bf16 %v1605
        %v1734 = vunpack.c.l.bf16 %v1606
        %v1735 = vunpack.c.l.bf16 %v1607
        %v1736 = vunpack.c.l.bf16 %v1608
        %v1737 = vunpack.c.l.bf16 %v1609
        %v1738 = vunpack.c.l.bf16 %v1610
        %v1739 = vunpack.c.l.bf16 %v1611
        %v1740 = vunpack.c.l.bf16 %v1612
        %v1741 = vunpack.c.l.bf16 %v1613
        %v1742 = vunpack.c.l.bf16 %v1614
        %v1743 = vunpack.c.l.bf16 %v1615
        %v1744 = vunpack.c.l.bf16 %v1616
        %v1745 = vunpack.c.l.bf16 %v1617
        %v1746 = vunpack.c.l.bf16 %v1618
        %v1747 = vunpack.c.l.bf16 %v1619
        %v1748 = vunpack.c.l.bf16 %v1620
        %v1749 = vunpack.c.l.bf16 %v1621
        %v1750 = vunpack.c.l.bf16 %v1622
        %v1751 = vunpack.c.l.bf16 %v1623
        %v1752 = vunpack.c.l.bf16 %v1624
        %v1753 = vunpack.c.l.bf16 %v1625
        %v1754 = vunpack.c.l.bf16 %v1626
        %v1755 = vunpack.c.l.bf16 %v1627
        %v1756 = vunpack.c.l.bf16 %v1628
        %v1757 = vunpack.c.l.bf16 %v1629
        %v1758 = vunpack.c.l.bf16 %v1630
        %v1759 = vunpack.c.l.bf16 %v1631
        %v1760 = vunpack.c.l.bf16 %v1632
        %v1761 = vunpack.c.l.bf16 %v1633
        %v1762 = vunpack.c.l.bf16 %v1634
        %v1763 = vunpack.c.l.bf16 %v1635
        %v1764 = vunpack.c.l.bf16 %v1636
        %v1765 = vunpack.c.l.bf16 %v1637
        %v1766 = vunpack.c.l.bf16 %v1638
        %v1767 = vunpack.c.l.bf16 %v1639
        %v1768 = vunpack.c.l.bf16 %v1640
        %v1769 = vunpack.c.l.bf16 %v1641
        %v1770 = vunpack.c.l.bf16 %v1642
        %v1771 = vunpack.c.l.bf16 %v1643
        %v1772 = vunpack.c.l.bf16 %v1644
        %v1773 = vunpack.c.l.bf16 %v1645
        %v1774 = vunpack.c.l.bf16 %v1646
        %v1775 = vunpack.c.l.bf16 %v1647
        %v1776 = vunpack.c.l.bf16 %v1648
        %v1777 = vunpack.c.l.bf16 %v1649
        %v1778 = vunpack.c.l.bf16 %v1650
        %v1779 = vunpack.c.l.bf16 %v1651
        %v1780 = vunpack.c.l.bf16 %v1652
        %v1781 = vunpack.c.l.bf16 %v1653
        %v1782 = vunpack.c.l.bf16 %v1654
        %v1783 = vunpack.c.l.bf16 %v1655
        %v1784 = vunpack.c.l.bf16 %v1656
        %v1785 = vunpack.c.l.bf16 %v1657
        %v1786 = vunpack.c.l.bf16 %v1658
        %v1787 = vunpack.c.l.bf16 %v1659
        %v1788 = vunpack.c.l.bf16 %v1660
        %v1789 = vunpack.c.l.bf16 %v1661
        %v1790 = vunpack.c.l.bf16 %v1662
        %v1791 = vunpack.c.l.bf16 %v1663
        %v1792 = vunpack.c.l.bf16 %v1664
        %v1793 = vunpack.c.l.bf16 %v1665
        %v1794 = vunpack.c.l.bf16 %v1666
        %v1795 = vunpack.c.l.bf16 %v1667
        %v1796 = vunpack.c.l.bf16 %v1668
        %v1797 = vunpack.c.l.bf16 %v1669
        %v1798 = vunpack.c.l.bf16 %v1670
        %v1799 = vunpack.c.l.bf16 %v1671
        %v1800 = vunpack.c.l.bf16 %v1672
        %v1801 = vunpack.c.l.bf16 %v1673
        %v1802 = vunpack.c.l.bf16 %v1674
        %v1803 = vunpack.c.l.bf16 %v1675
        %v1804 = vunpack.c.l.bf16 %v1676
        %v1805 = vunpack.c.l.bf16 %v1677
        %v1806 = vunpack.c.l.bf16 %v1678
        %v1807 = vunpack.c.l.bf16 %v1679
        %v1808 = vunpack.c.l.bf16 %v1680
        %v1809 = vunpack.c.l.bf16 %v1681
        %v1810 = vunpack.c.l.bf16 %v1682
        %v1811 = vunpack.c.l.bf16 %v1683
        %v1812 = vld [vmem:[%s1457] sm:$0xf]
        %v1813 = vld [vmem:[%s1457 + $0x4] sm:$0xf]
        %v1814 = vld [vmem:[%s1457 + $0x8] sm:$0xf]
        %v1815 = vld [vmem:[%s1457 + $0xc] sm:$0xf]
        %v1816 = vld [vmem:[%s1457 + $0x10] sm:$0xf]
        %v1817 = vld [vmem:[%s1457 + $0x14] sm:$0xf]
        %v1818 = vld [vmem:[%s1457 + $0x18] sm:$0xf]
        %v1819 = vld [vmem:[%s1457 + $0x1c] sm:$0xf]
        %v1820 = vld [vmem:[%s1457 + $0x20] sm:$0xf]
        %v1821 = vld [vmem:[%s1457 + $0x24] sm:$0xf]
        %v1822 = vld [vmem:[%s1457 + $0x28] sm:$0xf]
        %v1823 = vld [vmem:[%s1457 + $0x2c] sm:$0xf]
        %v1824 = vld [vmem:[%s1457 + $0x30] sm:$0xf]
        %v1825 = vld [vmem:[%s1457 + $0x34] sm:$0xf]
        %v1826 = vld [vmem:[%s1457 + $0x38] sm:$0xf]
        %v1827 = vld [vmem:[%s1457 + $0x3c] sm:$0xf]
        %v1828 = vld [vmem:[%s1457 + $0x40] sm:$0xf]
        %v1829 = vld [vmem:[%s1457 + $0x44] sm:$0xf]
        %v1830 = vld [vmem:[%s1457 + $0x48] sm:$0xf]
        %v1831 = vld [vmem:[%s1457 + $0x4c] sm:$0xf]
        %v1832 = vld [vmem:[%s1457 + $0x50] sm:$0xf]
        %v1833 = vld [vmem:[%s1457 + $0x54] sm:$0xf]
        %v1834 = vld [vmem:[%s1457 + $0x58] sm:$0xf]
        %v1835 = vld [vmem:[%s1457 + $0x5c] sm:$0xf]
        %v1836 = vld [vmem:[%s1457 + $0x60] sm:$0xf]
        %v1837 = vld [vmem:[%s1457 + $0x64] sm:$0xf]
        %v1838 = vld [vmem:[%s1457 + $0x68] sm:$0xf]
        %v1839 = vld [vmem:[%s1457 + $0x6c] sm:$0xf]
        %v1840 = vld [vmem:[%s1457 + $0x70] sm:$0xf]
        %v1841 = vld [vmem:[%s1457 + $0x74] sm:$0xf]
        %v1842 = vld [vmem:[%s1457 + $0x78] sm:$0xf]
        %v1843 = vld [vmem:[%s1457 + $0x7c] sm:$0xf]
        %v1844 = vld [vmem:[%s1457 + $0x80] sm:$0xf]
        %v1845 = vld [vmem:[%s1457 + $0x84] sm:$0xf]
        %v1846 = vld [vmem:[%s1457 + $0x88] sm:$0xf]
        %v1847 = vld [vmem:[%s1457 + $0x8c] sm:$0xf]
        %v1848 = vld [vmem:[%s1457 + $0x90] sm:$0xf]
        %v1849 = vld [vmem:[%s1457 + $0x94] sm:$0xf]
        %v1850 = vld [vmem:[%s1457 + $0x98] sm:$0xf]
        %v1851 = vld [vmem:[%s1457 + $0x9c] sm:$0xf]
        %v1852 = vld [vmem:[%s1457 + $0xa0] sm:$0xf]
        %v1853 = vld [vmem:[%s1457 + $0xa4] sm:$0xf]
        %v1854 = vld [vmem:[%s1457 + $0xa8] sm:$0xf]
        %v1855 = vld [vmem:[%s1457 + $0xac] sm:$0xf]
        %v1856 = vld [vmem:[%s1457 + $0xb0] sm:$0xf]
        %v1857 = vld [vmem:[%s1457 + $0xb4] sm:$0xf]
        %v1858 = vld [vmem:[%s1457 + $0xb8] sm:$0xf]
        %v1859 = vld [vmem:[%s1457 + $0xbc] sm:$0xf]
        %v1860 = vld [vmem:[%s1457 + $0xc0] sm:$0xf]
        %v1861 = vld [vmem:[%s1457 + $0xc4] sm:$0xf]
        %v1862 = vld [vmem:[%s1457 + $0xc8] sm:$0xf]
        %v1863 = vld [vmem:[%s1457 + $0xcc] sm:$0xf]
        %v1864 = vld [vmem:[%s1457 + $0xd0] sm:$0xf]
        %v1865 = vld [vmem:[%s1457 + $0xd4] sm:$0xf]
        %v1866 = vld [vmem:[%s1457 + $0xd8] sm:$0xf]
        %v1867 = vld [vmem:[%s1457 + $0xdc] sm:$0xf]
        %v1868 = vld [vmem:[%s1457 + $0xe0] sm:$0xf]
        %v1869 = vld [vmem:[%s1457 + $0xe4] sm:$0xf]
        %v1870 = vld [vmem:[%s1457 + $0xe8] sm:$0xf]
        %v1871 = vld [vmem:[%s1457 + $0xec] sm:$0xf]
        %v1872 = vld [vmem:[%s1457 + $0xf0] sm:$0xf]
        %v1873 = vld [vmem:[%s1457 + $0xf4] sm:$0xf]
        %v1874 = vld [vmem:[%s1457 + $0xf8] sm:$0xf]
        %v1875 = vld [vmem:[%s1457 + $0xfc] sm:$0xf]
        %v1876 = vld [vmem:[%s1457 + $0x100] sm:$0xf]
        %v1877 = vld [vmem:[%s1457 + $0x104] sm:$0xf]
        %v1878 = vld [vmem:[%s1457 + $0x108] sm:$0xf]
        %v1879 = vld [vmem:[%s1457 + $0x10c] sm:$0xf]
        %v1880 = vld [vmem:[%s1457 + $0x110] sm:$0xf]
        %v1881 = vld [vmem:[%s1457 + $0x114] sm:$0xf]
        %v1882 = vld [vmem:[%s1457 + $0x118] sm:$0xf]
        %v1883 = vld [vmem:[%s1457 + $0x11c] sm:$0xf]
        %v1884 = vld [vmem:[%s1457 + $0x120] sm:$0xf]
        %v1885 = vld [vmem:[%s1457 + $0x124] sm:$0xf]
        %v1886 = vld [vmem:[%s1457 + $0x128] sm:$0xf]
        %v1887 = vld [vmem:[%s1457 + $0x12c] sm:$0xf]
        %v1888 = vld [vmem:[%s1457 + $0x130] sm:$0xf]
        %v1889 = vld [vmem:[%s1457 + $0x134] sm:$0xf]
        %v1890 = vld [vmem:[%s1457 + $0x138] sm:$0xf]
        %v1891 = vld [vmem:[%s1457 + $0x13c] sm:$0xf]
        %v1892 = vld [vmem:[%s1457 + $0x140] sm:$0xf]
        %v1893 = vld [vmem:[%s1457 + $0x144] sm:$0xf]
        %v1894 = vld [vmem:[%s1457 + $0x148] sm:$0xf]
        %v1895 = vld [vmem:[%s1457 + $0x14c] sm:$0xf]
        %v1896 = vld [vmem:[%s1457 + $0x150] sm:$0xf]
        %v1897 = vld [vmem:[%s1457 + $0x154] sm:$0xf]
        %v1898 = vld [vmem:[%s1457 + $0x158] sm:$0xf]
        %v1899 = vld [vmem:[%s1457 + $0x15c] sm:$0xf]
        %v1900 = vld [vmem:[%s1457 + $0x160] sm:$0xf]
        %v1901 = vld [vmem:[%s1457 + $0x164] sm:$0xf]
        %v1902 = vld [vmem:[%s1457 + $0x168] sm:$0xf]
        %v1903 = vld [vmem:[%s1457 + $0x16c] sm:$0xf]
        %v1904 = vld [vmem:[%s1457 + $0x170] sm:$0xf]
        %v1905 = vld [vmem:[%s1457 + $0x174] sm:$0xf]
        %v1906 = vld [vmem:[%s1457 + $0x178] sm:$0xf]
        %v1907 = vld [vmem:[%s1457 + $0x17c] sm:$0xf]
        %v1908 = vld [vmem:[%s1457 + $0x180] sm:$0xf]
        %v1909 = vld [vmem:[%s1457 + $0x184] sm:$0xf]
        %v1910 = vld [vmem:[%s1457 + $0x188] sm:$0xf]
        %v1911 = vld [vmem:[%s1457 + $0x18c] sm:$0xf]
        %v1912 = vld [vmem:[%s1457 + $0x190] sm:$0xf]
        %v1913 = vld [vmem:[%s1457 + $0x194] sm:$0xf]
        %v1914 = vld [vmem:[%s1457 + $0x198] sm:$0xf]
        %v1915 = vld [vmem:[%s1457 + $0x19c] sm:$0xf]
        %v1916 = vld [vmem:[%s1457 + $0x1a0] sm:$0xf]
        %v1917 = vld [vmem:[%s1457 + $0x1a4] sm:$0xf]
        %v1918 = vld [vmem:[%s1457 + $0x1a8] sm:$0xf]
        %v1919 = vld [vmem:[%s1457 + $0x1ac] sm:$0xf]
        %v1920 = vld [vmem:[%s1457 + $0x1b0] sm:$0xf]
        %v1921 = vld [vmem:[%s1457 + $0x1b4] sm:$0xf]
        %v1922 = vld [vmem:[%s1457 + $0x1b8] sm:$0xf]
        %v1923 = vld [vmem:[%s1457 + $0x1bc] sm:$0xf]
        %v1924 = vld [vmem:[%s1457 + $0x1c0] sm:$0xf]
        %v1925 = vld [vmem:[%s1457 + $0x1c4] sm:$0xf]
        %v1926 = vld [vmem:[%s1457 + $0x1c8] sm:$0xf]
        %v1927 = vld [vmem:[%s1457 + $0x1cc] sm:$0xf]
        %v1928 = vld [vmem:[%s1457 + $0x1d0] sm:$0xf]
        %v1929 = vld [vmem:[%s1457 + $0x1d4] sm:$0xf]
        %v1930 = vld [vmem:[%s1457 + $0x1d8] sm:$0xf]
        %v1931 = vld [vmem:[%s1457 + $0x1dc] sm:$0xf]
        %v1932 = vld [vmem:[%s1457 + $0x1e0] sm:$0xf]
        %v1933 = vld [vmem:[%s1457 + $0x1e4] sm:$0xf]
        %v1934 = vld [vmem:[%s1457 + $0x1e8] sm:$0xf]
        %v1935 = vld [vmem:[%s1457 + $0x1ec] sm:$0xf]
        %v1936 = vld [vmem:[%s1457 + $0x1f0] sm:$0xf]
        %v1937 = vld [vmem:[%s1457 + $0x1f4] sm:$0xf]
        %v1938 = vld [vmem:[%s1457 + $0x1f8] sm:$0xf]
        %v1939 = vld [vmem:[%s1457 + $0x1fc] sm:$0xf]
        %v1940 = vunpack.c.l.bf16 %v1812
        %v1941 = vunpack.c.l.bf16 %v1813
        %v1942 = vunpack.c.l.bf16 %v1814
        %v1943 = vunpack.c.l.bf16 %v1815
        %v1944 = vunpack.c.l.bf16 %v1816
        %v1945 = vunpack.c.l.bf16 %v1817
        %v1946 = vunpack.c.l.bf16 %v1818
        %v1947 = vunpack.c.l.bf16 %v1819
        %v1948 = vunpack.c.l.bf16 %v1820
        %v1949 = vunpack.c.l.bf16 %v1821
        %v1950 = vunpack.c.l.bf16 %v1822
        %v1951 = vunpack.c.l.bf16 %v1823
        %v1952 = vunpack.c.l.bf16 %v1824
        %v1953 = vunpack.c.l.bf16 %v1825
        %v1954 = vunpack.c.l.bf16 %v1826
        %v1955 = vunpack.c.l.bf16 %v1827
        %v1956 = vunpack.c.l.bf16 %v1828
        %v1957 = vunpack.c.l.bf16 %v1829
        %v1958 = vunpack.c.l.bf16 %v1830
        %v1959 = vunpack.c.l.bf16 %v1831
        %v1960 = vunpack.c.l.bf16 %v1832
        %v1961 = vunpack.c.l.bf16 %v1833
        %v1962 = vunpack.c.l.bf16 %v1834
        %v1963 = vunpack.c.l.bf16 %v1835
        %v1964 = vunpack.c.l.bf16 %v1836
        %v1965 = vunpack.c.l.bf16 %v1837
        %v1966 = vunpack.c.l.bf16 %v1838
        %v1967 = vunpack.c.l.bf16 %v1839
        %v1968 = vunpack.c.l.bf16 %v1840
        %v1969 = vunpack.c.l.bf16 %v1841
        %v1970 = vunpack.c.l.bf16 %v1842
        %v1971 = vunpack.c.l.bf16 %v1843
        %v1972 = vunpack.c.l.bf16 %v1844
        %v1973 = vunpack.c.l.bf16 %v1845
        %v1974 = vunpack.c.l.bf16 %v1846
        %v1975 = vunpack.c.l.bf16 %v1847
        %v1976 = vunpack.c.l.bf16 %v1848
        %v1977 = vunpack.c.l.bf16 %v1849
        %v1978 = vunpack.c.l.bf16 %v1850
        %v1979 = vunpack.c.l.bf16 %v1851
        %v1980 = vunpack.c.l.bf16 %v1852
        %v1981 = vunpack.c.l.bf16 %v1853
        %v1982 = vunpack.c.l.bf16 %v1854
        %v1983 = vunpack.c.l.bf16 %v1855
        %v1984 = vunpack.c.l.bf16 %v1856
        %v1985 = vunpack.c.l.bf16 %v1857
        %v1986 = vunpack.c.l.bf16 %v1858
        %v1987 = vunpack.c.l.bf16 %v1859
        %v1988 = vunpack.c.l.bf16 %v1860
        %v1989 = vunpack.c.l.bf16 %v1861
        %v1990 = vunpack.c.l.bf16 %v1862
        %v1991 = vunpack.c.l.bf16 %v1863
        %v1992 = vunpack.c.l.bf16 %v1864
        %v1993 = vunpack.c.l.bf16 %v1865
        %v1994 = vunpack.c.l.bf16 %v1866
        %v1995 = vunpack.c.l.bf16 %v1867
        %v1996 = vunpack.c.l.bf16 %v1868
        %v1997 = vunpack.c.l.bf16 %v1869
        %v1998 = vunpack.c.l.bf16 %v1870
        %v1999 = vunpack.c.l.bf16 %v1871
        %v2000 = vunpack.c.l.bf16 %v1872
        %v2001 = vunpack.c.l.bf16 %v1873
        %v2002 = vunpack.c.l.bf16 %v1874
        %v2003 = vunpack.c.l.bf16 %v1875
        %v2004 = vunpack.c.l.bf16 %v1876
        %v2005 = vunpack.c.l.bf16 %v1877
        %v2006 = vunpack.c.l.bf16 %v1878
        %v2007 = vunpack.c.l.bf16 %v1879
        %v2008 = vunpack.c.l.bf16 %v1880
        %v2009 = vunpack.c.l.bf16 %v1881
        %v2010 = vunpack.c.l.bf16 %v1882
        %v2011 = vunpack.c.l.bf16 %v1883
        %v2012 = vunpack.c.l.bf16 %v1884
        %v2013 = vunpack.c.l.bf16 %v1885
        %v2014 = vunpack.c.l.bf16 %v1886
        %v2015 = vunpack.c.l.bf16 %v1887
        %v2016 = vunpack.c.l.bf16 %v1888
        %v2017 = vunpack.c.l.bf16 %v1889
        %v2018 = vunpack.c.l.bf16 %v1890
        %v2019 = vunpack.c.l.bf16 %v1891
        %v2020 = vunpack.c.l.bf16 %v1892
        %v2021 = vunpack.c.l.bf16 %v1893
        %v2022 = vunpack.c.l.bf16 %v1894
        %v2023 = vunpack.c.l.bf16 %v1895
        %v2024 = vunpack.c.l.bf16 %v1896
        %v2025 = vunpack.c.l.bf16 %v1897
        %v2026 = vunpack.c.l.bf16 %v1898
        %v2027 = vunpack.c.l.bf16 %v1899
        %v2028 = vunpack.c.l.bf16 %v1900
        %v2029 = vunpack.c.l.bf16 %v1901
        %v2030 = vunpack.c.l.bf16 %v1902
        %v2031 = vunpack.c.l.bf16 %v1903
        %v2032 = vunpack.c.l.bf16 %v1904
        %v2033 = vunpack.c.l.bf16 %v1905
        %v2034 = vunpack.c.l.bf16 %v1906
        %v2035 = vunpack.c.l.bf16 %v1907
        %v2036 = vunpack.c.l.bf16 %v1908
        %v2037 = vunpack.c.l.bf16 %v1909
        %v2038 = vunpack.c.l.bf16 %v1910
        %v2039 = vunpack.c.l.bf16 %v1911
        %v2040 = vunpack.c.l.bf16 %v1912
        %v2041 = vunpack.c.l.bf16 %v1913
        %v2042 = vunpack.c.l.bf16 %v1914
        %v2043 = vunpack.c.l.bf16 %v1915
        %v2044 = vunpack.c.l.bf16 %v1916
        %v2045 = vunpack.c.l.bf16 %v1917
        %v2046 = vunpack.c.l.bf16 %v1918
        %v2047 = vunpack.c.l.bf16 %v1919
        %v2048 = vunpack.c.l.bf16 %v1920
        %v2049 = vunpack.c.l.bf16 %v1921
        %v2050 = vunpack.c.l.bf16 %v1922
        %v2051 = vunpack.c.l.bf16 %v1923
        %v2052 = vunpack.c.l.bf16 %v1924
        %v2053 = vunpack.c.l.bf16 %v1925
        %v2054 = vunpack.c.l.bf16 %v1926
        %v2055 = vunpack.c.l.bf16 %v1927
        %v2056 = vunpack.c.l.bf16 %v1928
        %v2057 = vunpack.c.l.bf16 %v1929
        %v2058 = vunpack.c.l.bf16 %v1930
        %v2059 = vunpack.c.l.bf16 %v1931
        %v2060 = vunpack.c.l.bf16 %v1932
        %v2061 = vunpack.c.l.bf16 %v1933
        %v2062 = vunpack.c.l.bf16 %v1934
        %v2063 = vunpack.c.l.bf16 %v1935
        %v2064 = vunpack.c.l.bf16 %v1936
        %v2065 = vunpack.c.l.bf16 %v1937
        %v2066 = vunpack.c.l.bf16 %v1938
        %v2067 = vunpack.c.l.bf16 %v1939
        %v2068 = vld [vmem:[#allocation2] sm:$0xff]
        %v2069 = vperm.slane %v1554, 0
        %v2070 = vlaneseq
        %v2071 = vshrl.u32 %v2070, 7
        %2073 = vset.pattern.permute.xlu0 %v2071
        %2074 = vperm.xlu0 %2073, %v2069
        %v2075 = vpop.permute.xlu0 %2074
        %v2076 = vlaneseq
        %v2077 = vshrl.u32 %v2076, 7
        %v2078 = vadd.s32 %v2077, 8
        %2079 = vset.pattern.permute.xlu0 %v2078
        %2080 = vperm.xlu0 %2079, %v2069
        %v2081 = vpop.permute.xlu0 %2080
        %v2082 = vlaneseq
        %v2083 = vshrl.u32 %v2082, 7
        %v2084 = vadd.s32 %v2083, 16
        %2085 = vset.pattern.permute.xlu0 %v2084
        %2086 = vperm.xlu0 %2085, %v2069
        %v2087 = vpop.permute.xlu0 %2086
        %v2088 = vlaneseq
        %v2089 = vshrl.u32 %v2088, 7
        %v2090 = vadd.s32 %v2089, 24
        %2091 = vset.pattern.permute.xlu0 %v2090
        %2092 = vperm.xlu0 %2091, %v2069
        %v2093 = vpop.permute.xlu0 %2092
        %v2094 = vlaneseq
        %v2095 = vshrl.u32 %v2094, 7
        %v2096 = vadd.s32 %v2095, 32
        %2097 = vset.pattern.permute.xlu0 %v2096
        %2098 = vperm.xlu0 %2097, %v2069
        %v2099 = vpop.permute.xlu0 %2098
        %v2100 = vlaneseq
        %v2101 = vshrl.u32 %v2100, 7
        %v2102 = vadd.s32 %v2101, 40
        %2103 = vset.pattern.permute.xlu0 %v2102
        %2104 = vperm.xlu0 %2103, %v2069
        %v2105 = vpop.permute.xlu0 %2104
        %v2106 = vlaneseq
        %v2107 = vshrl.u32 %v2106, 7
        %v2108 = vadd.s32 %v2107, 48
        %2109 = vset.pattern.permute.xlu0 %v2108
        %2110 = vperm.xlu0 %2109, %v2069
        %v2111 = vpop.permute.xlu0 %2110
        %v2112 = vlaneseq
        %v2113 = vshrl.u32 %v2112, 7
        %v2114 = vadd.s32 %v2113, 56
        %2115 = vset.pattern.permute.xlu0 %v2114
        %2116 = vperm.xlu0 %2115, %v2069
        %v2117 = vpop.permute.xlu0 %2116
        %v2118 = vlaneseq
        %v2119 = vshrl.u32 %v2118, 7
        %v2120 = vadd.s32 %v2119, 64
        %2121 = vset.pattern.permute.xlu0 %v2120
        %2122 = vperm.xlu0 %2121, %v2069
        %v2123 = vpop.permute.xlu0 %2122
        %v2124 = vlaneseq
        %v2125 = vshrl.u32 %v2124, 7
        %v2126 = vadd.s32 %v2125, 72
        %2127 = vset.pattern.permute.xlu0 %v2126
        %2128 = vperm.xlu0 %2127, %v2069
        %v2129 = vpop.permute.xlu0 %2128
        %v2130 = vlaneseq
        %v2131 = vshrl.u32 %v2130, 7
        %v2132 = vadd.s32 %v2131, 80
        %2133 = vset.pattern.permute.xlu0 %v2132
        %2134 = vperm.xlu0 %2133, %v2069
        %v2135 = vpop.permute.xlu0 %2134
        %v2136 = vlaneseq
        %v2137 = vshrl.u32 %v2136, 7
        %v2138 = vadd.s32 %v2137, 88
        %2139 = vset.pattern.permute.xlu0 %v2138
        %2140 = vperm.xlu0 %2139, %v2069
        %v2141 = vpop.permute.xlu0 %2140
        %v2142 = vlaneseq
        %v2143 = vshrl.u32 %v2142, 7
        %v2144 = vadd.s32 %v2143, 96
        %2145 = vset.pattern.permute.xlu0 %v2144
        %2146 = vperm.xlu0 %2145, %v2069
        %v2147 = vpop.permute.xlu0 %2146
        %v2148 = vlaneseq
        %v2149 = vshrl.u32 %v2148, 7
        %v2150 = vadd.s32 %v2149, 104
        %2151 = vset.pattern.permute.xlu0 %v2150
        %2152 = vperm.xlu0 %2151, %v2069
        %v2153 = vpop.permute.xlu0 %2152
        %v2154 = vlaneseq
        %v2155 = vshrl.u32 %v2154, 7
        %v2156 = vadd.s32 %v2155, 112
        %2157 = vset.pattern.permute.xlu0 %v2156
        %2158 = vperm.xlu0 %2157, %v2069
        %v2159 = vpop.permute.xlu0 %2158
        %v2160 = vlaneseq
        %v2161 = vshrl.u32 %v2160, 7
        %v2162 = vadd.s32 %v2161, 120
        %2163 = vset.pattern.permute.xlu0 %v2162
        %2164 = vperm.xlu0 %2163, %v2069
        %v2165 = vpop.permute.xlu0 %2164
        %v2166 = vperm.slane %v1554, 1
        %v2167 = vlaneseq
        %v2168 = vshrl.u32 %v2167, 7
        %2170 = vset.pattern.permute.xlu0 %v2168
        %2171 = vperm.xlu0 %2170, %v2166
        %v2172 = vpop.permute.xlu0 %2171
        %v2173 = vlaneseq
        %v2174 = vshrl.u32 %v2173, 7
        %v2175 = vadd.s32 %v2174, 8
        %2176 = vset.pattern.permute.xlu0 %v2175
        %2177 = vperm.xlu0 %2176, %v2166
        %v2178 = vpop.permute.xlu0 %2177
        %v2179 = vlaneseq
        %v2180 = vshrl.u32 %v2179, 7
        %v2181 = vadd.s32 %v2180, 16
        %2182 = vset.pattern.permute.xlu0 %v2181
        %2183 = vperm.xlu0 %2182, %v2166
        %v2184 = vpop.permute.xlu0 %2183
        %v2185 = vlaneseq
        %v2186 = vshrl.u32 %v2185, 7
        %v2187 = vadd.s32 %v2186, 24
        %2188 = vset.pattern.permute.xlu0 %v2187
        %2189 = vperm.xlu0 %2188, %v2166
        %v2190 = vpop.permute.xlu0 %2189
        %v2191 = vlaneseq
        %v2192 = vshrl.u32 %v2191, 7
        %v2193 = vadd.s32 %v2192, 32
        %2194 = vset.pattern.permute.xlu0 %v2193
        %2195 = vperm.xlu0 %2194, %v2166
        %v2196 = vpop.permute.xlu0 %2195
        %v2197 = vlaneseq
        %v2198 = vshrl.u32 %v2197, 7
        %v2199 = vadd.s32 %v2198, 40
        %2200 = vset.pattern.permute.xlu0 %v2199
        %2201 = vperm.xlu0 %2200, %v2166
        %v2202 = vpop.permute.xlu0 %2201
        %v2203 = vlaneseq
        %v2204 = vshrl.u32 %v2203, 7
        %v2205 = vadd.s32 %v2204, 48
        %2206 = vset.pattern.permute.xlu0 %v2205
        %2207 = vperm.xlu0 %2206, %v2166
        %v2208 = vpop.permute.xlu0 %2207
        %v2209 = vlaneseq
        %v2210 = vshrl.u32 %v2209, 7
        %v2211 = vadd.s32 %v2210, 56
        %2212 = vset.pattern.permute.xlu0 %v2211
        %2213 = vperm.xlu0 %2212, %v2166
        %v2214 = vpop.permute.xlu0 %2213
        %v2215 = vlaneseq
        %v2216 = vshrl.u32 %v2215, 7
        %v2217 = vadd.s32 %v2216, 64
        %2218 = vset.pattern.permute.xlu0 %v2217
        %2219 = vperm.xlu0 %2218, %v2166
        %v2220 = vpop.permute.xlu0 %2219
        %v2221 = vlaneseq
        %v2222 = vshrl.u32 %v2221, 7
        %v2223 = vadd.s32 %v2222, 72
        %2224 = vset.pattern.permute.xlu0 %v2223
        %2225 = vperm.xlu0 %2224, %v2166
        %v2226 = vpop.permute.xlu0 %2225
        %v2227 = vlaneseq
        %v2228 = vshrl.u32 %v2227, 7
        %v2229 = vadd.s32 %v2228, 80
        %2230 = vset.pattern.permute.xlu0 %v2229
        %2231 = vperm.xlu0 %2230, %v2166
        %v2232 = vpop.permute.xlu0 %2231
        %v2233 = vlaneseq
        %v2234 = vshrl.u32 %v2233, 7
        %v2235 = vadd.s32 %v2234, 88
        %2236 = vset.pattern.permute.xlu0 %v2235
        %2237 = vperm.xlu0 %2236, %v2166
        %v2238 = vpop.permute.xlu0 %2237
        %v2239 = vlaneseq
        %v2240 = vshrl.u32 %v2239, 7
        %v2241 = vadd.s32 %v2240, 96
        %2242 = vset.pattern.permute.xlu0 %v2241
        %2243 = vperm.xlu0 %2242, %v2166
        %v2244 = vpop.permute.xlu0 %2243
        %v2245 = vlaneseq
        %v2246 = vshrl.u32 %v2245, 7
        %v2247 = vadd.s32 %v2246, 104
        %2248 = vset.pattern.permute.xlu0 %v2247
        %2249 = vperm.xlu0 %2248, %v2166
        %v2250 = vpop.permute.xlu0 %2249
        %v2251 = vlaneseq
        %v2252 = vshrl.u32 %v2251, 7
        %v2253 = vadd.s32 %v2252, 112
        %2254 = vset.pattern.permute.xlu0 %v2253
        %2255 = vperm.xlu0 %2254, %v2166
        %v2256 = vpop.permute.xlu0 %2255
        %v2257 = vlaneseq
        %v2258 = vshrl.u32 %v2257, 7
        %v2259 = vadd.s32 %v2258, 120
        %2260 = vset.pattern.permute.xlu0 %v2259
        %2261 = vperm.xlu0 %2260, %v2166
        %v2262 = vpop.permute.xlu0 %2261
        %v2263 = vperm.slane %v1554, 2
        %v2264 = vlaneseq
        %v2265 = vshrl.u32 %v2264, 7
        %2267 = vset.pattern.permute.xlu0 %v2265
        %2268 = vperm.xlu0 %2267, %v2263
        %v2269 = vpop.permute.xlu0 %2268
        %v2270 = vlaneseq
        %v2271 = vshrl.u32 %v2270, 7
        %v2272 = vadd.s32 %v2271, 8
        %2273 = vset.pattern.permute.xlu0 %v2272
        %2274 = vperm.xlu0 %2273, %v2263
        %v2275 = vpop.permute.xlu0 %2274
        %v2276 = vlaneseq
        %v2277 = vshrl.u32 %v2276, 7
        %v2278 = vadd.s32 %v2277, 16
        %2279 = vset.pattern.permute.xlu0 %v2278
        %2280 = vperm.xlu0 %2279, %v2263
        %v2281 = vpop.permute.xlu0 %2280
        %v2282 = vlaneseq
        %v2283 = vshrl.u32 %v2282, 7
        %v2284 = vadd.s32 %v2283, 24
        %2285 = vset.pattern.permute.xlu0 %v2284
        %2286 = vperm.xlu0 %2285, %v2263
        %v2287 = vpop.permute.xlu0 %2286
        %v2288 = vlaneseq
        %v2289 = vshrl.u32 %v2288, 7
        %v2290 = vadd.s32 %v2289, 32
        %2291 = vset.pattern.permute.xlu0 %v2290
        %2292 = vperm.xlu0 %2291, %v2263
        %v2293 = vpop.permute.xlu0 %2292
        %v2294 = vlaneseq
        %v2295 = vshrl.u32 %v2294, 7
        %v2296 = vadd.s32 %v2295, 40
        %2297 = vset.pattern.permute.xlu0 %v2296
        %2298 = vperm.xlu0 %2297, %v2263
        %v2299 = vpop.permute.xlu0 %2298
        %v2300 = vlaneseq
        %v2301 = vshrl.u32 %v2300, 7
        %v2302 = vadd.s32 %v2301, 48
        %2303 = vset.pattern.permute.xlu0 %v2302
        %2304 = vperm.xlu0 %2303, %v2263
        %v2305 = vpop.permute.xlu0 %2304
        %v2306 = vlaneseq
        %v2307 = vshrl.u32 %v2306, 7
        %v2308 = vadd.s32 %v2307, 56
        %2309 = vset.pattern.permute.xlu0 %v2308
        %2310 = vperm.xlu0 %2309, %v2263
        %v2311 = vpop.permute.xlu0 %2310
        %v2312 = vlaneseq
        %v2313 = vshrl.u32 %v2312, 7
        %v2314 = vadd.s32 %v2313, 64
        %2315 = vset.pattern.permute.xlu0 %v2314
        %2316 = vperm.xlu0 %2315, %v2263
        %v2317 = vpop.permute.xlu0 %2316
        %v2318 = vlaneseq
        %v2319 = vshrl.u32 %v2318, 7
        %v2320 = vadd.s32 %v2319, 72
        %2321 = vset.pattern.permute.xlu0 %v2320
        %2322 = vperm.xlu0 %2321, %v2263
        %v2323 = vpop.permute.xlu0 %2322
        %v2324 = vlaneseq
        %v2325 = vshrl.u32 %v2324, 7
        %v2326 = vadd.s32 %v2325, 80
        %2327 = vset.pattern.permute.xlu0 %v2326
        %2328 = vperm.xlu0 %2327, %v2263
        %v2329 = vpop.permute.xlu0 %2328
        %v2330 = vlaneseq
        %v2331 = vshrl.u32 %v2330, 7
        %v2332 = vadd.s32 %v2331, 88
        %2333 = vset.pattern.permute.xlu0 %v2332
        %2334 = vperm.xlu0 %2333, %v2263
        %v2335 = vpop.permute.xlu0 %2334
        %v2336 = vlaneseq
        %v2337 = vshrl.u32 %v2336, 7
        %v2338 = vadd.s32 %v2337, 96
        %2339 = vset.pattern.permute.xlu0 %v2338
        %2340 = vperm.xlu0 %2339, %v2263
        %v2341 = vpop.permute.xlu0 %2340
        %v2342 = vlaneseq
        %v2343 = vshrl.u32 %v2342, 7
        %v2344 = vadd.s32 %v2343, 104
        %2345 = vset.pattern.permute.xlu0 %v2344
        %2346 = vperm.xlu0 %2345, %v2263
        %v2347 = vpop.permute.xlu0 %2346
        %v2348 = vlaneseq
        %v2349 = vshrl.u32 %v2348, 7
        %v2350 = vadd.s32 %v2349, 112
        %2351 = vset.pattern.permute.xlu0 %v2350
        %2352 = vperm.xlu0 %2351, %v2263
        %v2353 = vpop.permute.xlu0 %2352
        %v2354 = vlaneseq
        %v2355 = vshrl.u32 %v2354, 7
        %v2356 = vadd.s32 %v2355, 120
        %2357 = vset.pattern.permute.xlu0 %v2356
        %2358 = vperm.xlu0 %2357, %v2263
        %v2359 = vpop.permute.xlu0 %2358
        %v2360 = vperm.slane %v1554, 3
        %v2361 = vlaneseq
        %v2362 = vshrl.u32 %v2361, 7
        %2364 = vset.pattern.permute.xlu0 %v2362
        %2365 = vperm.xlu0 %2364, %v2360
        %v2366 = vpop.permute.xlu0 %2365
        %v2367 = vlaneseq
        %v2368 = vshrl.u32 %v2367, 7
        %v2369 = vadd.s32 %v2368, 8
        %2370 = vset.pattern.permute.xlu0 %v2369
        %2371 = vperm.xlu0 %2370, %v2360
        %v2372 = vpop.permute.xlu0 %2371
        %v2373 = vlaneseq
        %v2374 = vshrl.u32 %v2373, 7
        %v2375 = vadd.s32 %v2374, 16
        %2376 = vset.pattern.permute.xlu0 %v2375
        %2377 = vperm.xlu0 %2376, %v2360
        %v2378 = vpop.permute.xlu0 %2377
        %v2379 = vlaneseq
        %v2380 = vshrl.u32 %v2379, 7
        %v2381 = vadd.s32 %v2380, 24
        %2382 = vset.pattern.permute.xlu0 %v2381
        %2383 = vperm.xlu0 %2382, %v2360
        %v2384 = vpop.permute.xlu0 %2383
        %v2385 = vlaneseq
        %v2386 = vshrl.u32 %v2385, 7
        %v2387 = vadd.s32 %v2386, 32
        %2388 = vset.pattern.permute.xlu0 %v2387
        %2389 = vperm.xlu0 %2388, %v2360
        %v2390 = vpop.permute.xlu0 %2389
        %v2391 = vlaneseq
        %v2392 = vshrl.u32 %v2391, 7
        %v2393 = vadd.s32 %v2392, 40
        %2394 = vset.pattern.permute.xlu0 %v2393
        %2395 = vperm.xlu0 %2394, %v2360
        %v2396 = vpop.permute.xlu0 %2395
        %v2397 = vlaneseq
        %v2398 = vshrl.u32 %v2397, 7
        %v2399 = vadd.s32 %v2398, 48
        %2400 = vset.pattern.permute.xlu0 %v2399
        %2401 = vperm.xlu0 %2400, %v2360
        %v2402 = vpop.permute.xlu0 %2401
        %v2403 = vlaneseq
        %v2404 = vshrl.u32 %v2403, 7
        %v2405 = vadd.s32 %v2404, 56
        %2406 = vset.pattern.permute.xlu0 %v2405
        %2407 = vperm.xlu0 %2406, %v2360
        %v2408 = vpop.permute.xlu0 %2407
        %v2409 = vlaneseq
        %v2410 = vshrl.u32 %v2409, 7
        %v2411 = vadd.s32 %v2410, 64
        %2412 = vset.pattern.permute.xlu0 %v2411
        %2413 = vperm.xlu0 %2412, %v2360
        %v2414 = vpop.permute.xlu0 %2413
        %v2415 = vlaneseq
        %v2416 = vshrl.u32 %v2415, 7
        %v2417 = vadd.s32 %v2416, 72
        %2418 = vset.pattern.permute.xlu0 %v2417
        %2419 = vperm.xlu0 %2418, %v2360
        %v2420 = vpop.permute.xlu0 %2419
        %v2421 = vlaneseq
        %v2422 = vshrl.u32 %v2421, 7
        %v2423 = vadd.s32 %v2422, 80
        %2424 = vset.pattern.permute.xlu0 %v2423
        %2425 = vperm.xlu0 %2424, %v2360
        %v2426 = vpop.permute.xlu0 %2425
        %v2427 = vlaneseq
        %v2428 = vshrl.u32 %v2427, 7
        %v2429 = vadd.s32 %v2428, 88
        %2430 = vset.pattern.permute.xlu0 %v2429
        %2431 = vperm.xlu0 %2430, %v2360
        %v2432 = vpop.permute.xlu0 %2431
        %v2433 = vlaneseq
        %v2434 = vshrl.u32 %v2433, 7
        %v2435 = vadd.s32 %v2434, 96
        %2436 = vset.pattern.permute.xlu0 %v2435
        %2437 = vperm.xlu0 %2436, %v2360
        %v2438 = vpop.permute.xlu0 %2437
        %v2439 = vlaneseq
        %v2440 = vshrl.u32 %v2439, 7
        %v2441 = vadd.s32 %v2440, 104
        %2442 = vset.pattern.permute.xlu0 %v2441
        %2443 = vperm.xlu0 %2442, %v2360
        %v2444 = vpop.permute.xlu0 %2443
        %v2445 = vlaneseq
        %v2446 = vshrl.u32 %v2445, 7
        %v2447 = vadd.s32 %v2446, 112
        %2448 = vset.pattern.permute.xlu0 %v2447
        %2449 = vperm.xlu0 %2448, %v2360
        %v2450 = vpop.permute.xlu0 %2449
        %v2451 = vlaneseq
        %v2452 = vshrl.u32 %v2451, 7
        %v2453 = vadd.s32 %v2452, 120
        %2454 = vset.pattern.permute.xlu0 %v2453
        %2455 = vperm.xlu0 %2454, %v2360
        %v2456 = vpop.permute.xlu0 %2455
        %v2457 = vperm.slane %v1554, 4
        %v2458 = vlaneseq
        %v2459 = vshrl.u32 %v2458, 7
        %2461 = vset.pattern.permute.xlu0 %v2459
        %2462 = vperm.xlu0 %2461, %v2457
        %v2463 = vpop.permute.xlu0 %2462
        %v2464 = vlaneseq
        %v2465 = vshrl.u32 %v2464, 7
        %v2466 = vadd.s32 %v2465, 8
        %2467 = vset.pattern.permute.xlu0 %v2466
        %2468 = vperm.xlu0 %2467, %v2457
        %v2469 = vpop.permute.xlu0 %2468
        %v2470 = vlaneseq
        %v2471 = vshrl.u32 %v2470, 7
        %v2472 = vadd.s32 %v2471, 16
        %2473 = vset.pattern.permute.xlu0 %v2472
        %2474 = vperm.xlu0 %2473, %v2457
        %v2475 = vpop.permute.xlu0 %2474
        %v2476 = vlaneseq
        %v2477 = vshrl.u32 %v2476, 7
        %v2478 = vadd.s32 %v2477, 24
        %2479 = vset.pattern.permute.xlu0 %v2478
        %2480 = vperm.xlu0 %2479, %v2457
        %v2481 = vpop.permute.xlu0 %2480
        %v2482 = vlaneseq
        %v2483 = vshrl.u32 %v2482, 7
        %v2484 = vadd.s32 %v2483, 32
        %2485 = vset.pattern.permute.xlu0 %v2484
        %2486 = vperm.xlu0 %2485, %v2457
        %v2487 = vpop.permute.xlu0 %2486
        %v2488 = vlaneseq
        %v2489 = vshrl.u32 %v2488, 7
        %v2490 = vadd.s32 %v2489, 40
        %2491 = vset.pattern.permute.xlu0 %v2490
        %2492 = vperm.xlu0 %2491, %v2457
        %v2493 = vpop.permute.xlu0 %2492
        %v2494 = vlaneseq
        %v2495 = vshrl.u32 %v2494, 7
        %v2496 = vadd.s32 %v2495, 48
        %2497 = vset.pattern.permute.xlu0 %v2496
        %2498 = vperm.xlu0 %2497, %v2457
        %v2499 = vpop.permute.xlu0 %2498
        %v2500 = vlaneseq
        %v2501 = vshrl.u32 %v2500, 7
        %v2502 = vadd.s32 %v2501, 56
        %2503 = vset.pattern.permute.xlu0 %v2502
        %2504 = vperm.xlu0 %2503, %v2457
        %v2505 = vpop.permute.xlu0 %2504
        %v2506 = vlaneseq
        %v2507 = vshrl.u32 %v2506, 7
        %v2508 = vadd.s32 %v2507, 64
        %2509 = vset.pattern.permute.xlu0 %v2508
        %2510 = vperm.xlu0 %2509, %v2457
        %v2511 = vpop.permute.xlu0 %2510
        %v2512 = vlaneseq
        %v2513 = vshrl.u32 %v2512, 7
        %v2514 = vadd.s32 %v2513, 72
        %2515 = vset.pattern.permute.xlu0 %v2514
        %2516 = vperm.xlu0 %2515, %v2457
        %v2517 = vpop.permute.xlu0 %2516
        %v2518 = vlaneseq
        %v2519 = vshrl.u32 %v2518, 7
        %v2520 = vadd.s32 %v2519, 80
        %2521 = vset.pattern.permute.xlu0 %v2520
        %2522 = vperm.xlu0 %2521, %v2457
        %v2523 = vpop.permute.xlu0 %2522
        %v2524 = vlaneseq
        %v2525 = vshrl.u32 %v2524, 7
        %v2526 = vadd.s32 %v2525, 88
        %2527 = vset.pattern.permute.xlu0 %v2526
        %2528 = vperm.xlu0 %2527, %v2457
        %v2529 = vpop.permute.xlu0 %2528
        %v2530 = vlaneseq
        %v2531 = vshrl.u32 %v2530, 7
        %v2532 = vadd.s32 %v2531, 96
        %2533 = vset.pattern.permute.xlu0 %v2532
        %2534 = vperm.xlu0 %2533, %v2457
        %v2535 = vpop.permute.xlu0 %2534
        %v2536 = vlaneseq
        %v2537 = vshrl.u32 %v2536, 7
        %v2538 = vadd.s32 %v2537, 104
        %2539 = vset.pattern.permute.xlu0 %v2538
        %2540 = vperm.xlu0 %2539, %v2457
        %v2541 = vpop.permute.xlu0 %2540
        %v2542 = vlaneseq
        %v2543 = vshrl.u32 %v2542, 7
        %v2544 = vadd.s32 %v2543, 112
        %2545 = vset.pattern.permute.xlu0 %v2544
        %2546 = vperm.xlu0 %2545, %v2457
        %v2547 = vpop.permute.xlu0 %2546
        %v2548 = vlaneseq
        %v2549 = vshrl.u32 %v2548, 7
        %v2550 = vadd.s32 %v2549, 120
        %2551 = vset.pattern.permute.xlu0 %v2550
        %2552 = vperm.xlu0 %2551, %v2457
        %v2553 = vpop.permute.xlu0 %2552
        %v2554 = vperm.slane %v1554, 5
        %v2555 = vlaneseq
        %v2556 = vshrl.u32 %v2555, 7
        %2558 = vset.pattern.permute.xlu0 %v2556
        %2559 = vperm.xlu0 %2558, %v2554
        %v2560 = vpop.permute.xlu0 %2559
        %v2561 = vlaneseq
        %v2562 = vshrl.u32 %v2561, 7
        %v2563 = vadd.s32 %v2562, 8
        %2564 = vset.pattern.permute.xlu0 %v2563
        %2565 = vperm.xlu0 %2564, %v2554
        %v2566 = vpop.permute.xlu0 %2565
        %v2567 = vlaneseq
        %v2568 = vshrl.u32 %v2567, 7
        %v2569 = vadd.s32 %v2568, 16
        %2570 = vset.pattern.permute.xlu0 %v2569
        %2571 = vperm.xlu0 %2570, %v2554
        %v2572 = vpop.permute.xlu0 %2571
        %v2573 = vlaneseq
        %v2574 = vshrl.u32 %v2573, 7
        %v2575 = vadd.s32 %v2574, 24
        %2576 = vset.pattern.permute.xlu0 %v2575
        %2577 = vperm.xlu0 %2576, %v2554
        %v2578 = vpop.permute.xlu0 %2577
        %v2579 = vlaneseq
        %v2580 = vshrl.u32 %v2579, 7
        %v2581 = vadd.s32 %v2580, 32
        %2582 = vset.pattern.permute.xlu0 %v2581
        %2583 = vperm.xlu0 %2582, %v2554
        %v2584 = vpop.permute.xlu0 %2583
        %v2585 = vlaneseq
        %v2586 = vshrl.u32 %v2585, 7
        %v2587 = vadd.s32 %v2586, 40
        %2588 = vset.pattern.permute.xlu0 %v2587
        %2589 = vperm.xlu0 %2588, %v2554
        %v2590 = vpop.permute.xlu0 %2589
        %v2591 = vlaneseq
        %v2592 = vshrl.u32 %v2591, 7
        %v2593 = vadd.s32 %v2592, 48
        %2594 = vset.pattern.permute.xlu0 %v2593
        %2595 = vperm.xlu0 %2594, %v2554
        %v2596 = vpop.permute.xlu0 %2595
        %v2597 = vlaneseq
        %v2598 = vshrl.u32 %v2597, 7
        %v2599 = vadd.s32 %v2598, 56
        %2600 = vset.pattern.permute.xlu0 %v2599
        %2601 = vperm.xlu0 %2600, %v2554
        %v2602 = vpop.permute.xlu0 %2601
        %v2603 = vlaneseq
        %v2604 = vshrl.u32 %v2603, 7
        %v2605 = vadd.s32 %v2604, 64
        %2606 = vset.pattern.permute.xlu0 %v2605
        %2607 = vperm.xlu0 %2606, %v2554
        %v2608 = vpop.permute.xlu0 %2607
        %v2609 = vlaneseq
        %v2610 = vshrl.u32 %v2609, 7
        %v2611 = vadd.s32 %v2610, 72
        %2612 = vset.pattern.permute.xlu0 %v2611
        %2613 = vperm.xlu0 %2612, %v2554
        %v2614 = vpop.permute.xlu0 %2613
        %v2615 = vlaneseq
        %v2616 = vshrl.u32 %v2615, 7
        %v2617 = vadd.s32 %v2616, 80
        %2618 = vset.pattern.permute.xlu0 %v2617
        %2619 = vperm.xlu0 %2618, %v2554
        %v2620 = vpop.permute.xlu0 %2619
        %v2621 = vlaneseq
        %v2622 = vshrl.u32 %v2621, 7
        %v2623 = vadd.s32 %v2622, 88
        %2624 = vset.pattern.permute.xlu0 %v2623
        %2625 = vperm.xlu0 %2624, %v2554
        %v2626 = vpop.permute.xlu0 %2625
        %v2627 = vlaneseq
        %v2628 = vshrl.u32 %v2627, 7
        %v2629 = vadd.s32 %v2628, 96
        %2630 = vset.pattern.permute.xlu0 %v2629
        %2631 = vperm.xlu0 %2630, %v2554
        %v2632 = vpop.permute.xlu0 %2631
        %v2633 = vlaneseq
        %v2634 = vshrl.u32 %v2633, 7
        %v2635 = vadd.s32 %v2634, 104
        %2636 = vset.pattern.permute.xlu0 %v2635
        %2637 = vperm.xlu0 %2636, %v2554
        %v2638 = vpop.permute.xlu0 %2637
        %v2639 = vlaneseq
        %v2640 = vshrl.u32 %v2639, 7
        %v2641 = vadd.s32 %v2640, 112
        %2642 = vset.pattern.permute.xlu0 %v2641
        %2643 = vperm.xlu0 %2642, %v2554
        %v2644 = vpop.permute.xlu0 %2643
        %v2645 = vlaneseq
        %v2646 = vshrl.u32 %v2645, 7
        %v2647 = vadd.s32 %v2646, 120
        %2648 = vset.pattern.permute.xlu0 %v2647
        %2649 = vperm.xlu0 %2648, %v2554
        %v2650 = vpop.permute.xlu0 %2649
        %v2651 = vperm.slane %v1554, 6
        %v2652 = vlaneseq
        %v2653 = vshrl.u32 %v2652, 7
        %2655 = vset.pattern.permute.xlu0 %v2653
        %2656 = vperm.xlu0 %2655, %v2651
        %v2657 = vpop.permute.xlu0 %2656
        %v2658 = vlaneseq
        %v2659 = vshrl.u32 %v2658, 7
        %v2660 = vadd.s32 %v2659, 8
        %2661 = vset.pattern.permute.xlu0 %v2660
        %2662 = vperm.xlu0 %2661, %v2651
        %v2663 = vpop.permute.xlu0 %2662
        %v2664 = vlaneseq
        %v2665 = vshrl.u32 %v2664, 7
        %v2666 = vadd.s32 %v2665, 16
        %2667 = vset.pattern.permute.xlu0 %v2666
        %2668 = vperm.xlu0 %2667, %v2651
        %v2669 = vpop.permute.xlu0 %2668
        %v2670 = vlaneseq
        %v2671 = vshrl.u32 %v2670, 7
        %v2672 = vadd.s32 %v2671, 24
        %2673 = vset.pattern.permute.xlu0 %v2672
        %2674 = vperm.xlu0 %2673, %v2651
        %v2675 = vpop.permute.xlu0 %2674
        %v2676 = vlaneseq
        %v2677 = vshrl.u32 %v2676, 7
        %v2678 = vadd.s32 %v2677, 32
        %2679 = vset.pattern.permute.xlu0 %v2678
        %2680 = vperm.xlu0 %2679, %v2651
        %v2681 = vpop.permute.xlu0 %2680
        %v2682 = vlaneseq
        %v2683 = vshrl.u32 %v2682, 7
        %v2684 = vadd.s32 %v2683, 40
        %2685 = vset.pattern.permute.xlu0 %v2684
        %2686 = vperm.xlu0 %2685, %v2651
        %v2687 = vpop.permute.xlu0 %2686
        %v2688 = vlaneseq
        %v2689 = vshrl.u32 %v2688, 7
        %v2690 = vadd.s32 %v2689, 48
        %2691 = vset.pattern.permute.xlu0 %v2690
        %2692 = vperm.xlu0 %2691, %v2651
        %v2693 = vpop.permute.xlu0 %2692
        %v2694 = vlaneseq
        %v2695 = vshrl.u32 %v2694, 7
        %v2696 = vadd.s32 %v2695, 56
        %2697 = vset.pattern.permute.xlu0 %v2696
        %2698 = vperm.xlu0 %2697, %v2651
        %v2699 = vpop.permute.xlu0 %2698
        %v2700 = vlaneseq
        %v2701 = vshrl.u32 %v2700, 7
        %v2702 = vadd.s32 %v2701, 64
        %2703 = vset.pattern.permute.xlu0 %v2702
        %2704 = vperm.xlu0 %2703, %v2651
        %v2705 = vpop.permute.xlu0 %2704
        %v2706 = vlaneseq
        %v2707 = vshrl.u32 %v2706, 7
        %v2708 = vadd.s32 %v2707, 72
        %2709 = vset.pattern.permute.xlu0 %v2708
        %2710 = vperm.xlu0 %2709, %v2651
        %v2711 = vpop.permute.xlu0 %2710
        %v2712 = vlaneseq
        %v2713 = vshrl.u32 %v2712, 7
        %v2714 = vadd.s32 %v2713, 80
        %2715 = vset.pattern.permute.xlu0 %v2714
        %2716 = vperm.xlu0 %2715, %v2651
        %v2717 = vpop.permute.xlu0 %2716
        %v2718 = vlaneseq
        %v2719 = vshrl.u32 %v2718, 7
        %v2720 = vadd.s32 %v2719, 88
        %2721 = vset.pattern.permute.xlu0 %v2720
        %2722 = vperm.xlu0 %2721, %v2651
        %v2723 = vpop.permute.xlu0 %2722
        %v2724 = vlaneseq
        %v2725 = vshrl.u32 %v2724, 7
        %v2726 = vadd.s32 %v2725, 96
        %2727 = vset.pattern.permute.xlu0 %v2726
        %2728 = vperm.xlu0 %2727, %v2651
        %v2729 = vpop.permute.xlu0 %2728
        %v2730 = vlaneseq
        %v2731 = vshrl.u32 %v2730, 7
        %v2732 = vadd.s32 %v2731, 104
        %2733 = vset.pattern.permute.xlu0 %v2732
        %2734 = vperm.xlu0 %2733, %v2651
        %v2735 = vpop.permute.xlu0 %2734
        %v2736 = vlaneseq
        %v2737 = vshrl.u32 %v2736, 7
        %v2738 = vadd.s32 %v2737, 112
        %2739 = vset.pattern.permute.xlu0 %v2738
        %2740 = vperm.xlu0 %2739, %v2651
        %v2741 = vpop.permute.xlu0 %2740
        %v2742 = vlaneseq
        %v2743 = vshrl.u32 %v2742, 7
        %v2744 = vadd.s32 %v2743, 120
        %2745 = vset.pattern.permute.xlu0 %v2744
        %2746 = vperm.xlu0 %2745, %v2651
        %v2747 = vpop.permute.xlu0 %2746
        %v2748 = vperm.slane %v1554, 7
        %v2749 = vlaneseq
        %v2750 = vshrl.u32 %v2749, 7
        %2752 = vset.pattern.permute.xlu0 %v2750
        %2753 = vperm.xlu0 %2752, %v2748
        %v2754 = vpop.permute.xlu0 %2753
        %v2755 = vlaneseq
        %v2756 = vshrl.u32 %v2755, 7
        %v2757 = vadd.s32 %v2756, 8
        %2758 = vset.pattern.permute.xlu0 %v2757
        %2759 = vperm.xlu0 %2758, %v2748
        %v2760 = vpop.permute.xlu0 %2759
        %v2761 = vlaneseq
        %v2762 = vshrl.u32 %v2761, 7
        %v2763 = vadd.s32 %v2762, 16
        %2764 = vset.pattern.permute.xlu0 %v2763
        %2765 = vperm.xlu0 %2764, %v2748
        %v2766 = vpop.permute.xlu0 %2765
        %v2767 = vlaneseq
        %v2768 = vshrl.u32 %v2767, 7
        %v2769 = vadd.s32 %v2768, 24
        %2770 = vset.pattern.permute.xlu0 %v2769
        %2771 = vperm.xlu0 %2770, %v2748
        %v2772 = vpop.permute.xlu0 %2771
        %v2773 = vlaneseq
        %v2774 = vshrl.u32 %v2773, 7
        %v2775 = vadd.s32 %v2774, 32
        %2776 = vset.pattern.permute.xlu0 %v2775
        %2777 = vperm.xlu0 %2776, %v2748
        %v2778 = vpop.permute.xlu0 %2777
        %v2779 = vlaneseq
        %v2780 = vshrl.u32 %v2779, 7
        %v2781 = vadd.s32 %v2780, 40
        %2782 = vset.pattern.permute.xlu0 %v2781
        %2783 = vperm.xlu0 %2782, %v2748
        %v2784 = vpop.permute.xlu0 %2783
        %v2785 = vlaneseq
        %v2786 = vshrl.u32 %v2785, 7
        %v2787 = vadd.s32 %v2786, 48
        %2788 = vset.pattern.permute.xlu0 %v2787
        %2789 = vperm.xlu0 %2788, %v2748
        %v2790 = vpop.permute.xlu0 %2789
        %v2791 = vlaneseq
        %v2792 = vshrl.u32 %v2791, 7
        %v2793 = vadd.s32 %v2792, 56
        %2794 = vset.pattern.permute.xlu0 %v2793
        %2795 = vperm.xlu0 %2794, %v2748
        %v2796 = vpop.permute.xlu0 %2795
        %v2797 = vlaneseq
        %v2798 = vshrl.u32 %v2797, 7
        %v2799 = vadd.s32 %v2798, 64
        %2800 = vset.pattern.permute.xlu0 %v2799
        %2801 = vperm.xlu0 %2800, %v2748
        %v2802 = vpop.permute.xlu0 %2801
        %v2803 = vlaneseq
        %v2804 = vshrl.u32 %v2803, 7
        %v2805 = vadd.s32 %v2804, 72
        %2806 = vset.pattern.permute.xlu0 %v2805
        %2807 = vperm.xlu0 %2806, %v2748
        %v2808 = vpop.permute.xlu0 %2807
        %v2809 = vlaneseq
        %v2810 = vshrl.u32 %v2809, 7
        %v2811 = vadd.s32 %v2810, 80
        %2812 = vset.pattern.permute.xlu0 %v2811
        %2813 = vperm.xlu0 %2812, %v2748
        %v2814 = vpop.permute.xlu0 %2813
        %v2815 = vlaneseq
        %v2816 = vshrl.u32 %v2815, 7
        %v2817 = vadd.s32 %v2816, 88
        %2818 = vset.pattern.permute.xlu0 %v2817
        %2819 = vperm.xlu0 %2818, %v2748
        %v2820 = vpop.permute.xlu0 %2819
        %v2821 = vlaneseq
        %v2822 = vshrl.u32 %v2821, 7
        %v2823 = vadd.s32 %v2822, 96
        %2824 = vset.pattern.permute.xlu0 %v2823
        %2825 = vperm.xlu0 %2824, %v2748
        %v2826 = vpop.permute.xlu0 %2825
        %v2827 = vlaneseq
        %v2828 = vshrl.u32 %v2827, 7
        %v2829 = vadd.s32 %v2828, 104
        %2830 = vset.pattern.permute.xlu0 %v2829
        %2831 = vperm.xlu0 %2830, %v2748
        %v2832 = vpop.permute.xlu0 %2831
        %v2833 = vlaneseq
        %v2834 = vshrl.u32 %v2833, 7
        %v2835 = vadd.s32 %v2834, 112
        %2836 = vset.pattern.permute.xlu0 %v2835
        %2837 = vperm.xlu0 %2836, %v2748
        %v2838 = vpop.permute.xlu0 %2837
        %v2839 = vlaneseq
        %v2840 = vshrl.u32 %v2839, 7
        %v2841 = vadd.s32 %v2840, 120
        %2842 = vset.pattern.permute.xlu0 %v2841
        %2843 = vperm.xlu0 %2842, %v2748
        %v2844 = vpop.permute.xlu0 %2843
        %v2845 = vmul.f32 %v1684, %v2075
        %v2846 = vmul.f32 %v1685, %v2081
        %v2847 = vmul.f32 %v1686, %v2087
        %v2848 = vmul.f32 %v1687, %v2093
        %v2849 = vmul.f32 %v1688, %v2099
        %v2850 = vmul.f32 %v1689, %v2105
        %v2851 = vmul.f32 %v1690, %v2111
        %v2852 = vmul.f32 %v1691, %v2117
        %v2853 = vmul.f32 %v1692, %v2123
        %v2854 = vmul.f32 %v1693, %v2129
        %v2855 = vmul.f32 %v1694, %v2135
        %v2856 = vmul.f32 %v1695, %v2141
        %v2857 = vmul.f32 %v1696, %v2147
        %v2858 = vmul.f32 %v1697, %v2153
        %v2859 = vmul.f32 %v1698, %v2159
        %v2860 = vmul.f32 %v1699, %v2165
        %v2861 = vmul.f32 %v1700, %v2172
        %v2862 = vmul.f32 %v1701, %v2178
        %v2863 = vmul.f32 %v1702, %v2184
        %v2864 = vmul.f32 %v1703, %v2190
        %v2865 = vmul.f32 %v1704, %v2196
        %v2866 = vmul.f32 %v1705, %v2202
        %v2867 = vmul.f32 %v1706, %v2208
        %v2868 = vmul.f32 %v1707, %v2214
        %v2869 = vmul.f32 %v1708, %v2220
        %v2870 = vmul.f32 %v1709, %v2226
        %v2871 = vmul.f32 %v1710, %v2232
        %v2872 = vmul.f32 %v1711, %v2238
        %v2873 = vmul.f32 %v1712, %v2244
        %v2874 = vmul.f32 %v1713, %v2250
        %v2875 = vmul.f32 %v1714, %v2256
        %v2876 = vmul.f32 %v1715, %v2262
        %v2877 = vmul.f32 %v1716, %v2269
        %v2878 = vmul.f32 %v1717, %v2275
        %v2879 = vmul.f32 %v1718, %v2281
        %v2880 = vmul.f32 %v1719, %v2287
        %v2881 = vmul.f32 %v1720, %v2293
        %v2882 = vmul.f32 %v1721, %v2299
        %v2883 = vmul.f32 %v1722, %v2305
        %v2884 = vmul.f32 %v1723, %v2311
        %v2885 = vmul.f32 %v1724, %v2317
        %v2886 = vmul.f32 %v1725, %v2323
        %v2887 = vmul.f32 %v1726, %v2329
        %v2888 = vmul.f32 %v1727, %v2335
        %v2889 = vmul.f32 %v1728, %v2341
        %v2890 = vmul.f32 %v1729, %v2347
        %v2891 = vmul.f32 %v1730, %v2353
        %v2892 = vmul.f32 %v1731, %v2359
        %v2893 = vmul.f32 %v1732, %v2366
        %v2894 = vmul.f32 %v1733, %v2372
        %v2895 = vmul.f32 %v1734, %v2378
        %v2896 = vmul.f32 %v1735, %v2384
        %v2897 = vmul.f32 %v1736, %v2390
        %v2898 = vmul.f32 %v1737, %v2396
        %v2899 = vmul.f32 %v1738, %v2402
        %v2900 = vmul.f32 %v1739, %v2408
        %v2901 = vmul.f32 %v1740, %v2414
        %v2902 = vmul.f32 %v1741, %v2420
        %v2903 = vmul.f32 %v1742, %v2426
        %v2904 = vmul.f32 %v1743, %v2432
        %v2905 = vmul.f32 %v1744, %v2438
        %v2906 = vmul.f32 %v1745, %v2444
        %v2907 = vmul.f32 %v1746, %v2450
        %v2908 = vmul.f32 %v1747, %v2456
        %v2909 = vmul.f32 %v1748, %v2463
        %v2910 = vmul.f32 %v1749, %v2469
        %v2911 = vmul.f32 %v1750, %v2475
        %v2912 = vmul.f32 %v1751, %v2481
        %v2913 = vmul.f32 %v1752, %v2487
        %v2914 = vmul.f32 %v1753, %v2493
        %v2915 = vmul.f32 %v1754, %v2499
        %v2916 = vmul.f32 %v1755, %v2505
        %v2917 = vmul.f32 %v1756, %v2511
        %v2918 = vmul.f32 %v1757, %v2517
        %v2919 = vmul.f32 %v1758, %v2523
        %v2920 = vmul.f32 %v1759, %v2529
        %v2921 = vmul.f32 %v1760, %v2535
        %v2922 = vmul.f32 %v1761, %v2541
        %v2923 = vmul.f32 %v1762, %v2547
        %v2924 = vmul.f32 %v1763, %v2553
        %v2925 = vmul.f32 %v1764, %v2560
        %v2926 = vmul.f32 %v1765, %v2566
        %v2927 = vmul.f32 %v1766, %v2572
        %v2928 = vmul.f32 %v1767, %v2578
        %v2929 = vmul.f32 %v1768, %v2584
        %v2930 = vmul.f32 %v1769, %v2590
        %v2931 = vmul.f32 %v1770, %v2596
        %v2932 = vmul.f32 %v1771, %v2602
        %v2933 = vmul.f32 %v1772, %v2608
        %v2934 = vmul.f32 %v1773, %v2614
        %v2935 = vmul.f32 %v1774, %v2620
        %v2936 = vmul.f32 %v1775, %v2626
        %v2937 = vmul.f32 %v1776, %v2632
        %v2938 = vmul.f32 %v1777, %v2638
        %v2939 = vmul.f32 %v1778, %v2644
        %v2940 = vmul.f32 %v1779, %v2650
        %v2941 = vmul.f32 %v1780, %v2657
        %v2942 = vmul.f32 %v1781, %v2663
        %v2943 = vmul.f32 %v1782, %v2669
        %v2944 = vmul.f32 %v1783, %v2675
        %v2945 = vmul.f32 %v1784, %v2681
        %v2946 = vmul.f32 %v1785, %v2687
        %v2947 = vmul.f32 %v1786, %v2693
        %v2948 = vmul.f32 %v1787, %v2699
        %v2949 = vmul.f32 %v1788, %v2705
        %v2950 = vmul.f32 %v1789, %v2711
        %v2951 = vmul.f32 %v1790, %v2717
        %v2952 = vmul.f32 %v1791, %v2723
        %v2953 = vmul.f32 %v1792, %v2729
        %v2954 = vmul.f32 %v1793, %v2735
        %v2955 = vmul.f32 %v1794, %v2741
        %v2956 = vmul.f32 %v1795, %v2747
        %v2957 = vmul.f32 %v1796, %v2754
        %v2958 = vmul.f32 %v1797, %v2760
        %v2959 = vmul.f32 %v1798, %v2766
        %v2960 = vmul.f32 %v1799, %v2772
        %v2961 = vmul.f32 %v1800, %v2778
        %v2962 = vmul.f32 %v1801, %v2784
        %v2963 = vmul.f32 %v1802, %v2790
        %v2964 = vmul.f32 %v1803, %v2796
        %v2965 = vmul.f32 %v1804, %v2802
        %v2966 = vmul.f32 %v1805, %v2808
        %v2967 = vmul.f32 %v1806, %v2814
        %v2968 = vmul.f32 %v1807, %v2820
        %v2969 = vmul.f32 %v1808, %v2826
        %v2970 = vmul.f32 %v1809, %v2832
        %v2971 = vmul.f32 %v1810, %v2838
        %v2972 = vmul.f32 %v1811, %v2844
        %vm2973 = vcmask 523264
        %v2974 = vsel %vm2973, %v2845, 0.0
        %v2975 = vsel %vm2973, %v2846, 0.0
        %v2976 = vadd.f32 %v2974, %v2975
        %v2977 = vsel %vm2973, %v2847, 0.0
        %v2978 = vadd.f32 %v2976, %v2977
        %v2979 = vsel %vm2973, %v2848, 0.0
        %v2980 = vadd.f32 %v2978, %v2979
        %v2981 = vsel %vm2973, %v2849, 0.0
        %v2982 = vadd.f32 %v2980, %v2981
        %v2983 = vsel %vm2973, %v2850, 0.0
        %v2984 = vadd.f32 %v2982, %v2983
        %v2985 = vsel %vm2973, %v2851, 0.0
        %v2986 = vadd.f32 %v2984, %v2985
        %v2987 = vsel %vm2973, %v2852, 0.0
        %v2988 = vadd.f32 %v2986, %v2987
        %v2989 = vsel %vm2973, %v2853, 0.0
        %v2990 = vadd.f32 %v2988, %v2989
        %v2991 = vsel %vm2973, %v2854, 0.0
        %v2992 = vadd.f32 %v2990, %v2991
        %v2993 = vsel %vm2973, %v2855, 0.0
        %v2994 = vadd.f32 %v2992, %v2993
        %v2995 = vsel %vm2973, %v2856, 0.0
        %v2996 = vadd.f32 %v2994, %v2995
        %v2997 = vsel %vm2973, %v2857, 0.0
        %v2998 = vadd.f32 %v2996, %v2997
        %v2999 = vsel %vm2973, %v2858, 0.0
        %v3000 = vadd.f32 %v2998, %v2999
        %v3001 = vsel %vm2973, %v2859, 0.0
        %v3002 = vadd.f32 %v3000, %v3001
        %v3003 = vsel %vm2973, %v2860, 0.0
        %v3004 = vadd.f32 %v3002, %v3003
        %v3005 = vrot.slane %v3004, 4
        %v3006 = vadd.f32 %v3004, %v3005
        %v3007 = vrot.slane %v3006, 2
        %v3008 = vadd.f32 %v3006, %v3007
        %v3009 = vrot.slane %v3008, 1
        %v3010 = vadd.f32 %v3008, %v3009
        %v3011 = vsel %vm2973, %v2861, 0.0
        %v3012 = vsel %vm2973, %v2862, 0.0
        %v3013 = vadd.f32 %v3011, %v3012
        %v3014 = vsel %vm2973, %v2863, 0.0
        %v3015 = vadd.f32 %v3013, %v3014
        %v3016 = vsel %vm2973, %v2864, 0.0
        %v3017 = vadd.f32 %v3015, %v3016
        %v3018 = vsel %vm2973, %v2865, 0.0
        %v3019 = vadd.f32 %v3017, %v3018
        %v3020 = vsel %vm2973, %v2866, 0.0
        %v3021 = vadd.f32 %v3019, %v3020
        %v3022 = vsel %vm2973, %v2867, 0.0
        %v3023 = vadd.f32 %v3021, %v3022
        %v3024 = vsel %vm2973, %v2868, 0.0
        %v3025 = vadd.f32 %v3023, %v3024
        %v3026 = vsel %vm2973, %v2869, 0.0
        %v3027 = vadd.f32 %v3025, %v3026
        %v3028 = vsel %vm2973, %v2870, 0.0
        %v3029 = vadd.f32 %v3027, %v3028
        %v3030 = vsel %vm2973, %v2871, 0.0
        %v3031 = vadd.f32 %v3029, %v3030
        %v3032 = vsel %vm2973, %v2872, 0.0
        %v3033 = vadd.f32 %v3031, %v3032
        %v3034 = vsel %vm2973, %v2873, 0.0
        %v3035 = vadd.f32 %v3033, %v3034
        %v3036 = vsel %vm2973, %v2874, 0.0
        %v3037 = vadd.f32 %v3035, %v3036
        %v3038 = vsel %vm2973, %v2875, 0.0
        %v3039 = vadd.f32 %v3037, %v3038
        %v3040 = vsel %vm2973, %v2876, 0.0
        %v3041 = vadd.f32 %v3039, %v3040
        %v3042 = vrot.slane %v3041, 4
        %v3043 = vadd.f32 %v3041, %v3042
        %v3044 = vrot.slane %v3043, 2
        %v3045 = vadd.f32 %v3043, %v3044
        %v3046 = vrot.slane %v3045, 1
        %v3047 = vadd.f32 %v3045, %v3046
        %v3048 = vsel %vm2973, %v2877, 0.0
        %v3049 = vsel %vm2973, %v2878, 0.0
        %v3050 = vadd.f32 %v3048, %v3049
        %v3051 = vsel %vm2973, %v2879, 0.0
        %v3052 = vadd.f32 %v3050, %v3051
        %v3053 = vsel %vm2973, %v2880, 0.0
        %v3054 = vadd.f32 %v3052, %v3053
        %v3055 = vsel %vm2973, %v2881, 0.0
        %v3056 = vadd.f32 %v3054, %v3055
        %v3057 = vsel %vm2973, %v2882, 0.0
        %v3058 = vadd.f32 %v3056, %v3057
        %v3059 = vsel %vm2973, %v2883, 0.0
        %v3060 = vadd.f32 %v3058, %v3059
        %v3061 = vsel %vm2973, %v2884, 0.0
        %v3062 = vadd.f32 %v3060, %v3061
        %v3063 = vsel %vm2973, %v2885, 0.0
        %v3064 = vadd.f32 %v3062, %v3063
        %v3065 = vsel %vm2973, %v2886, 0.0
        %v3066 = vadd.f32 %v3064, %v3065
        %v3067 = vsel %vm2973, %v2887, 0.0
        %v3068 = vadd.f32 %v3066, %v3067
        %v3069 = vsel %vm2973, %v2888, 0.0
        %v3070 = vadd.f32 %v3068, %v3069
        %v3071 = vsel %vm2973, %v2889, 0.0
        %v3072 = vadd.f32 %v3070, %v3071
        %v3073 = vsel %vm2973, %v2890, 0.0
        %v3074 = vadd.f32 %v3072, %v3073
        %v3075 = vsel %vm2973, %v2891, 0.0
        %v3076 = vadd.f32 %v3074, %v3075
        %v3077 = vsel %vm2973, %v2892, 0.0
        %v3078 = vadd.f32 %v3076, %v3077
        %v3079 = vrot.slane %v3078, 4
        %v3080 = vadd.f32 %v3078, %v3079
        %v3081 = vrot.slane %v3080, 2
        %v3082 = vadd.f32 %v3080, %v3081
        %v3083 = vrot.slane %v3082, 1
        %v3084 = vadd.f32 %v3082, %v3083
        %v3085 = vsel %vm2973, %v2893, 0.0
        %v3086 = vsel %vm2973, %v2894, 0.0
        %v3087 = vadd.f32 %v3085, %v3086
        %v3088 = vsel %vm2973, %v2895, 0.0
        %v3089 = vadd.f32 %v3087, %v3088
        %v3090 = vsel %vm2973, %v2896, 0.0
        %v3091 = vadd.f32 %v3089, %v3090
        %v3092 = vsel %vm2973, %v2897, 0.0
        %v3093 = vadd.f32 %v3091, %v3092
        %v3094 = vsel %vm2973, %v2898, 0.0
        %v3095 = vadd.f32 %v3093, %v3094
        %v3096 = vsel %vm2973, %v2899, 0.0
        %v3097 = vadd.f32 %v3095, %v3096
        %v3098 = vsel %vm2973, %v2900, 0.0
        %v3099 = vadd.f32 %v3097, %v3098
        %v3100 = vsel %vm2973, %v2901, 0.0
        %v3101 = vadd.f32 %v3099, %v3100
        %v3102 = vsel %vm2973, %v2902, 0.0
        %v3103 = vadd.f32 %v3101, %v3102
        %v3104 = vsel %vm2973, %v2903, 0.0
        %v3105 = vadd.f32 %v3103, %v3104
        %v3106 = vsel %vm2973, %v2904, 0.0
        %v3107 = vadd.f32 %v3105, %v3106
        %v3108 = vsel %vm2973, %v2905, 0.0
        %v3109 = vadd.f32 %v3107, %v3108
        %v3110 = vsel %vm2973, %v2906, 0.0
        %v3111 = vadd.f32 %v3109, %v3110
        %v3112 = vsel %vm2973, %v2907, 0.0
        %v3113 = vadd.f32 %v3111, %v3112
        %v3114 = vsel %vm2973, %v2908, 0.0
        %v3115 = vadd.f32 %v3113, %v3114
        %v3116 = vrot.slane %v3115, 4
        %v3117 = vadd.f32 %v3115, %v3116
        %v3118 = vrot.slane %v3117, 2
        %v3119 = vadd.f32 %v3117, %v3118
        %v3120 = vrot.slane %v3119, 1
        %v3121 = vadd.f32 %v3119, %v3120
        %v3122 = vsel %vm2973, %v2909, 0.0
        %v3123 = vsel %vm2973, %v2910, 0.0
        %v3124 = vadd.f32 %v3122, %v3123
        %v3125 = vsel %vm2973, %v2911, 0.0
        %v3126 = vadd.f32 %v3124, %v3125
        %v3127 = vsel %vm2973, %v2912, 0.0
        %v3128 = vadd.f32 %v3126, %v3127
        %v3129 = vsel %vm2973, %v2913, 0.0
        %v3130 = vadd.f32 %v3128, %v3129
        %v3131 = vsel %vm2973, %v2914, 0.0
        %v3132 = vadd.f32 %v3130, %v3131
        %v3133 = vsel %vm2973, %v2915, 0.0
        %v3134 = vadd.f32 %v3132, %v3133
        %v3135 = vsel %vm2973, %v2916, 0.0
        %v3136 = vadd.f32 %v3134, %v3135
        %v3137 = vsel %vm2973, %v2917, 0.0
        %v3138 = vadd.f32 %v3136, %v3137
        %v3139 = vsel %vm2973, %v2918, 0.0
        %v3140 = vadd.f32 %v3138, %v3139
        %v3141 = vsel %vm2973, %v2919, 0.0
        %v3142 = vadd.f32 %v3140, %v3141
        %v3143 = vsel %vm2973, %v2920, 0.0
        %v3144 = vadd.f32 %v3142, %v3143
        %v3145 = vsel %vm2973, %v2921, 0.0
        %v3146 = vadd.f32 %v3144, %v3145
        %v3147 = vsel %vm2973, %v2922, 0.0
        %v3148 = vadd.f32 %v3146, %v3147
        %v3149 = vsel %vm2973, %v2923, 0.0
        %v3150 = vadd.f32 %v3148, %v3149
        %v3151 = vsel %vm2973, %v2924, 0.0
        %v3152 = vadd.f32 %v3150, %v3151
        %v3153 = vrot.slane %v3152, 4
        %v3154 = vadd.f32 %v3152, %v3153
        %v3155 = vrot.slane %v3154, 2
        %v3156 = vadd.f32 %v3154, %v3155
        %v3157 = vrot.slane %v3156, 1
        %v3158 = vadd.f32 %v3156, %v3157
        %v3159 = vsel %vm2973, %v2925, 0.0
        %v3160 = vsel %vm2973, %v2926, 0.0
        %v3161 = vadd.f32 %v3159, %v3160
        %v3162 = vsel %vm2973, %v2927, 0.0
        %v3163 = vadd.f32 %v3161, %v3162
        %v3164 = vsel %vm2973, %v2928, 0.0
        %v3165 = vadd.f32 %v3163, %v3164
        %v3166 = vsel %vm2973, %v2929, 0.0
        %v3167 = vadd.f32 %v3165, %v3166
        %v3168 = vsel %vm2973, %v2930, 0.0
        %v3169 = vadd.f32 %v3167, %v3168
        %v3170 = vsel %vm2973, %v2931, 0.0
        %v3171 = vadd.f32 %v3169, %v3170
        %v3172 = vsel %vm2973, %v2932, 0.0
        %v3173 = vadd.f32 %v3171, %v3172
        %v3174 = vsel %vm2973, %v2933, 0.0
        %v3175 = vadd.f32 %v3173, %v3174
        %v3176 = vsel %vm2973, %v2934, 0.0
        %v3177 = vadd.f32 %v3175, %v3176
        %v3178 = vsel %vm2973, %v2935, 0.0
        %v3179 = vadd.f32 %v3177, %v3178
        %v3180 = vsel %vm2973, %v2936, 0.0
        %v3181 = vadd.f32 %v3179, %v3180
        %v3182 = vsel %vm2973, %v2937, 0.0
        %v3183 = vadd.f32 %v3181, %v3182
        %v3184 = vsel %vm2973, %v2938, 0.0
        %v3185 = vadd.f32 %v3183, %v3184
        %v3186 = vsel %vm2973, %v2939, 0.0
        %v3187 = vadd.f32 %v3185, %v3186
        %v3188 = vsel %vm2973, %v2940, 0.0
        %v3189 = vadd.f32 %v3187, %v3188
        %v3190 = vrot.slane %v3189, 4
        %v3191 = vadd.f32 %v3189, %v3190
        %v3192 = vrot.slane %v3191, 2
        %v3193 = vadd.f32 %v3191, %v3192
        %v3194 = vrot.slane %v3193, 1
        %v3195 = vadd.f32 %v3193, %v3194
        %v3196 = vsel %vm2973, %v2941, 0.0
        %v3197 = vsel %vm2973, %v2942, 0.0
        %v3198 = vadd.f32 %v3196, %v3197
        %v3199 = vsel %vm2973, %v2943, 0.0
        %v3200 = vadd.f32 %v3198, %v3199
        %v3201 = vsel %vm2973, %v2944, 0.0
        %v3202 = vadd.f32 %v3200, %v3201
        %v3203 = vsel %vm2973, %v2945, 0.0
        %v3204 = vadd.f32 %v3202, %v3203
        %v3205 = vsel %vm2973, %v2946, 0.0
        %v3206 = vadd.f32 %v3204, %v3205
        %v3207 = vsel %vm2973, %v2947, 0.0
        %v3208 = vadd.f32 %v3206, %v3207
        %v3209 = vsel %vm2973, %v2948, 0.0
        %v3210 = vadd.f32 %v3208, %v3209
        %v3211 = vsel %vm2973, %v2949, 0.0
        %v3212 = vadd.f32 %v3210, %v3211
        %v3213 = vsel %vm2973, %v2950, 0.0
        %v3214 = vadd.f32 %v3212, %v3213
        %v3215 = vsel %vm2973, %v2951, 0.0
        %v3216 = vadd.f32 %v3214, %v3215
        %v3217 = vsel %vm2973, %v2952, 0.0
        %v3218 = vadd.f32 %v3216, %v3217
        %v3219 = vsel %vm2973, %v2953, 0.0
        %v3220 = vadd.f32 %v3218, %v3219
        %v3221 = vsel %vm2973, %v2954, 0.0
        %v3222 = vadd.f32 %v3220, %v3221
        %v3223 = vsel %vm2973, %v2955, 0.0
        %v3224 = vadd.f32 %v3222, %v3223
        %v3225 = vsel %vm2973, %v2956, 0.0
        %v3226 = vadd.f32 %v3224, %v3225
        %v3227 = vrot.slane %v3226, 4
        %v3228 = vadd.f32 %v3226, %v3227
        %v3229 = vrot.slane %v3228, 2
        %v3230 = vadd.f32 %v3228, %v3229
        %v3231 = vrot.slane %v3230, 1
        %v3232 = vadd.f32 %v3230, %v3231
        %v3233 = vsel %vm2973, %v2957, 0.0
        %v3234 = vsel %vm2973, %v2958, 0.0
        %v3235 = vadd.f32 %v3233, %v3234
        %v3236 = vsel %vm2973, %v2959, 0.0
        %v3237 = vadd.f32 %v3235, %v3236
        %v3238 = vsel %vm2973, %v2960, 0.0
        %v3239 = vadd.f32 %v3237, %v3238
        %v3240 = vsel %vm2973, %v2961, 0.0
        %v3241 = vadd.f32 %v3239, %v3240
        %v3242 = vsel %vm2973, %v2962, 0.0
        %v3243 = vadd.f32 %v3241, %v3242
        %v3244 = vsel %vm2973, %v2963, 0.0
        %v3245 = vadd.f32 %v3243, %v3244
        %v3246 = vsel %vm2973, %v2964, 0.0
        %v3247 = vadd.f32 %v3245, %v3246
        %v3248 = vsel %vm2973, %v2965, 0.0
        %v3249 = vadd.f32 %v3247, %v3248
        %v3250 = vsel %vm2973, %v2966, 0.0
        %v3251 = vadd.f32 %v3249, %v3250
        %v3252 = vsel %vm2973, %v2967, 0.0
        %v3253 = vadd.f32 %v3251, %v3252
        %v3254 = vsel %vm2973, %v2968, 0.0
        %v3255 = vadd.f32 %v3253, %v3254
        %v3256 = vsel %vm2973, %v2969, 0.0
        %v3257 = vadd.f32 %v3255, %v3256
        %v3258 = vsel %vm2973, %v2970, 0.0
        %v3259 = vadd.f32 %v3257, %v3258
        %v3260 = vsel %vm2973, %v2971, 0.0
        %v3261 = vadd.f32 %v3259, %v3260
        %v3262 = vsel %vm2973, %v2972, 0.0
        %v3263 = vadd.f32 %v3261, %v3262
        %v3264 = vrot.slane %v3263, 4
        %v3265 = vadd.f32 %v3263, %v3264
        %v3266 = vrot.slane %v3265, 2
        %v3267 = vadd.f32 %v3265, %v3266
        %v3268 = vrot.slane %v3267, 1
        %v3269 = vadd.f32 %v3267, %v3268
        %vm3278 = vcmask 1041409
        %v3279 = vsel %vm3278, %v3047, %v3010
        %vm3280 = vcmask 1042434
        %v3281 = vsel %vm3280, %v3084, %v3279
        %vm3282 = vcmask 1043459
        %v3283 = vsel %vm3282, %v3121, %v3281
        %vm3284 = vcmask 1044484
        %v3285 = vsel %vm3284, %v3158, %v3283
        %vm3286 = vcmask 1045509
        %v3287 = vsel %vm3286, %v3195, %v3285
        %vm3288 = vcmask 1046534
        %v3289 = vsel %vm3288, %v3232, %v3287
        %vm3290 = vcmask 1047559
        %v3291 = vsel %vm3290, %v3269, %v3289
        %v3293 = vadd.f32 %v2068, %v3291
        %3294 = vst.msk [vmem:[#allocation2] sm:$0xff] %vm2973, %v3293
        %v3295 = vld [vmem:[#allocation4] sm:$0xff]
        %v3296 = vperm.slane %v1555, 0
        %v3297 = vlaneseq
        %v3298 = vshrl.u32 %v3297, 7
        %3300 = vset.pattern.permute.xlu0 %v3298
        %3301 = vperm.xlu0 %3300, %v3296
        %v3302 = vpop.permute.xlu0 %3301
        %v3303 = vlaneseq
        %v3304 = vshrl.u32 %v3303, 7
        %v3305 = vadd.s32 %v3304, 8
        %3306 = vset.pattern.permute.xlu0 %v3305
        %3307 = vperm.xlu0 %3306, %v3296
        %v3308 = vpop.permute.xlu0 %3307
        %v3309 = vlaneseq
        %v3310 = vshrl.u32 %v3309, 7
        %v3311 = vadd.s32 %v3310, 16
        %3312 = vset.pattern.permute.xlu0 %v3311
        %3313 = vperm.xlu0 %3312, %v3296
        %v3314 = vpop.permute.xlu0 %3313
        %v3315 = vlaneseq
        %v3316 = vshrl.u32 %v3315, 7
        %v3317 = vadd.s32 %v3316, 24
        %3318 = vset.pattern.permute.xlu0 %v3317
        %3319 = vperm.xlu0 %3318, %v3296
        %v3320 = vpop.permute.xlu0 %3319
        %v3321 = vlaneseq
        %v3322 = vshrl.u32 %v3321, 7
        %v3323 = vadd.s32 %v3322, 32
        %3324 = vset.pattern.permute.xlu0 %v3323
        %3325 = vperm.xlu0 %3324, %v3296
        %v3326 = vpop.permute.xlu0 %3325
        %v3327 = vlaneseq
        %v3328 = vshrl.u32 %v3327, 7
        %v3329 = vadd.s32 %v3328, 40
        %3330 = vset.pattern.permute.xlu0 %v3329
        %3331 = vperm.xlu0 %3330, %v3296
        %v3332 = vpop.permute.xlu0 %3331
        %v3333 = vlaneseq
        %v3334 = vshrl.u32 %v3333, 7
        %v3335 = vadd.s32 %v3334, 48
        %3336 = vset.pattern.permute.xlu0 %v3335
        %3337 = vperm.xlu0 %3336, %v3296
        %v3338 = vpop.permute.xlu0 %3337
        %v3339 = vlaneseq
        %v3340 = vshrl.u32 %v3339, 7
        %v3341 = vadd.s32 %v3340, 56
        %3342 = vset.pattern.permute.xlu0 %v3341
        %3343 = vperm.xlu0 %3342, %v3296
        %v3344 = vpop.permute.xlu0 %3343
        %v3345 = vlaneseq
        %v3346 = vshrl.u32 %v3345, 7
        %v3347 = vadd.s32 %v3346, 64
        %3348 = vset.pattern.permute.xlu0 %v3347
        %3349 = vperm.xlu0 %3348, %v3296
        %v3350 = vpop.permute.xlu0 %3349
        %v3351 = vlaneseq
        %v3352 = vshrl.u32 %v3351, 7
        %v3353 = vadd.s32 %v3352, 72
        %3354 = vset.pattern.permute.xlu0 %v3353
        %3355 = vperm.xlu0 %3354, %v3296
        %v3356 = vpop.permute.xlu0 %3355
        %v3357 = vlaneseq
        %v3358 = vshrl.u32 %v3357, 7
        %v3359 = vadd.s32 %v3358, 80
        %3360 = vset.pattern.permute.xlu0 %v3359
        %3361 = vperm.xlu0 %3360, %v3296
        %v3362 = vpop.permute.xlu0 %3361
        %v3363 = vlaneseq
        %v3364 = vshrl.u32 %v3363, 7
        %v3365 = vadd.s32 %v3364, 88
        %3366 = vset.pattern.permute.xlu0 %v3365
        %3367 = vperm.xlu0 %3366, %v3296
        %v3368 = vpop.permute.xlu0 %3367
        %v3369 = vlaneseq
        %v3370 = vshrl.u32 %v3369, 7
        %v3371 = vadd.s32 %v3370, 96
        %3372 = vset.pattern.permute.xlu0 %v3371
        %3373 = vperm.xlu0 %3372, %v3296
        %v3374 = vpop.permute.xlu0 %3373
        %v3375 = vlaneseq
        %v3376 = vshrl.u32 %v3375, 7
        %v3377 = vadd.s32 %v3376, 104
        %3378 = vset.pattern.permute.xlu0 %v3377
        %3379 = vperm.xlu0 %3378, %v3296
        %v3380 = vpop.permute.xlu0 %3379
        %v3381 = vlaneseq
        %v3382 = vshrl.u32 %v3381, 7
        %v3383 = vadd.s32 %v3382, 112
        %3384 = vset.pattern.permute.xlu0 %v3383
        %3385 = vperm.xlu0 %3384, %v3296
        %v3386 = vpop.permute.xlu0 %3385
        %v3387 = vlaneseq
        %v3388 = vshrl.u32 %v3387, 7
        %v3389 = vadd.s32 %v3388, 120
        %3390 = vset.pattern.permute.xlu0 %v3389
        %3391 = vperm.xlu0 %3390, %v3296
        %v3392 = vpop.permute.xlu0 %3391
        %v3393 = vperm.slane %v1555, 1
        %v3394 = vlaneseq
        %v3395 = vshrl.u32 %v3394, 7
        %3397 = vset.pattern.permute.xlu0 %v3395
        %3398 = vperm.xlu0 %3397, %v3393
        %v3399 = vpop.permute.xlu0 %3398
        %v3400 = vlaneseq
        %v3401 = vshrl.u32 %v3400, 7
        %v3402 = vadd.s32 %v3401, 8
        %3403 = vset.pattern.permute.xlu0 %v3402
        %3404 = vperm.xlu0 %3403, %v3393
        %v3405 = vpop.permute.xlu0 %3404
        %v3406 = vlaneseq
        %v3407 = vshrl.u32 %v3406, 7
        %v3408 = vadd.s32 %v3407, 16
        %3409 = vset.pattern.permute.xlu0 %v3408
        %3410 = vperm.xlu0 %3409, %v3393
        %v3411 = vpop.permute.xlu0 %3410
        %v3412 = vlaneseq
        %v3413 = vshrl.u32 %v3412, 7
        %v3414 = vadd.s32 %v3413, 24
        %3415 = vset.pattern.permute.xlu0 %v3414
        %3416 = vperm.xlu0 %3415, %v3393
        %v3417 = vpop.permute.xlu0 %3416
        %v3418 = vlaneseq
        %v3419 = vshrl.u32 %v3418, 7
        %v3420 = vadd.s32 %v3419, 32
        %3421 = vset.pattern.permute.xlu0 %v3420
        %3422 = vperm.xlu0 %3421, %v3393
        %v3423 = vpop.permute.xlu0 %3422
        %v3424 = vlaneseq
        %v3425 = vshrl.u32 %v3424, 7
        %v3426 = vadd.s32 %v3425, 40
        %3427 = vset.pattern.permute.xlu0 %v3426
        %3428 = vperm.xlu0 %3427, %v3393
        %v3429 = vpop.permute.xlu0 %3428
        %v3430 = vlaneseq
        %v3431 = vshrl.u32 %v3430, 7
        %v3432 = vadd.s32 %v3431, 48
        %3433 = vset.pattern.permute.xlu0 %v3432
        %3434 = vperm.xlu0 %3433, %v3393
        %v3435 = vpop.permute.xlu0 %3434
        %v3436 = vlaneseq
        %v3437 = vshrl.u32 %v3436, 7
        %v3438 = vadd.s32 %v3437, 56
        %3439 = vset.pattern.permute.xlu0 %v3438
        %3440 = vperm.xlu0 %3439, %v3393
        %v3441 = vpop.permute.xlu0 %3440
        %v3442 = vlaneseq
        %v3443 = vshrl.u32 %v3442, 7
        %v3444 = vadd.s32 %v3443, 64
        %3445 = vset.pattern.permute.xlu0 %v3444
        %3446 = vperm.xlu0 %3445, %v3393
        %v3447 = vpop.permute.xlu0 %3446
        %v3448 = vlaneseq
        %v3449 = vshrl.u32 %v3448, 7
        %v3450 = vadd.s32 %v3449, 72
        %3451 = vset.pattern.permute.xlu0 %v3450
        %3452 = vperm.xlu0 %3451, %v3393
        %v3453 = vpop.permute.xlu0 %3452
        %v3454 = vlaneseq
        %v3455 = vshrl.u32 %v3454, 7
        %v3456 = vadd.s32 %v3455, 80
        %3457 = vset.pattern.permute.xlu0 %v3456
        %3458 = vperm.xlu0 %3457, %v3393
        %v3459 = vpop.permute.xlu0 %3458
        %v3460 = vlaneseq
        %v3461 = vshrl.u32 %v3460, 7
        %v3462 = vadd.s32 %v3461, 88
        %3463 = vset.pattern.permute.xlu0 %v3462
        %3464 = vperm.xlu0 %3463, %v3393
        %v3465 = vpop.permute.xlu0 %3464
        %v3466 = vlaneseq
        %v3467 = vshrl.u32 %v3466, 7
        %v3468 = vadd.s32 %v3467, 96
        %3469 = vset.pattern.permute.xlu0 %v3468
        %3470 = vperm.xlu0 %3469, %v3393
        %v3471 = vpop.permute.xlu0 %3470
        %v3472 = vlaneseq
        %v3473 = vshrl.u32 %v3472, 7
        %v3474 = vadd.s32 %v3473, 104
        %3475 = vset.pattern.permute.xlu0 %v3474
        %3476 = vperm.xlu0 %3475, %v3393
        %v3477 = vpop.permute.xlu0 %3476
        %v3478 = vlaneseq
        %v3479 = vshrl.u32 %v3478, 7
        %v3480 = vadd.s32 %v3479, 112
        %3481 = vset.pattern.permute.xlu0 %v3480
        %3482 = vperm.xlu0 %3481, %v3393
        %v3483 = vpop.permute.xlu0 %3482
        %v3484 = vlaneseq
        %v3485 = vshrl.u32 %v3484, 7
        %v3486 = vadd.s32 %v3485, 120
        %3487 = vset.pattern.permute.xlu0 %v3486
        %3488 = vperm.xlu0 %3487, %v3393
        %v3489 = vpop.permute.xlu0 %3488
        %v3490 = vperm.slane %v1555, 2
        %v3491 = vlaneseq
        %v3492 = vshrl.u32 %v3491, 7
        %3494 = vset.pattern.permute.xlu0 %v3492
        %3495 = vperm.xlu0 %3494, %v3490
        %v3496 = vpop.permute.xlu0 %3495
        %v3497 = vlaneseq
        %v3498 = vshrl.u32 %v3497, 7
        %v3499 = vadd.s32 %v3498, 8
        %3500 = vset.pattern.permute.xlu0 %v3499
        %3501 = vperm.xlu0 %3500, %v3490
        %v3502 = vpop.permute.xlu0 %3501
        %v3503 = vlaneseq
        %v3504 = vshrl.u32 %v3503, 7
        %v3505 = vadd.s32 %v3504, 16
        %3506 = vset.pattern.permute.xlu0 %v3505
        %3507 = vperm.xlu0 %3506, %v3490
        %v3508 = vpop.permute.xlu0 %3507
        %v3509 = vlaneseq
        %v3510 = vshrl.u32 %v3509, 7
        %v3511 = vadd.s32 %v3510, 24
        %3512 = vset.pattern.permute.xlu0 %v3511
        %3513 = vperm.xlu0 %3512, %v3490
        %v3514 = vpop.permute.xlu0 %3513
        %v3515 = vlaneseq
        %v3516 = vshrl.u32 %v3515, 7
        %v3517 = vadd.s32 %v3516, 32
        %3518 = vset.pattern.permute.xlu0 %v3517
        %3519 = vperm.xlu0 %3518, %v3490
        %v3520 = vpop.permute.xlu0 %3519
        %v3521 = vlaneseq
        %v3522 = vshrl.u32 %v3521, 7
        %v3523 = vadd.s32 %v3522, 40
        %3524 = vset.pattern.permute.xlu0 %v3523
        %3525 = vperm.xlu0 %3524, %v3490
        %v3526 = vpop.permute.xlu0 %3525
        %v3527 = vlaneseq
        %v3528 = vshrl.u32 %v3527, 7
        %v3529 = vadd.s32 %v3528, 48
        %3530 = vset.pattern.permute.xlu0 %v3529
        %3531 = vperm.xlu0 %3530, %v3490
        %v3532 = vpop.permute.xlu0 %3531
        %v3533 = vlaneseq
        %v3534 = vshrl.u32 %v3533, 7
        %v3535 = vadd.s32 %v3534, 56
        %3536 = vset.pattern.permute.xlu0 %v3535
        %3537 = vperm.xlu0 %3536, %v3490
        %v3538 = vpop.permute.xlu0 %3537
        %v3539 = vlaneseq
        %v3540 = vshrl.u32 %v3539, 7
        %v3541 = vadd.s32 %v3540, 64
        %3542 = vset.pattern.permute.xlu0 %v3541
        %3543 = vperm.xlu0 %3542, %v3490
        %v3544 = vpop.permute.xlu0 %3543
        %v3545 = vlaneseq
        %v3546 = vshrl.u32 %v3545, 7
        %v3547 = vadd.s32 %v3546, 72
        %3548 = vset.pattern.permute.xlu0 %v3547
        %3549 = vperm.xlu0 %3548, %v3490
        %v3550 = vpop.permute.xlu0 %3549
        %v3551 = vlaneseq
        %v3552 = vshrl.u32 %v3551, 7
        %v3553 = vadd.s32 %v3552, 80
        %3554 = vset.pattern.permute.xlu0 %v3553
        %3555 = vperm.xlu0 %3554, %v3490
        %v3556 = vpop.permute.xlu0 %3555
        %v3557 = vlaneseq
        %v3558 = vshrl.u32 %v3557, 7
        %v3559 = vadd.s32 %v3558, 88
        %3560 = vset.pattern.permute.xlu0 %v3559
        %3561 = vperm.xlu0 %3560, %v3490
        %v3562 = vpop.permute.xlu0 %3561
        %v3563 = vlaneseq
        %v3564 = vshrl.u32 %v3563, 7
        %v3565 = vadd.s32 %v3564, 96
        %3566 = vset.pattern.permute.xlu0 %v3565
        %3567 = vperm.xlu0 %3566, %v3490
        %v3568 = vpop.permute.xlu0 %3567
        %v3569 = vlaneseq
        %v3570 = vshrl.u32 %v3569, 7
        %v3571 = vadd.s32 %v3570, 104
        %3572 = vset.pattern.permute.xlu0 %v3571
        %3573 = vperm.xlu0 %3572, %v3490
        %v3574 = vpop.permute.xlu0 %3573
        %v3575 = vlaneseq
        %v3576 = vshrl.u32 %v3575, 7
        %v3577 = vadd.s32 %v3576, 112
        %3578 = vset.pattern.permute.xlu0 %v3577
        %3579 = vperm.xlu0 %3578, %v3490
        %v3580 = vpop.permute.xlu0 %3579
        %v3581 = vlaneseq
        %v3582 = vshrl.u32 %v3581, 7
        %v3583 = vadd.s32 %v3582, 120
        %3584 = vset.pattern.permute.xlu0 %v3583
        %3585 = vperm.xlu0 %3584, %v3490
        %v3586 = vpop.permute.xlu0 %3585
        %v3587 = vperm.slane %v1555, 3
        %v3588 = vlaneseq
        %v3589 = vshrl.u32 %v3588, 7
        %3591 = vset.pattern.permute.xlu0 %v3589
        %3592 = vperm.xlu0 %3591, %v3587
        %v3593 = vpop.permute.xlu0 %3592
        %v3594 = vlaneseq
        %v3595 = vshrl.u32 %v3594, 7
        %v3596 = vadd.s32 %v3595, 8
        %3597 = vset.pattern.permute.xlu0 %v3596
        %3598 = vperm.xlu0 %3597, %v3587
        %v3599 = vpop.permute.xlu0 %3598
        %v3600 = vlaneseq
        %v3601 = vshrl.u32 %v3600, 7
        %v3602 = vadd.s32 %v3601, 16
        %3603 = vset.pattern.permute.xlu0 %v3602
        %3604 = vperm.xlu0 %3603, %v3587
        %v3605 = vpop.permute.xlu0 %3604
        %v3606 = vlaneseq
        %v3607 = vshrl.u32 %v3606, 7
        %v3608 = vadd.s32 %v3607, 24
        %3609 = vset.pattern.permute.xlu0 %v3608
        %3610 = vperm.xlu0 %3609, %v3587
        %v3611 = vpop.permute.xlu0 %3610
        %v3612 = vlaneseq
        %v3613 = vshrl.u32 %v3612, 7
        %v3614 = vadd.s32 %v3613, 32
        %3615 = vset.pattern.permute.xlu0 %v3614
        %3616 = vperm.xlu0 %3615, %v3587
        %v3617 = vpop.permute.xlu0 %3616
        %v3618 = vlaneseq
        %v3619 = vshrl.u32 %v3618, 7
        %v3620 = vadd.s32 %v3619, 40
        %3621 = vset.pattern.permute.xlu0 %v3620
        %3622 = vperm.xlu0 %3621, %v3587
        %v3623 = vpop.permute.xlu0 %3622
        %v3624 = vlaneseq
        %v3625 = vshrl.u32 %v3624, 7
        %v3626 = vadd.s32 %v3625, 48
        %3627 = vset.pattern.permute.xlu0 %v3626
        %3628 = vperm.xlu0 %3627, %v3587
        %v3629 = vpop.permute.xlu0 %3628
        %v3630 = vlaneseq
        %v3631 = vshrl.u32 %v3630, 7
        %v3632 = vadd.s32 %v3631, 56
        %3633 = vset.pattern.permute.xlu0 %v3632
        %3634 = vperm.xlu0 %3633, %v3587
        %v3635 = vpop.permute.xlu0 %3634
        %v3636 = vlaneseq
        %v3637 = vshrl.u32 %v3636, 7
        %v3638 = vadd.s32 %v3637, 64
        %3639 = vset.pattern.permute.xlu0 %v3638
        %3640 = vperm.xlu0 %3639, %v3587
        %v3641 = vpop.permute.xlu0 %3640
        %v3642 = vlaneseq
        %v3643 = vshrl.u32 %v3642, 7
        %v3644 = vadd.s32 %v3643, 72
        %3645 = vset.pattern.permute.xlu0 %v3644
        %3646 = vperm.xlu0 %3645, %v3587
        %v3647 = vpop.permute.xlu0 %3646
        %v3648 = vlaneseq
        %v3649 = vshrl.u32 %v3648, 7
        %v3650 = vadd.s32 %v3649, 80
        %3651 = vset.pattern.permute.xlu0 %v3650
        %3652 = vperm.xlu0 %3651, %v3587
        %v3653 = vpop.permute.xlu0 %3652
        %v3654 = vlaneseq
        %v3655 = vshrl.u32 %v3654, 7
        %v3656 = vadd.s32 %v3655, 88
        %3657 = vset.pattern.permute.xlu0 %v3656
        %3658 = vperm.xlu0 %3657, %v3587
        %v3659 = vpop.permute.xlu0 %3658
        %v3660 = vlaneseq
        %v3661 = vshrl.u32 %v3660, 7
        %v3662 = vadd.s32 %v3661, 96
        %3663 = vset.pattern.permute.xlu0 %v3662
        %3664 = vperm.xlu0 %3663, %v3587
        %v3665 = vpop.permute.xlu0 %3664
        %v3666 = vlaneseq
        %v3667 = vshrl.u32 %v3666, 7
        %v3668 = vadd.s32 %v3667, 104
        %3669 = vset.pattern.permute.xlu0 %v3668
        %3670 = vperm.xlu0 %3669, %v3587
        %v3671 = vpop.permute.xlu0 %3670
        %v3672 = vlaneseq
        %v3673 = vshrl.u32 %v3672, 7
        %v3674 = vadd.s32 %v3673, 112
        %3675 = vset.pattern.permute.xlu0 %v3674
        %3676 = vperm.xlu0 %3675, %v3587
        %v3677 = vpop.permute.xlu0 %3676
        %v3678 = vlaneseq
        %v3679 = vshrl.u32 %v3678, 7
        %v3680 = vadd.s32 %v3679, 120
        %3681 = vset.pattern.permute.xlu0 %v3680
        %3682 = vperm.xlu0 %3681, %v3587
        %v3683 = vpop.permute.xlu0 %3682
        %v3684 = vperm.slane %v1555, 4
        %v3685 = vlaneseq
        %v3686 = vshrl.u32 %v3685, 7
        %3688 = vset.pattern.permute.xlu0 %v3686
        %3689 = vperm.xlu0 %3688, %v3684
        %v3690 = vpop.permute.xlu0 %3689
        %v3691 = vlaneseq
        %v3692 = vshrl.u32 %v3691, 7
        %v3693 = vadd.s32 %v3692, 8
        %3694 = vset.pattern.permute.xlu0 %v3693
        %3695 = vperm.xlu0 %3694, %v3684
        %v3696 = vpop.permute.xlu0 %3695
        %v3697 = vlaneseq
        %v3698 = vshrl.u32 %v3697, 7
        %v3699 = vadd.s32 %v3698, 16
        %3700 = vset.pattern.permute.xlu0 %v3699
        %3701 = vperm.xlu0 %3700, %v3684
        %v3702 = vpop.permute.xlu0 %3701
        %v3703 = vlaneseq
        %v3704 = vshrl.u32 %v3703, 7
        %v3705 = vadd.s32 %v3704, 24
        %3706 = vset.pattern.permute.xlu0 %v3705
        %3707 = vperm.xlu0 %3706, %v3684
        %v3708 = vpop.permute.xlu0 %3707
        %v3709 = vlaneseq
        %v3710 = vshrl.u32 %v3709, 7
        %v3711 = vadd.s32 %v3710, 32
        %3712 = vset.pattern.permute.xlu0 %v3711
        %3713 = vperm.xlu0 %3712, %v3684
        %v3714 = vpop.permute.xlu0 %3713
        %v3715 = vlaneseq
        %v3716 = vshrl.u32 %v3715, 7
        %v3717 = vadd.s32 %v3716, 40
        %3718 = vset.pattern.permute.xlu0 %v3717
        %3719 = vperm.xlu0 %3718, %v3684
        %v3720 = vpop.permute.xlu0 %3719
        %v3721 = vlaneseq
        %v3722 = vshrl.u32 %v3721, 7
        %v3723 = vadd.s32 %v3722, 48
        %3724 = vset.pattern.permute.xlu0 %v3723
        %3725 = vperm.xlu0 %3724, %v3684
        %v3726 = vpop.permute.xlu0 %3725
        %v3727 = vlaneseq
        %v3728 = vshrl.u32 %v3727, 7
        %v3729 = vadd.s32 %v3728, 56
        %3730 = vset.pattern.permute.xlu0 %v3729
        %3731 = vperm.xlu0 %3730, %v3684
        %v3732 = vpop.permute.xlu0 %3731
        %v3733 = vlaneseq
        %v3734 = vshrl.u32 %v3733, 7
        %v3735 = vadd.s32 %v3734, 64
        %3736 = vset.pattern.permute.xlu0 %v3735
        %3737 = vperm.xlu0 %3736, %v3684
        %v3738 = vpop.permute.xlu0 %3737
        %v3739 = vlaneseq
        %v3740 = vshrl.u32 %v3739, 7
        %v3741 = vadd.s32 %v3740, 72
        %3742 = vset.pattern.permute.xlu0 %v3741
        %3743 = vperm.xlu0 %3742, %v3684
        %v3744 = vpop.permute.xlu0 %3743
        %v3745 = vlaneseq
        %v3746 = vshrl.u32 %v3745, 7
        %v3747 = vadd.s32 %v3746, 80
        %3748 = vset.pattern.permute.xlu0 %v3747
        %3749 = vperm.xlu0 %3748, %v3684
        %v3750 = vpop.permute.xlu0 %3749
        %v3751 = vlaneseq
        %v3752 = vshrl.u32 %v3751, 7
        %v3753 = vadd.s32 %v3752, 88
        %3754 = vset.pattern.permute.xlu0 %v3753
        %3755 = vperm.xlu0 %3754, %v3684
        %v3756 = vpop.permute.xlu0 %3755
        %v3757 = vlaneseq
        %v3758 = vshrl.u32 %v3757, 7
        %v3759 = vadd.s32 %v3758, 96
        %3760 = vset.pattern.permute.xlu0 %v3759
        %3761 = vperm.xlu0 %3760, %v3684
        %v3762 = vpop.permute.xlu0 %3761
        %v3763 = vlaneseq
        %v3764 = vshrl.u32 %v3763, 7
        %v3765 = vadd.s32 %v3764, 104
        %3766 = vset.pattern.permute.xlu0 %v3765
        %3767 = vperm.xlu0 %3766, %v3684
        %v3768 = vpop.permute.xlu0 %3767
        %v3769 = vlaneseq
        %v3770 = vshrl.u32 %v3769, 7
        %v3771 = vadd.s32 %v3770, 112
        %3772 = vset.pattern.permute.xlu0 %v3771
        %3773 = vperm.xlu0 %3772, %v3684
        %v3774 = vpop.permute.xlu0 %3773
        %v3775 = vlaneseq
        %v3776 = vshrl.u32 %v3775, 7
        %v3777 = vadd.s32 %v3776, 120
        %3778 = vset.pattern.permute.xlu0 %v3777
        %3779 = vperm.xlu0 %3778, %v3684
        %v3780 = vpop.permute.xlu0 %3779
        %v3781 = vperm.slane %v1555, 5
        %v3782 = vlaneseq
        %v3783 = vshrl.u32 %v3782, 7
        %3785 = vset.pattern.permute.xlu0 %v3783
        %3786 = vperm.xlu0 %3785, %v3781
        %v3787 = vpop.permute.xlu0 %3786
        %v3788 = vlaneseq
        %v3789 = vshrl.u32 %v3788, 7
        %v3790 = vadd.s32 %v3789, 8
        %3791 = vset.pattern.permute.xlu0 %v3790
        %3792 = vperm.xlu0 %3791, %v3781
        %v3793 = vpop.permute.xlu0 %3792
        %v3794 = vlaneseq
        %v3795 = vshrl.u32 %v3794, 7
        %v3796 = vadd.s32 %v3795, 16
        %3797 = vset.pattern.permute.xlu0 %v3796
        %3798 = vperm.xlu0 %3797, %v3781
        %v3799 = vpop.permute.xlu0 %3798
        %v3800 = vlaneseq
        %v3801 = vshrl.u32 %v3800, 7
        %v3802 = vadd.s32 %v3801, 24
        %3803 = vset.pattern.permute.xlu0 %v3802
        %3804 = vperm.xlu0 %3803, %v3781
        %v3805 = vpop.permute.xlu0 %3804
        %v3806 = vlaneseq
        %v3807 = vshrl.u32 %v3806, 7
        %v3808 = vadd.s32 %v3807, 32
        %3809 = vset.pattern.permute.xlu0 %v3808
        %3810 = vperm.xlu0 %3809, %v3781
        %v3811 = vpop.permute.xlu0 %3810
        %v3812 = vlaneseq
        %v3813 = vshrl.u32 %v3812, 7
        %v3814 = vadd.s32 %v3813, 40
        %3815 = vset.pattern.permute.xlu0 %v3814
        %3816 = vperm.xlu0 %3815, %v3781
        %v3817 = vpop.permute.xlu0 %3816
        %v3818 = vlaneseq
        %v3819 = vshrl.u32 %v3818, 7
        %v3820 = vadd.s32 %v3819, 48
        %3821 = vset.pattern.permute.xlu0 %v3820
        %3822 = vperm.xlu0 %3821, %v3781
        %v3823 = vpop.permute.xlu0 %3822
        %v3824 = vlaneseq
        %v3825 = vshrl.u32 %v3824, 7
        %v3826 = vadd.s32 %v3825, 56
        %3827 = vset.pattern.permute.xlu0 %v3826
        %3828 = vperm.xlu0 %3827, %v3781
        %v3829 = vpop.permute.xlu0 %3828
        %v3830 = vlaneseq
        %v3831 = vshrl.u32 %v3830, 7
        %v3832 = vadd.s32 %v3831, 64
        %3833 = vset.pattern.permute.xlu0 %v3832
        %3834 = vperm.xlu0 %3833, %v3781
        %v3835 = vpop.permute.xlu0 %3834
        %v3836 = vlaneseq
        %v3837 = vshrl.u32 %v3836, 7
        %v3838 = vadd.s32 %v3837, 72
        %3839 = vset.pattern.permute.xlu0 %v3838
        %3840 = vperm.xlu0 %3839, %v3781
        %v3841 = vpop.permute.xlu0 %3840
        %v3842 = vlaneseq
        %v3843 = vshrl.u32 %v3842, 7
        %v3844 = vadd.s32 %v3843, 80
        %3845 = vset.pattern.permute.xlu0 %v3844
        %3846 = vperm.xlu0 %3845, %v3781
        %v3847 = vpop.permute.xlu0 %3846
        %v3848 = vlaneseq
        %v3849 = vshrl.u32 %v3848, 7
        %v3850 = vadd.s32 %v3849, 88
        %3851 = vset.pattern.permute.xlu0 %v3850
        %3852 = vperm.xlu0 %3851, %v3781
        %v3853 = vpop.permute.xlu0 %3852
        %v3854 = vlaneseq
        %v3855 = vshrl.u32 %v3854, 7
        %v3856 = vadd.s32 %v3855, 96
        %3857 = vset.pattern.permute.xlu0 %v3856
        %3858 = vperm.xlu0 %3857, %v3781
        %v3859 = vpop.permute.xlu0 %3858
        %v3860 = vlaneseq
        %v3861 = vshrl.u32 %v3860, 7
        %v3862 = vadd.s32 %v3861, 104
        %3863 = vset.pattern.permute.xlu0 %v3862
        %3864 = vperm.xlu0 %3863, %v3781
        %v3865 = vpop.permute.xlu0 %3864
        %v3866 = vlaneseq
        %v3867 = vshrl.u32 %v3866, 7
        %v3868 = vadd.s32 %v3867, 112
        %3869 = vset.pattern.permute.xlu0 %v3868
        %3870 = vperm.xlu0 %3869, %v3781
        %v3871 = vpop.permute.xlu0 %3870
        %v3872 = vlaneseq
        %v3873 = vshrl.u32 %v3872, 7
        %v3874 = vadd.s32 %v3873, 120
        %3875 = vset.pattern.permute.xlu0 %v3874
        %3876 = vperm.xlu0 %3875, %v3781
        %v3877 = vpop.permute.xlu0 %3876
        %v3878 = vperm.slane %v1555, 6
        %v3879 = vlaneseq
        %v3880 = vshrl.u32 %v3879, 7
        %3882 = vset.pattern.permute.xlu0 %v3880
        %3883 = vperm.xlu0 %3882, %v3878
        %v3884 = vpop.permute.xlu0 %3883
        %v3885 = vlaneseq
        %v3886 = vshrl.u32 %v3885, 7
        %v3887 = vadd.s32 %v3886, 8
        %3888 = vset.pattern.permute.xlu0 %v3887
        %3889 = vperm.xlu0 %3888, %v3878
        %v3890 = vpop.permute.xlu0 %3889
        %v3891 = vlaneseq
        %v3892 = vshrl.u32 %v3891, 7
        %v3893 = vadd.s32 %v3892, 16
        %3894 = vset.pattern.permute.xlu0 %v3893
        %3895 = vperm.xlu0 %3894, %v3878
        %v3896 = vpop.permute.xlu0 %3895
        %v3897 = vlaneseq
        %v3898 = vshrl.u32 %v3897, 7
        %v3899 = vadd.s32 %v3898, 24
        %3900 = vset.pattern.permute.xlu0 %v3899
        %3901 = vperm.xlu0 %3900, %v3878
        %v3902 = vpop.permute.xlu0 %3901
        %v3903 = vlaneseq
        %v3904 = vshrl.u32 %v3903, 7
        %v3905 = vadd.s32 %v3904, 32
        %3906 = vset.pattern.permute.xlu0 %v3905
        %3907 = vperm.xlu0 %3906, %v3878
        %v3908 = vpop.permute.xlu0 %3907
        %v3909 = vlaneseq
        %v3910 = vshrl.u32 %v3909, 7
        %v3911 = vadd.s32 %v3910, 40
        %3912 = vset.pattern.permute.xlu0 %v3911
        %3913 = vperm.xlu0 %3912, %v3878
        %v3914 = vpop.permute.xlu0 %3913
        %v3915 = vlaneseq
        %v3916 = vshrl.u32 %v3915, 7
        %v3917 = vadd.s32 %v3916, 48
        %3918 = vset.pattern.permute.xlu0 %v3917
        %3919 = vperm.xlu0 %3918, %v3878
        %v3920 = vpop.permute.xlu0 %3919
        %v3921 = vlaneseq
        %v3922 = vshrl.u32 %v3921, 7
        %v3923 = vadd.s32 %v3922, 56
        %3924 = vset.pattern.permute.xlu0 %v3923
        %3925 = vperm.xlu0 %3924, %v3878
        %v3926 = vpop.permute.xlu0 %3925
        %v3927 = vlaneseq
        %v3928 = vshrl.u32 %v3927, 7
        %v3929 = vadd.s32 %v3928, 64
        %3930 = vset.pattern.permute.xlu0 %v3929
        %3931 = vperm.xlu0 %3930, %v3878
        %v3932 = vpop.permute.xlu0 %3931
        %v3933 = vlaneseq
        %v3934 = vshrl.u32 %v3933, 7
        %v3935 = vadd.s32 %v3934, 72
        %3936 = vset.pattern.permute.xlu0 %v3935
        %3937 = vperm.xlu0 %3936, %v3878
        %v3938 = vpop.permute.xlu0 %3937
        %v3939 = vlaneseq
        %v3940 = vshrl.u32 %v3939, 7
        %v3941 = vadd.s32 %v3940, 80
        %3942 = vset.pattern.permute.xlu0 %v3941
        %3943 = vperm.xlu0 %3942, %v3878
        %v3944 = vpop.permute.xlu0 %3943
        %v3945 = vlaneseq
        %v3946 = vshrl.u32 %v3945, 7
        %v3947 = vadd.s32 %v3946, 88
        %3948 = vset.pattern.permute.xlu0 %v3947
        %3949 = vperm.xlu0 %3948, %v3878
        %v3950 = vpop.permute.xlu0 %3949
        %v3951 = vlaneseq
        %v3952 = vshrl.u32 %v3951, 7
        %v3953 = vadd.s32 %v3952, 96
        %3954 = vset.pattern.permute.xlu0 %v3953
        %3955 = vperm.xlu0 %3954, %v3878
        %v3956 = vpop.permute.xlu0 %3955
        %v3957 = vlaneseq
        %v3958 = vshrl.u32 %v3957, 7
        %v3959 = vadd.s32 %v3958, 104
        %3960 = vset.pattern.permute.xlu0 %v3959
        %3961 = vperm.xlu0 %3960, %v3878
        %v3962 = vpop.permute.xlu0 %3961
        %v3963 = vlaneseq
        %v3964 = vshrl.u32 %v3963, 7
        %v3965 = vadd.s32 %v3964, 112
        %3966 = vset.pattern.permute.xlu0 %v3965
        %3967 = vperm.xlu0 %3966, %v3878
        %v3968 = vpop.permute.xlu0 %3967
        %v3969 = vlaneseq
        %v3970 = vshrl.u32 %v3969, 7
        %v3971 = vadd.s32 %v3970, 120
        %3972 = vset.pattern.permute.xlu0 %v3971
        %3973 = vperm.xlu0 %3972, %v3878
        %v3974 = vpop.permute.xlu0 %3973
        %v3975 = vperm.slane %v1555, 7
        %v3976 = vlaneseq
        %v3977 = vshrl.u32 %v3976, 7
        %3979 = vset.pattern.permute.xlu0 %v3977
        %3980 = vperm.xlu0 %3979, %v3975
        %v3981 = vpop.permute.xlu0 %3980
        %v3982 = vlaneseq
        %v3983 = vshrl.u32 %v3982, 7
        %v3984 = vadd.s32 %v3983, 8
        %3985 = vset.pattern.permute.xlu0 %v3984
        %3986 = vperm.xlu0 %3985, %v3975
        %v3987 = vpop.permute.xlu0 %3986
        %v3988 = vlaneseq
        %v3989 = vshrl.u32 %v3988, 7
        %v3990 = vadd.s32 %v3989, 16
        %3991 = vset.pattern.permute.xlu0 %v3990
        %3992 = vperm.xlu0 %3991, %v3975
        %v3993 = vpop.permute.xlu0 %3992
        %v3994 = vlaneseq
        %v3995 = vshrl.u32 %v3994, 7
        %v3996 = vadd.s32 %v3995, 24
        %3997 = vset.pattern.permute.xlu0 %v3996
        %3998 = vperm.xlu0 %3997, %v3975
        %v3999 = vpop.permute.xlu0 %3998
        %v4000 = vlaneseq
        %v4001 = vshrl.u32 %v4000, 7
        %v4002 = vadd.s32 %v4001, 32
        %4003 = vset.pattern.permute.xlu0 %v4002
        %4004 = vperm.xlu0 %4003, %v3975
        %v4005 = vpop.permute.xlu0 %4004
        %v4006 = vlaneseq
        %v4007 = vshrl.u32 %v4006, 7
        %v4008 = vadd.s32 %v4007, 40
        %4009 = vset.pattern.permute.xlu0 %v4008
        %4010 = vperm.xlu0 %4009, %v3975
        %v4011 = vpop.permute.xlu0 %4010
        %v4012 = vlaneseq
        %v4013 = vshrl.u32 %v4012, 7
        %v4014 = vadd.s32 %v4013, 48
        %4015 = vset.pattern.permute.xlu0 %v4014
        %4016 = vperm.xlu0 %4015, %v3975
        %v4017 = vpop.permute.xlu0 %4016
        %v4018 = vlaneseq
        %v4019 = vshrl.u32 %v4018, 7
        %v4020 = vadd.s32 %v4019, 56
        %4021 = vset.pattern.permute.xlu0 %v4020
        %4022 = vperm.xlu0 %4021, %v3975
        %v4023 = vpop.permute.xlu0 %4022
        %v4024 = vlaneseq
        %v4025 = vshrl.u32 %v4024, 7
        %v4026 = vadd.s32 %v4025, 64
        %4027 = vset.pattern.permute.xlu0 %v4026
        %4028 = vperm.xlu0 %4027, %v3975
        %v4029 = vpop.permute.xlu0 %4028
        %v4030 = vlaneseq
        %v4031 = vshrl.u32 %v4030, 7
        %v4032 = vadd.s32 %v4031, 72
        %4033 = vset.pattern.permute.xlu0 %v4032
        %4034 = vperm.xlu0 %4033, %v3975
        %v4035 = vpop.permute.xlu0 %4034
        %v4036 = vlaneseq
        %v4037 = vshrl.u32 %v4036, 7
        %v4038 = vadd.s32 %v4037, 80
        %4039 = vset.pattern.permute.xlu0 %v4038
        %4040 = vperm.xlu0 %4039, %v3975
        %v4041 = vpop.permute.xlu0 %4040
        %v4042 = vlaneseq
        %v4043 = vshrl.u32 %v4042, 7
        %v4044 = vadd.s32 %v4043, 88
        %4045 = vset.pattern.permute.xlu0 %v4044
        %4046 = vperm.xlu0 %4045, %v3975
        %v4047 = vpop.permute.xlu0 %4046
        %v4048 = vlaneseq
        %v4049 = vshrl.u32 %v4048, 7
        %v4050 = vadd.s32 %v4049, 96
        %4051 = vset.pattern.permute.xlu0 %v4050
        %4052 = vperm.xlu0 %4051, %v3975
        %v4053 = vpop.permute.xlu0 %4052
        %v4054 = vlaneseq
        %v4055 = vshrl.u32 %v4054, 7
        %v4056 = vadd.s32 %v4055, 104
        %4057 = vset.pattern.permute.xlu0 %v4056
        %4058 = vperm.xlu0 %4057, %v3975
        %v4059 = vpop.permute.xlu0 %4058
        %v4060 = vlaneseq
        %v4061 = vshrl.u32 %v4060, 7
        %v4062 = vadd.s32 %v4061, 112
        %4063 = vset.pattern.permute.xlu0 %v4062
        %4064 = vperm.xlu0 %4063, %v3975
        %v4065 = vpop.permute.xlu0 %4064
        %v4066 = vlaneseq
        %v4067 = vshrl.u32 %v4066, 7
        %v4068 = vadd.s32 %v4067, 120
        %4069 = vset.pattern.permute.xlu0 %v4068
        %4070 = vperm.xlu0 %4069, %v3975
        %v4071 = vpop.permute.xlu0 %4070
        %v4072 = vmul.f32 %v1940, %v3302
        %v4073 = vmul.f32 %v1941, %v3308
        %v4074 = vmul.f32 %v1942, %v3314
        %v4075 = vmul.f32 %v1943, %v3320
        %v4076 = vmul.f32 %v1944, %v3326
        %v4077 = vmul.f32 %v1945, %v3332
        %v4078 = vmul.f32 %v1946, %v3338
        %v4079 = vmul.f32 %v1947, %v3344
        %v4080 = vmul.f32 %v1948, %v3350
        %v4081 = vmul.f32 %v1949, %v3356
        %v4082 = vmul.f32 %v1950, %v3362
        %v4083 = vmul.f32 %v1951, %v3368
        %v4084 = vmul.f32 %v1952, %v3374
        %v4085 = vmul.f32 %v1953, %v3380
        %v4086 = vmul.f32 %v1954, %v3386
        %v4087 = vmul.f32 %v1955, %v3392
        %v4088 = vmul.f32 %v1956, %v3399
        %v4089 = vmul.f32 %v1957, %v3405
        %v4090 = vmul.f32 %v1958, %v3411
        %v4091 = vmul.f32 %v1959, %v3417
        %v4092 = vmul.f32 %v1960, %v3423
        %v4093 = vmul.f32 %v1961, %v3429
        %v4094 = vmul.f32 %v1962, %v3435
        %v4095 = vmul.f32 %v1963, %v3441
        %v4096 = vmul.f32 %v1964, %v3447
        %v4097 = vmul.f32 %v1965, %v3453
        %v4098 = vmul.f32 %v1966, %v3459
        %v4099 = vmul.f32 %v1967, %v3465
        %v4100 = vmul.f32 %v1968, %v3471
        %v4101 = vmul.f32 %v1969, %v3477
        %v4102 = vmul.f32 %v1970, %v3483
        %v4103 = vmul.f32 %v1971, %v3489
        %v4104 = vmul.f32 %v1972, %v3496
        %v4105 = vmul.f32 %v1973, %v3502
        %v4106 = vmul.f32 %v1974, %v3508
        %v4107 = vmul.f32 %v1975, %v3514
        %v4108 = vmul.f32 %v1976, %v3520
        %v4109 = vmul.f32 %v1977, %v3526
        %v4110 = vmul.f32 %v1978, %v3532
        %v4111 = vmul.f32 %v1979, %v3538
        %v4112 = vmul.f32 %v1980, %v3544
        %v4113 = vmul.f32 %v1981, %v3550
        %v4114 = vmul.f32 %v1982, %v3556
        %v4115 = vmul.f32 %v1983, %v3562
        %v4116 = vmul.f32 %v1984, %v3568
        %v4117 = vmul.f32 %v1985, %v3574
        %v4118 = vmul.f32 %v1986, %v3580
        %v4119 = vmul.f32 %v1987, %v3586
        %v4120 = vmul.f32 %v1988, %v3593
        %v4121 = vmul.f32 %v1989, %v3599
        %v4122 = vmul.f32 %v1990, %v3605
        %v4123 = vmul.f32 %v1991, %v3611
        %v4124 = vmul.f32 %v1992, %v3617
        %v4125 = vmul.f32 %v1993, %v3623
        %v4126 = vmul.f32 %v1994, %v3629
        %v4127 = vmul.f32 %v1995, %v3635
        %v4128 = vmul.f32 %v1996, %v3641
        %v4129 = vmul.f32 %v1997, %v3647
        %v4130 = vmul.f32 %v1998, %v3653
        %v4131 = vmul.f32 %v1999, %v3659
        %v4132 = vmul.f32 %v2000, %v3665
        %v4133 = vmul.f32 %v2001, %v3671
        %v4134 = vmul.f32 %v2002, %v3677
        %v4135 = vmul.f32 %v2003, %v3683
        %v4136 = vmul.f32 %v2004, %v3690
        %v4137 = vmul.f32 %v2005, %v3696
        %v4138 = vmul.f32 %v2006, %v3702
        %v4139 = vmul.f32 %v2007, %v3708
        %v4140 = vmul.f32 %v2008, %v3714
        %v4141 = vmul.f32 %v2009, %v3720
        %v4142 = vmul.f32 %v2010, %v3726
        %v4143 = vmul.f32 %v2011, %v3732
        %v4144 = vmul.f32 %v2012, %v3738
        %v4145 = vmul.f32 %v2013, %v3744
        %v4146 = vmul.f32 %v2014, %v3750
        %v4147 = vmul.f32 %v2015, %v3756
        %v4148 = vmul.f32 %v2016, %v3762
        %v4149 = vmul.f32 %v2017, %v3768
        %v4150 = vmul.f32 %v2018, %v3774
        %v4151 = vmul.f32 %v2019, %v3780
        %v4152 = vmul.f32 %v2020, %v3787
        %v4153 = vmul.f32 %v2021, %v3793
        %v4154 = vmul.f32 %v2022, %v3799
        %v4155 = vmul.f32 %v2023, %v3805
        %v4156 = vmul.f32 %v2024, %v3811
        %v4157 = vmul.f32 %v2025, %v3817
        %v4158 = vmul.f32 %v2026, %v3823
        %v4159 = vmul.f32 %v2027, %v3829
        %v4160 = vmul.f32 %v2028, %v3835
        %v4161 = vmul.f32 %v2029, %v3841
        %v4162 = vmul.f32 %v2030, %v3847
        %v4163 = vmul.f32 %v2031, %v3853
        %v4164 = vmul.f32 %v2032, %v3859
        %v4165 = vmul.f32 %v2033, %v3865
        %v4166 = vmul.f32 %v2034, %v3871
        %v4167 = vmul.f32 %v2035, %v3877
        %v4168 = vmul.f32 %v2036, %v3884
        %v4169 = vmul.f32 %v2037, %v3890
        %v4170 = vmul.f32 %v2038, %v3896
        %v4171 = vmul.f32 %v2039, %v3902
        %v4172 = vmul.f32 %v2040, %v3908
        %v4173 = vmul.f32 %v2041, %v3914
        %v4174 = vmul.f32 %v2042, %v3920
        %v4175 = vmul.f32 %v2043, %v3926
        %v4176 = vmul.f32 %v2044, %v3932
        %v4177 = vmul.f32 %v2045, %v3938
        %v4178 = vmul.f32 %v2046, %v3944
        %v4179 = vmul.f32 %v2047, %v3950
        %v4180 = vmul.f32 %v2048, %v3956
        %v4181 = vmul.f32 %v2049, %v3962
        %v4182 = vmul.f32 %v2050, %v3968
        %v4183 = vmul.f32 %v2051, %v3974
        %v4184 = vmul.f32 %v2052, %v3981
        %v4185 = vmul.f32 %v2053, %v3987
        %v4186 = vmul.f32 %v2054, %v3993
        %v4187 = vmul.f32 %v2055, %v3999
        %v4188 = vmul.f32 %v2056, %v4005
        %v4189 = vmul.f32 %v2057, %v4011
        %v4190 = vmul.f32 %v2058, %v4017
        %v4191 = vmul.f32 %v2059, %v4023
        %v4192 = vmul.f32 %v2060, %v4029
        %v4193 = vmul.f32 %v2061, %v4035
        %v4194 = vmul.f32 %v2062, %v4041
        %v4195 = vmul.f32 %v2063, %v4047
        %v4196 = vmul.f32 %v2064, %v4053
        %v4197 = vmul.f32 %v2065, %v4059
        %v4198 = vmul.f32 %v2066, %v4065
        %v4199 = vmul.f32 %v2067, %v4071
        %v4200 = vsel %vm2973, %v4072, 0.0
        %v4201 = vsel %vm2973, %v4073, 0.0
        %v4202 = vadd.f32 %v4200, %v4201
        %v4203 = vsel %vm2973, %v4074, 0.0
        %v4204 = vadd.f32 %v4202, %v4203
        %v4205 = vsel %vm2973, %v4075, 0.0
        %v4206 = vadd.f32 %v4204, %v4205
        %v4207 = vsel %vm2973, %v4076, 0.0
        %v4208 = vadd.f32 %v4206, %v4207
        %v4209 = vsel %vm2973, %v4077, 0.0
        %v4210 = vadd.f32 %v4208, %v4209
        %v4211 = vsel %vm2973, %v4078, 0.0
        %v4212 = vadd.f32 %v4210, %v4211
        %v4213 = vsel %vm2973, %v4079, 0.0
        %v4214 = vadd.f32 %v4212, %v4213
        %v4215 = vsel %vm2973, %v4080, 0.0
        %v4216 = vadd.f32 %v4214, %v4215
        %v4217 = vsel %vm2973, %v4081, 0.0
        %v4218 = vadd.f32 %v4216, %v4217
        %v4219 = vsel %vm2973, %v4082, 0.0
        %v4220 = vadd.f32 %v4218, %v4219
        %v4221 = vsel %vm2973, %v4083, 0.0
        %v4222 = vadd.f32 %v4220, %v4221
        %v4223 = vsel %vm2973, %v4084, 0.0
        %v4224 = vadd.f32 %v4222, %v4223
        %v4225 = vsel %vm2973, %v4085, 0.0
        %v4226 = vadd.f32 %v4224, %v4225
        %v4227 = vsel %vm2973, %v4086, 0.0
        %v4228 = vadd.f32 %v4226, %v4227
        %v4229 = vsel %vm2973, %v4087, 0.0
        %v4230 = vadd.f32 %v4228, %v4229
        %v4231 = vrot.slane %v4230, 4
        %v4232 = vadd.f32 %v4230, %v4231
        %v4233 = vrot.slane %v4232, 2
        %v4234 = vadd.f32 %v4232, %v4233
        %v4235 = vrot.slane %v4234, 1
        %v4236 = vadd.f32 %v4234, %v4235
        %v4237 = vsel %vm2973, %v4088, 0.0
        %v4238 = vsel %vm2973, %v4089, 0.0
        %v4239 = vadd.f32 %v4237, %v4238
        %v4240 = vsel %vm2973, %v4090, 0.0
        %v4241 = vadd.f32 %v4239, %v4240
        %v4242 = vsel %vm2973, %v4091, 0.0
        %v4243 = vadd.f32 %v4241, %v4242
        %v4244 = vsel %vm2973, %v4092, 0.0
        %v4245 = vadd.f32 %v4243, %v4244
        %v4246 = vsel %vm2973, %v4093, 0.0
        %v4247 = vadd.f32 %v4245, %v4246
        %v4248 = vsel %vm2973, %v4094, 0.0
        %v4249 = vadd.f32 %v4247, %v4248
        %v4250 = vsel %vm2973, %v4095, 0.0
        %v4251 = vadd.f32 %v4249, %v4250
        %v4252 = vsel %vm2973, %v4096, 0.0
        %v4253 = vadd.f32 %v4251, %v4252
        %v4254 = vsel %vm2973, %v4097, 0.0
        %v4255 = vadd.f32 %v4253, %v4254
        %v4256 = vsel %vm2973, %v4098, 0.0
        %v4257 = vadd.f32 %v4255, %v4256
        %v4258 = vsel %vm2973, %v4099, 0.0
        %v4259 = vadd.f32 %v4257, %v4258
        %v4260 = vsel %vm2973, %v4100, 0.0
        %v4261 = vadd.f32 %v4259, %v4260
        %v4262 = vsel %vm2973, %v4101, 0.0
        %v4263 = vadd.f32 %v4261, %v4262
        %v4264 = vsel %vm2973, %v4102, 0.0
        %v4265 = vadd.f32 %v4263, %v4264
        %v4266 = vsel %vm2973, %v4103, 0.0
        %v4267 = vadd.f32 %v4265, %v4266
        %v4268 = vrot.slane %v4267, 4
        %v4269 = vadd.f32 %v4267, %v4268
        %v4270 = vrot.slane %v4269, 2
        %v4271 = vadd.f32 %v4269, %v4270
        %v4272 = vrot.slane %v4271, 1
        %v4273 = vadd.f32 %v4271, %v4272
        %v4274 = vsel %vm2973, %v4104, 0.0
        %v4275 = vsel %vm2973, %v4105, 0.0
        %v4276 = vadd.f32 %v4274, %v4275
        %v4277 = vsel %vm2973, %v4106, 0.0
        %v4278 = vadd.f32 %v4276, %v4277
        %v4279 = vsel %vm2973, %v4107, 0.0
        %v4280 = vadd.f32 %v4278, %v4279
        %v4281 = vsel %vm2973, %v4108, 0.0
        %v4282 = vadd.f32 %v4280, %v4281
        %v4283 = vsel %vm2973, %v4109, 0.0
        %v4284 = vadd.f32 %v4282, %v4283
        %v4285 = vsel %vm2973, %v4110, 0.0
        %v4286 = vadd.f32 %v4284, %v4285
        %v4287 = vsel %vm2973, %v4111, 0.0
        %v4288 = vadd.f32 %v4286, %v4287
        %v4289 = vsel %vm2973, %v4112, 0.0
        %v4290 = vadd.f32 %v4288, %v4289
        %v4291 = vsel %vm2973, %v4113, 0.0
        %v4292 = vadd.f32 %v4290, %v4291
        %v4293 = vsel %vm2973, %v4114, 0.0
        %v4294 = vadd.f32 %v4292, %v4293
        %v4295 = vsel %vm2973, %v4115, 0.0
        %v4296 = vadd.f32 %v4294, %v4295
        %v4297 = vsel %vm2973, %v4116, 0.0
        %v4298 = vadd.f32 %v4296, %v4297
        %v4299 = vsel %vm2973, %v4117, 0.0
        %v4300 = vadd.f32 %v4298, %v4299
        %v4301 = vsel %vm2973, %v4118, 0.0
        %v4302 = vadd.f32 %v4300, %v4301
        %v4303 = vsel %vm2973, %v4119, 0.0
        %v4304 = vadd.f32 %v4302, %v4303
        %v4305 = vrot.slane %v4304, 4
        %v4306 = vadd.f32 %v4304, %v4305
        %v4307 = vrot.slane %v4306, 2
        %v4308 = vadd.f32 %v4306, %v4307
        %v4309 = vrot.slane %v4308, 1
        %v4310 = vadd.f32 %v4308, %v4309
        %v4311 = vsel %vm2973, %v4120, 0.0
        %v4312 = vsel %vm2973, %v4121, 0.0
        %v4313 = vadd.f32 %v4311, %v4312
        %v4314 = vsel %vm2973, %v4122, 0.0
        %v4315 = vadd.f32 %v4313, %v4314
        %v4316 = vsel %vm2973, %v4123, 0.0
        %v4317 = vadd.f32 %v4315, %v4316
        %v4318 = vsel %vm2973, %v4124, 0.0
        %v4319 = vadd.f32 %v4317, %v4318
        %v4320 = vsel %vm2973, %v4125, 0.0
        %v4321 = vadd.f32 %v4319, %v4320
        %v4322 = vsel %vm2973, %v4126, 0.0
        %v4323 = vadd.f32 %v4321, %v4322
        %v4324 = vsel %vm2973, %v4127, 0.0
        %v4325 = vadd.f32 %v4323, %v4324
        %v4326 = vsel %vm2973, %v4128, 0.0
        %v4327 = vadd.f32 %v4325, %v4326
        %v4328 = vsel %vm2973, %v4129, 0.0
        %v4329 = vadd.f32 %v4327, %v4328
        %v4330 = vsel %vm2973, %v4130, 0.0
        %v4331 = vadd.f32 %v4329, %v4330
        %v4332 = vsel %vm2973, %v4131, 0.0
        %v4333 = vadd.f32 %v4331, %v4332
        %v4334 = vsel %vm2973, %v4132, 0.0
        %v4335 = vadd.f32 %v4333, %v4334
        %v4336 = vsel %vm2973, %v4133, 0.0
        %v4337 = vadd.f32 %v4335, %v4336
        %v4338 = vsel %vm2973, %v4134, 0.0
        %v4339 = vadd.f32 %v4337, %v4338
        %v4340 = vsel %vm2973, %v4135, 0.0
        %v4341 = vadd.f32 %v4339, %v4340
        %v4342 = vrot.slane %v4341, 4
        %v4343 = vadd.f32 %v4341, %v4342
        %v4344 = vrot.slane %v4343, 2
        %v4345 = vadd.f32 %v4343, %v4344
        %v4346 = vrot.slane %v4345, 1
        %v4347 = vadd.f32 %v4345, %v4346
        %v4348 = vsel %vm2973, %v4136, 0.0
        %v4349 = vsel %vm2973, %v4137, 0.0
        %v4350 = vadd.f32 %v4348, %v4349
        %v4351 = vsel %vm2973, %v4138, 0.0
        %v4352 = vadd.f32 %v4350, %v4351
        %v4353 = vsel %vm2973, %v4139, 0.0
        %v4354 = vadd.f32 %v4352, %v4353
        %v4355 = vsel %vm2973, %v4140, 0.0
        %v4356 = vadd.f32 %v4354, %v4355
        %v4357 = vsel %vm2973, %v4141, 0.0
        %v4358 = vadd.f32 %v4356, %v4357
        %v4359 = vsel %vm2973, %v4142, 0.0
        %v4360 = vadd.f32 %v4358, %v4359
        %v4361 = vsel %vm2973, %v4143, 0.0
        %v4362 = vadd.f32 %v4360, %v4361
        %v4363 = vsel %vm2973, %v4144, 0.0
        %v4364 = vadd.f32 %v4362, %v4363
        %v4365 = vsel %vm2973, %v4145, 0.0
        %v4366 = vadd.f32 %v4364, %v4365
        %v4367 = vsel %vm2973, %v4146, 0.0
        %v4368 = vadd.f32 %v4366, %v4367
        %v4369 = vsel %vm2973, %v4147, 0.0
        %v4370 = vadd.f32 %v4368, %v4369
        %v4371 = vsel %vm2973, %v4148, 0.0
        %v4372 = vadd.f32 %v4370, %v4371
        %v4373 = vsel %vm2973, %v4149, 0.0
        %v4374 = vadd.f32 %v4372, %v4373
        %v4375 = vsel %vm2973, %v4150, 0.0
        %v4376 = vadd.f32 %v4374, %v4375
        %v4377 = vsel %vm2973, %v4151, 0.0
        %v4378 = vadd.f32 %v4376, %v4377
        %v4379 = vrot.slane %v4378, 4
        %v4380 = vadd.f32 %v4378, %v4379
        %v4381 = vrot.slane %v4380, 2
        %v4382 = vadd.f32 %v4380, %v4381
        %v4383 = vrot.slane %v4382, 1
        %v4384 = vadd.f32 %v4382, %v4383
        %v4385 = vsel %vm2973, %v4152, 0.0
        %v4386 = vsel %vm2973, %v4153, 0.0
        %v4387 = vadd.f32 %v4385, %v4386
        %v4388 = vsel %vm2973, %v4154, 0.0
        %v4389 = vadd.f32 %v4387, %v4388
        %v4390 = vsel %vm2973, %v4155, 0.0
        %v4391 = vadd.f32 %v4389, %v4390
        %v4392 = vsel %vm2973, %v4156, 0.0
        %v4393 = vadd.f32 %v4391, %v4392
        %v4394 = vsel %vm2973, %v4157, 0.0
        %v4395 = vadd.f32 %v4393, %v4394
        %v4396 = vsel %vm2973, %v4158, 0.0
        %v4397 = vadd.f32 %v4395, %v4396
        %v4398 = vsel %vm2973, %v4159, 0.0
        %v4399 = vadd.f32 %v4397, %v4398
        %v4400 = vsel %vm2973, %v4160, 0.0
        %v4401 = vadd.f32 %v4399, %v4400
        %v4402 = vsel %vm2973, %v4161, 0.0
        %v4403 = vadd.f32 %v4401, %v4402
        %v4404 = vsel %vm2973, %v4162, 0.0
        %v4405 = vadd.f32 %v4403, %v4404
        %v4406 = vsel %vm2973, %v4163, 0.0
        %v4407 = vadd.f32 %v4405, %v4406
        %v4408 = vsel %vm2973, %v4164, 0.0
        %v4409 = vadd.f32 %v4407, %v4408
        %v4410 = vsel %vm2973, %v4165, 0.0
        %v4411 = vadd.f32 %v4409, %v4410
        %v4412 = vsel %vm2973, %v4166, 0.0
        %v4413 = vadd.f32 %v4411, %v4412
        %v4414 = vsel %vm2973, %v4167, 0.0
        %v4415 = vadd.f32 %v4413, %v4414
        %v4416 = vrot.slane %v4415, 4
        %v4417 = vadd.f32 %v4415, %v4416
        %v4418 = vrot.slane %v4417, 2
        %v4419 = vadd.f32 %v4417, %v4418
        %v4420 = vrot.slane %v4419, 1
        %v4421 = vadd.f32 %v4419, %v4420
        %v4422 = vsel %vm2973, %v4168, 0.0
        %v4423 = vsel %vm2973, %v4169, 0.0
        %v4424 = vadd.f32 %v4422, %v4423
        %v4425 = vsel %vm2973, %v4170, 0.0
        %v4426 = vadd.f32 %v4424, %v4425
        %v4427 = vsel %vm2973, %v4171, 0.0
        %v4428 = vadd.f32 %v4426, %v4427
        %v4429 = vsel %vm2973, %v4172, 0.0
        %v4430 = vadd.f32 %v4428, %v4429
        %v4431 = vsel %vm2973, %v4173, 0.0
        %v4432 = vadd.f32 %v4430, %v4431
        %v4433 = vsel %vm2973, %v4174, 0.0
        %v4434 = vadd.f32 %v4432, %v4433
        %v4435 = vsel %vm2973, %v4175, 0.0
        %v4436 = vadd.f32 %v4434, %v4435
        %v4437 = vsel %vm2973, %v4176, 0.0
        %v4438 = vadd.f32 %v4436, %v4437
        %v4439 = vsel %vm2973, %v4177, 0.0
        %v4440 = vadd.f32 %v4438, %v4439
        %v4441 = vsel %vm2973, %v4178, 0.0
        %v4442 = vadd.f32 %v4440, %v4441
        %v4443 = vsel %vm2973, %v4179, 0.0
        %v4444 = vadd.f32 %v4442, %v4443
        %v4445 = vsel %vm2973, %v4180, 0.0
        %v4446 = vadd.f32 %v4444, %v4445
        %v4447 = vsel %vm2973, %v4181, 0.0
        %v4448 = vadd.f32 %v4446, %v4447
        %v4449 = vsel %vm2973, %v4182, 0.0
        %v4450 = vadd.f32 %v4448, %v4449
        %v4451 = vsel %vm2973, %v4183, 0.0
        %v4452 = vadd.f32 %v4450, %v4451
        %v4453 = vrot.slane %v4452, 4
        %v4454 = vadd.f32 %v4452, %v4453
        %v4455 = vrot.slane %v4454, 2
        %v4456 = vadd.f32 %v4454, %v4455
        %v4457 = vrot.slane %v4456, 1
        %v4458 = vadd.f32 %v4456, %v4457
        %v4459 = vsel %vm2973, %v4184, 0.0
        %v4460 = vsel %vm2973, %v4185, 0.0
        %v4461 = vadd.f32 %v4459, %v4460
        %v4462 = vsel %vm2973, %v4186, 0.0
        %v4463 = vadd.f32 %v4461, %v4462
        %v4464 = vsel %vm2973, %v4187, 0.0
        %v4465 = vadd.f32 %v4463, %v4464
        %v4466 = vsel %vm2973, %v4188, 0.0
        %v4467 = vadd.f32 %v4465, %v4466
        %v4468 = vsel %vm2973, %v4189, 0.0
        %v4469 = vadd.f32 %v4467, %v4468
        %v4470 = vsel %vm2973, %v4190, 0.0
        %v4471 = vadd.f32 %v4469, %v4470
        %v4472 = vsel %vm2973, %v4191, 0.0
        %v4473 = vadd.f32 %v4471, %v4472
        %v4474 = vsel %vm2973, %v4192, 0.0
        %v4475 = vadd.f32 %v4473, %v4474
        %v4476 = vsel %vm2973, %v4193, 0.0
        %v4477 = vadd.f32 %v4475, %v4476
        %v4478 = vsel %vm2973, %v4194, 0.0
        %v4479 = vadd.f32 %v4477, %v4478
        %v4480 = vsel %vm2973, %v4195, 0.0
        %v4481 = vadd.f32 %v4479, %v4480
        %v4482 = vsel %vm2973, %v4196, 0.0
        %v4483 = vadd.f32 %v4481, %v4482
        %v4484 = vsel %vm2973, %v4197, 0.0
        %v4485 = vadd.f32 %v4483, %v4484
        %v4486 = vsel %vm2973, %v4198, 0.0
        %v4487 = vadd.f32 %v4485, %v4486
        %v4488 = vsel %vm2973, %v4199, 0.0
        %v4489 = vadd.f32 %v4487, %v4488
        %v4490 = vrot.slane %v4489, 4
        %v4491 = vadd.f32 %v4489, %v4490
        %v4492 = vrot.slane %v4491, 2
        %v4493 = vadd.f32 %v4491, %v4492
        %v4494 = vrot.slane %v4493, 1
        %v4495 = vadd.f32 %v4493, %v4494
        %v4504 = vsel %vm3278, %v4273, %v4236
        %v4505 = vsel %vm3280, %v4310, %v4504
        %v4506 = vsel %vm3282, %v4347, %v4505
        %v4507 = vsel %vm3284, %v4384, %v4506
        %v4508 = vsel %vm3286, %v4421, %v4507
        %v4509 = vsel %vm3288, %v4458, %v4508
        %v4510 = vsel %vm3290, %v4495, %v4509
        %v4512 = vadd.f32 %v3295, %v4510
        %4513 = vst.msk [vmem:[#allocation4] sm:$0xff] %vm2973, %v4512
        %v4514 = vld [vmem:[#allocation3] sm:$0xff]
        %4515 = vadd.xlane.f32.xlu0 %v1554
        %v4516 = vpop.xlane.xlu0 %4515
        %v4517 = vadd.f32 %v4514, %v4516
        %vm4518 = vcmask 7168
        %4519 = vst.msk [vmem:[#allocation3] sm:$0xff] %vm4518, %v4517
        %v4520 = vld [vmem:[#allocation5] sm:$0xff]
        %4521 = vadd.xlane.f32.xlu0 %v1555
        %v4522 = vpop.xlane.xlu0 %4521
        %v4523 = vadd.f32 %v4520, %v4522
        %4524 = vst.msk [vmem:[#allocation5] sm:$0xff] %vm4518, %v4523
        %p4525 = scmp.eq.s32.totalorder %s28, 1
        // Predicated region
        $region135: #{tpu_custom_call.1} parent=121 // pred_check
          %p4526 = pneg %p4525
        $region136: #{tpu_custom_call.1} parent=121 // pred_check_branch
          %4528 = sbr.rel (%p4526) target = $region138
        $region137: #{tpu_custom_call.1} parent=121 // pred_region
          %v4529 = vld [vmem:[#allocation2] sm:$0xff]
          %v4530 = vld [vmem:[#allocation3] sm:$0xff]
          %v4531 = vmax.f32 %v4530, 1e-09
          %v4532 = vrcp.pop %v4531
          %v4533 = vmul.f32 %v4531, %v4532
          %v4534 = vsub.f32 1.0, %v4533
          %v4535 = vmul.f32 %v4532, %v4534
          %v4536 = vadd.f32 %v4532, %v4535
          %vm4537 = vweird.f32 %v4531
          %vm4538 = vweird.f32 %v4532
          %vm4539 = vmor %vm4537, %vm4538
          %v4540 = vsel %vm4539, %v4532, %v4536
          %v4541 = vand.u32 2147483647, %v4531
          %vm4542 = vcmp.eq.f32.partialorder %v4541, 8.507059e+37
          %v4543 = vand.u32 %v4531, 2147483648
          %v4544 = vor.u32 1.1754944e-38, %v4543
          %v4545 = vsel %vm4542, %v4544, %v4540
          %4547 = vset.pattern.permute.xlu0 0
          %4548 = vperm.xlu0 %4547, %v4545
          %v4549 = vpop.permute.xlu0 %4548
          %v4551 = vmul.f32 %v4529, %v4549
          %v4552 = vmul.f32 %v4551, %v4551
          %v4553 = vsel %vm2973, %v4552, 0.0
          %4554 = vadd.xlane.f32.xlu0 %v4553
          %v4555 = vpop.xlane.xlu0 %4554
          %v4556 = vmax.f32 %v4555, 1e-24
          %v4557 = vrsqrt.pop %v4556
          %v4558 = vmul.f32 %v4557, %v4556
          %v4559 = vmul.f32 %v4558, %v4557
          %v4560 = vmul.f32 0.5, %v4559
          %v4561 = vsub.f32 1.5, %v4560
          %v4562 = vmul.f32 %v4557, %v4561
          %vm4563 = vweird.f32 %v4556
          %vm4564 = vweird.f32 %v4557
          %vm4565 = vmor %vm4563, %vm4564
          %v4566 = vsel %vm4565, %v4557, %v4562
          %v4567 = vmul.f32 %v4551, %v4566
          %v4568 = vld [vmem:[#allocation4] sm:$0xff]
          %v4569 = vld [vmem:[#allocation5] sm:$0xff]
          %v4570 = vmax.f32 %v4569, 1e-09
          %v4571 = vrcp.pop %v4570
          %v4572 = vmul.f32 %v4570, %v4571
          %v4573 = vsub.f32 1.0, %v4572
          %v4574 = vmul.f32 %v4571, %v4573
          %v4575 = vadd.f32 %v4571, %v4574
          %vm4576 = vweird.f32 %v4570
          %vm4577 = vweird.f32 %v4571
          %vm4578 = vmor %vm4576, %vm4577
          %v4579 = vsel %vm4578, %v4571, %v4575
          %v4580 = vand.u32 2147483647, %v4570
          %vm4581 = vcmp.eq.f32.partialorder %v4580, 8.507059e+37
          %v4582 = vand.u32 %v4570, 2147483648
          %v4583 = vor.u32 1.1754944e-38, %v4582
          %v4584 = vsel %vm4581, %v4583, %v4579
          %4586 = vset.pattern.permute.xlu0 0
          %4587 = vperm.xlu0 %4586, %v4584
          %v4588 = vpop.permute.xlu0 %4587
          %v4590 = vmul.f32 %v4568, %v4588
          %v4591 = vmul.f32 %v4590, %v4590
          %v4592 = vsel %vm2973, %v4591, 0.0
          %4593 = vadd.xlane.f32.xlu0 %v4592
          %v4594 = vpop.xlane.xlu0 %4593
          %v4595 = vmax.f32 %v4594, 1e-24
          %v4596 = vrsqrt.pop %v4595
          %v4597 = vmul.f32 %v4596, %v4595
          %v4598 = vmul.f32 %v4597, %v4596
          %v4599 = vmul.f32 0.5, %v4598
          %v4600 = vsub.f32 1.5, %v4599
          %v4601 = vmul.f32 %v4596, %v4600
          %vm4602 = vweird.f32 %v4595
          %vm4603 = vweird.f32 %v4596
          %vm4604 = vmor %vm4602, %vm4603
          %v4605 = vsel %vm4604, %v4596, %v4601
          %v4606 = vmul.f32 %v4590, %v4605
          %v4607 = vsub.f32 %v4567, %v4606
          %v4608 = vand.u32 2147483647, %v4607
          %v4609 = vld [vmem:[%s4] sm:$0xff]
          %v4610 = vld [vmem:[%s4 + $0x8] sm:$0xff]
          %v4611 = vld [vmem:[%s4 + $0x10] sm:$0xff]
          %v4612 = vld [vmem:[%s4 + $0x18] sm:$0xff]
          %v4613 = vld [vmem:[%s4 + $0x20] sm:$0xff]
          %v4614 = vld [vmem:[%s4 + $0x28] sm:$0xff]
          %v4615 = vld [vmem:[%s4 + $0x30] sm:$0xff]
          %v4616 = vld [vmem:[%s4 + $0x38] sm:$0xff]
          %v4617 = vld [vmem:[%s4 + $0x40] sm:$0xff]
          %v4618 = vld [vmem:[%s4 + $0x48] sm:$0xff]
          %v4619 = vld [vmem:[%s4 + $0x50] sm:$0xff]
          %v4620 = vld [vmem:[%s4 + $0x58] sm:$0xff]
          %v4621 = vld [vmem:[%s4 + $0x60] sm:$0xff]
          %v4622 = vld [vmem:[%s4 + $0x68] sm:$0xff]
          %v4623 = vld [vmem:[%s4 + $0x70] sm:$0xff]
          %v4624 = vld [vmem:[%s4 + $0x78] sm:$0xff]
          %v4626 = vsel %vm2973, %v4606, 0
          %4628 = vmatpush.msra.mxu0 0.0
          %4629 = vmatpush.msra.mxu0 0.0
          %4630 = vmatpush.msra.mxu0 0.0
          %4631 = vmatpush.msra.mxu0 0.0
          %4632 = vmatpush.msra.mxu0 0.0
          %4633 = vmatpush.msra.mxu0 0.0
          %4634 = vmatpush.msra.mxu0 0.0
          %4635 = vmatpush.msra.mxu0 0.0
          %4636 = vmatpush.msra.mxu0 %v4624
          %4637 = vmatpush.msra.mxu0 %v4623
          %4638 = vmatpush.msra.mxu0 %v4622
          %4639 = vmatpush.msra.mxu0 %v4621
          %4640 = vmatpush.msra.mxu0 %v4620
          %4641 = vmatpush.msra.mxu0 %v4619
          %4642 = vmatpush.msra.mxu0 %v4618
          %4643 = vmatpush.msra.mxu0 %v4617
          %4644 = vmatmul.f32.gmra.mxu0 %v4626
          %v4645 = vpop.f32.mrf.mxu0
          %v4646 = vadd.f32 0.0, %v4645
          %4647 = vdwg.mxu0
          %v4649 = vsel %vm2973, %v4567, 0
          %4651 = vmatpush.msra.mxu0 0.0
          %4652 = vmatpush.msra.mxu0 0.0
          %4653 = vmatpush.msra.mxu0 0.0
          %4654 = vmatpush.msra.mxu0 0.0
          %4655 = vmatpush.msra.mxu0 0.0
          %4656 = vmatpush.msra.mxu0 0.0
          %4657 = vmatpush.msra.mxu0 0.0
          %4658 = vmatpush.msra.mxu0 0.0
          %4659 = vmatpush.msra.mxu0 %v4616
          %4660 = vmatpush.msra.mxu0 %v4615
          %4661 = vmatpush.msra.mxu0 %v4614
          %4662 = vmatpush.msra.mxu0 %v4613
          %4663 = vmatpush.msra.mxu0 %v4612
          %4664 = vmatpush.msra.mxu0 %v4611
          %4665 = vmatpush.msra.mxu0 %v4610
          %4666 = vmatpush.msra.mxu0 %v4609
          %4667 = vmatmul.f32.gmra.mxu0 %v4649
          %v4668 = vpop.f32.mrf.mxu0
          %v4669 = vadd.f32 %v4646, %v4668
          %4670 = vdwg.mxu0
          %v4671 = vld [vmem:[%s4 + $0x80] sm:$0xff]
          %v4672 = vld [vmem:[%s4 + $0x88] sm:$0xff]
          %v4673 = vld [vmem:[%s4 + $0x90] sm:$0xff]
          %v4674 = vld [vmem:[%s4 + $0x98] sm:$0xff]
          %v4675 = vld [vmem:[%s4 + $0xa0] sm:$0xff]
          %v4676 = vld [vmem:[%s4 + $0xa8] sm:$0xff]
          %v4677 = vld [vmem:[%s4 + $0xb0] sm:$0xff]
          %v4678 = vld [vmem:[%s4 + $0xb8] sm:$0xff]
          %v4680 = vsel %vm2973, %v4608, 0
          %4682 = vmatpush.msra.mxu0 0.0
          %4683 = vmatpush.msra.mxu0 0.0
          %4684 = vmatpush.msra.mxu0 0.0
          %4685 = vmatpush.msra.mxu0 0.0
          %4686 = vmatpush.msra.mxu0 0.0
          %4687 = vmatpush.msra.mxu0 0.0
          %4688 = vmatpush.msra.mxu0 0.0
          %4689 = vmatpush.msra.mxu0 0.0
          %4690 = vmatpush.msra.mxu0 %v4678
          %4691 = vmatpush.msra.mxu0 %v4677
          %4692 = vmatpush.msra.mxu0 %v4676
          %4693 = vmatpush.msra.mxu0 %v4675
          %4694 = vmatpush.msra.mxu0 %v4674
          %4695 = vmatpush.msra.mxu0 %v4673
          %4696 = vmatpush.msra.mxu0 %v4672
          %4697 = vmatpush.msra.mxu0 %v4671
          %4698 = vmatmul.f32.gmra.mxu0 %v4680
          %v4699 = vpop.f32.mrf.mxu0
          %v4700 = vadd.f32 0.0, %v4699
          %4701 = vdwg.mxu0
          %v4702 = vadd.f32 %v4669, %v4700
          %v4703 = vld [vmem:[%s5] sm:$0x1]
          %v4705 = vperm.slane %v4703, 0
          %v4707 = vadd.f32 %v4702, %v4705
          %4708 = vst [vmem:[%s1509] sm:$0xff] %v4707
          %v4709 = vlaneseq
          %v4710 = vand.u32 %v4709, 127
          %vm4711 = vcmp.lt.s32.totalorder %v4710, 3
          %v4712 = vsel %vm4711, %v4707, -1e+30
          %4713 = vmax.xlane.f32.xlu0 %v4712
          %v4714 = vpop.xlane.xlu0 %4713
          %v4715 = vsub.f32 %v4712, %v4714
          %v4716 = vmul.f32 %v4715, 1.442695
          %v4717 = vpow.pop %v4716
          %v4718 = vsel %vm4711, %v4717, 0.0
          %4719 = vadd.xlane.f32.xlu0 %v4718
          %v4720 = vpop.xlane.xlu0 %4719
          %v4721 = vlog2.pop %v4720
          %v4722 = vmul.f32 %v4721, 0.6931472
          %v4723 = vsub.f32 %v4715, %v4722
          %v4724 = vld [vmem:[%s1539] sm:$0xff]
          %v4725 = vmul.f32 %v4724, %v4723
          %4726 = vadd.xlane.f32.xlu0 %v4725
          %v4727 = vpop.xlane.xlu0 %4726
          %v4728 = vsub.f32 0.0, %v4727
          %4729 = vst.msk [vmem:[%s1543] sm:$0xff] %vm4518, %v4728
        $region138: #{tpu_custom_call.1} parent=121 // pred_fallthru
          _
        %s4730 = sand.u32 %s223, 1
        %s4731 = scalar_lea.sflag [#allocation9], %s4730
        %s4732 = sand.u32 %s223, 1
        %s4733 = smul.addr %s4732, 8
        %s4734 = scalar_lea.vmem [#allocation8], %s4733
        %p4735 = scmp.lt.s32.totalorder %s27, 1
        %s4736 = scalar_select %p4735, %s27, 1
        %s4737 = smul.addr %s4736, 8
        %s4738 = scalar_lea.vmem %s8, %s4737
        // Predicated region
        $region139: #{tpu_custom_call.1} parent=121 // pred_check
          %p4739 = pneg %p233
        $region140: #{tpu_custom_call.1} parent=121 // pred_check_branch
          %4741 = sbr.rel (%p4739) target = $region142
        $region141: #{tpu_custom_call.1} parent=121 // pred_region
          %4743 = vsyncadd %s4731, 0
          %s4744 = smul.addr %s27, 8
          %s4745 = scalar_lea.hbm %s7, %s4744
          %s4747 = sshll.u32 %s4734, 4
          %s4748 = int_to_ptr.vmem [resolvable:$true] %s4747
          %s4749 = sshll.u32 %s4745, 4
          %s4750 = int_to_ptr.hbm [resolvable:$true] %s4749
          %4752 = dma.vmem_to_hbm [thread:$0]  %s4748, 128, %s4750, %s4731
        $region142: #{tpu_custom_call.1} parent=121 // pred_fallthru
          _
        // Predicated region
        $region143: #{tpu_custom_call.1} parent=121 // pred_check
          %p4753 = pneg %p259
        $region144: #{tpu_custom_call.1} parent=121 // pred_check_branch
          %4755 = sbr.rel (%p4753) target = $region146
        $region145: #{tpu_custom_call.1} parent=121 // pred_region
          _
        $region146: #{tpu_custom_call.1} parent=121 // pred_fallthru
          _
      $region122: #{tpu_custom_call.1} parent=5 // pred_fallthru
        _
      %p4756 = scmp.le.s32.totalorder 2, %s18
      // Predicated region
      $region147: #{tpu_custom_call.1} parent=5 // pred_check
        %p4757 = pneg %p4756
      $region148: #{tpu_custom_call.1} parent=5 // pred_check_branch
        %4759 = sbr.rel (%p4757) target = $region150
      $region149: #{tpu_custom_call.1} parent=5 // pred_region
        %s4760 = ssub.s32 %s18, 2
        // Predicated region
        $region151: #{tpu_custom_call.1} parent=149 // pred_check
          %p4761 = pneg %p239
        $region152: #{tpu_custom_call.1} parent=149 // pred_check_branch
          %4763 = sbr.rel (%p4761) target = $region154
        $region153: #{tpu_custom_call.1} parent=149 // pred_region
          %s4764 = sand.u32 %s224, 1
          %s4765 = scalar_lea.sflag [#allocation9], %s4764
          %s4766 = sand.u32 %s224, 1
          %s4767 = smul.addr %s4766, 8
          %s4768 = scalar_lea.vmem [#allocation8], %s4767
          %4770 = dma.done %s4765, 128
        $region154: #{tpu_custom_call.1} parent=149 // pred_fallthru
          _
        // Predicated region
        $region155: #{tpu_custom_call.1} parent=149 // pred_check
          %p4771 = pneg %p265
        $region156: #{tpu_custom_call.1} parent=149 // pred_check_branch
          %4773 = sbr.rel (%p4771) target = $region158
        $region157: #{tpu_custom_call.1} parent=149 // pred_region
          %p4774 = scmp.lt.s32.totalorder %s29, 1
          %s4775 = scalar_select %p4774, %s29, 1
          %s4776 = smul.addr %s4775, 8
          %s4777 = scalar_lea.vmem %s8, %s4776
        $region158: #{tpu_custom_call.1} parent=149 // pred_fallthru
          _
      $region150: #{tpu_custom_call.1} parent=5 // pred_fallthru
        _
    $region6: #{tpu_custom_call.1} parent=1 // loop_footer
      %s22 = sadd.s32 1, %s18
    $region7: #{tpu_custom_call.1} parent=1 // loop_footer_branch
      %17 = sbr.rel target = $region3
    $region8: #{tpu_custom_call.1} parent=1 // loop_exit
      _
    %4778 = vsyncpa [#allocation9], 1
    %s4779 = scalar_lea.sflag [#allocation9], 1
    %4780 = vsyncpa %s4779, 1

</llo_original>
